<compile_context>
chip_gen: v7x
topology: tpu7x:2x2x1
jax: 0.10.0
libtpu: 0.0.40
codegen_flags: <defaults>
</compile_context>

<pallas_src>
import functools
import math

import jax
import jax.numpy as jnp
from jax.experimental import pallas as pl
from jax.experimental.pallas import tpu as pltpu

_INV_SQRT2 = 1.0 / math.sqrt(2.0)


def haar_matrix(n: int) -> jnp.ndarray:
    """Orthonormal 1D Haar analysis matrix (n, n): rows [0, n/2) lowpass, [n/2, n) highpass."""
    nh = n // 2
    rows = jnp.arange(nh)
    m = jnp.zeros((n, n), jnp.float32)
    m = m.at[rows, 2 * rows].set(_INV_SQRT2).at[rows, 2 * rows + 1].set(_INV_SQRT2)
    m = m.at[nh + rows, 2 * rows].set(_INV_SQRT2).at[nh + rows, 2 * rows + 1].set(-_INV_SQRT2)
    return m


# ---------------------------------------------------------------------------
# In-kernel separable transforms
# ---------------------------------------------------------------------------
def _mm(a, b, use_bf16):
    if use_bf16:
        a = a.astype(jnp.bfloat16)
        b = b.astype(jnp.bfloat16)
    return jnp.dot(a, b, preferred_element_type=jnp.float32)


def _sep_transform_flat(z, right, left_t, use_bf16):
    """Per-plane  left @ z[b] @ right  with the batch folded into the matmul M dim.

    z      : (tb, h, w) planes
    right  : (w, w) lane-axis factor (applied on the right)
    left_t : (h, h) transpose of the sublane-axis factor (applied on the left)

    Both 1D transforms are single flat MXU matmuls (weight-stationary: the small wavelet
    matrices are never replicated per plane).  The sublane transform is done in transposed
    orientation so it is also a lane-axis (flat) matmul.
    """
    tb, h, w = z.shape
    # lane-axis (column) transform: (tb*h, w) @ (w, w)
    y = _mm(z.reshape(tb * h, w), right, use_bf16).reshape(tb, h, w)
    # sublane-axis (row) transform: minor-dim transpose, flat (tb*w, h) @ (h, h), transpose back
    yt = jnp.swapaxes(y, 1, 2).reshape(tb * w, h)
    out = _mm(yt, left_t, use_bf16).reshape(tb, w, h)
    return jnp.swapaxes(out, 1, 2)


def _sep_transform_small(z, left, right):
    """Fallback batched form for levels whose tile is not 8-aligned (tiny sub-blocks).

    Work here is a negligible fraction of the total, so the broadcast of the small matrices
    does not matter; it avoids non-tile-aligned reshapes/transposes on awkward shapes.
    """
    tb, h, w = z.shape
    lb = jnp.broadcast_to(left, (tb, h, h))
    rb = jnp.broadcast_to(right, (tb, w, w))
    y = jnp.einsum("bij,bjk->bik", lb, z, preferred_element_type=jnp.float32)
    return jnp.einsum("bik,bkl->bil", y, rb, preferred_element_type=jnp.float32)


# ---------------------------------------------------------------------------
# Fused Pallas kernel: J-level DWT -> soft threshold -> inverse DWT
# ---------------------------------------------------------------------------
def _wavelet_kernel(*refs, level, use_bf16):
    """refs = (ths_ref, x_ref, [P_l, Q_l^T, P_l^T, Q_l]*level ..., out_ref).

    ths_ref : (level,) f32 in SMEM   per-level soft thresholds (runtime input, no recompile)
    x_ref   : (TB, H, W)             input planes
    out_ref : (TB, H, W)             output planes; doubles as the in-place Mallat pyramid
                                     workspace in VMEM (coefficients never touch HBM).
    """
    ths_ref = refs[0]
    x_ref = refs[1]
    mat_refs = refs[2:2 + 4 * level]
    o_ref = refs[2 + 4 * level]

    _, hp, wp = x_ref.shape

    # ---------------- analysis + per-level soft threshold (details only) ----------------
    for l in range(level):
        h, w = hp >> l, wp >> l
        hh, wh = h // 2, w // 2

        a = x_ref[...] if l == 0 else o_ref[:, :h, :w]            # (tb, h, w) approximation
        if h % 8 == 0 and w % 8 == 0:
            qt = mat_refs[4 * l + 1][...]                          # (w, w)  Q^T
            pt = mat_refs[4 * l + 2][...]                          # (h, h)  P^T
            z = _sep_transform_flat(a, qt, pt, use_bf16)           # P @ A @ Q^T
        else:
            p = mat_refs[4 * l + 0][...]                           # (h, h)  P
            qt = mat_refs[4 * l + 1][...]                          # (w, w)  Q^T
            z = _sep_transform_small(a, p, qt)

        t = ths_ref[l]                                             # scalar from SMEM
        soft = jnp.maximum(z - t, 0.0) + jnp.minimum(z + t, 0.0)   # prox_l1
        # Single store: thresholded detail quadrants, raw LL quadrant (feeds the next level).
        rr = jax.lax.broadcasted_iota(jnp.int32, (h, w), 0)
        cc = jax.lax.broadcasted_iota(jnp.int32, (h, w), 1)
        is_detail = (rr >= hh) | (cc >= wh)
        o_ref[:, :h, :w] = jnp.where(is_detail, soft, z)

    # ---------------- synthesis: single P^T @ Z @ Q chain per level ---------------------
    for l in reversed(range(level)):
        h, w = hp >> l, wp >> l

        # The LL quadrant of this block already holds the reconstruction from level l+1,
        # so one matmul chain reconstructs the whole level (no separate rec_ll path).
        z = o_ref[:, :h, :w]
        if h % 8 == 0 and w % 8 == 0:
            p = mat_refs[4 * l + 0][...]                           # (h, h)  P
            q = mat_refs[4 * l + 3][...]                           # (w, w)  Q
            rec = _sep_transform_flat(z, q, p, use_bf16)           # P^T @ Z @ Q
        else:
            pt = mat_refs[4 * l + 2][...]
            q = mat_refs[4 * l + 3][...]
            rec = _sep_transform_small(z, pt, q)

        if l == 0:
            o_ref[...] = rec.astype(o_ref.dtype)
        else:
            o_ref[:, :h, :w] = rec


# ---------------------------------------------------------------------------
# Wrapper
# ---------------------------------------------------------------------------
def _vmem_capacity_bytes() -> int:
    """Physical VMEM of the attached chip (128 MiB v5e/v6e, 64 MiB per-TC v7x)."""
    try:
        cap = int(pltpu.get_tpu_info().vmem_capacity_bytes)
        if cap > 0:
            return cap
    except Exception:
        pass
    return 64 * 1024 * 1024   # conservative default (v7x per-TensorCore VMEM)


def _choose_plane_tile(bc, hp, wp, level, budget_bytes):
    """Planes per grid step (TB), preferring an EVEN number of grid steps (v7x megacore)."""
    plane_bytes = hp * wp * 4
    # double-buffered Haar matrices (grid-invariant inputs, still pipelined)
    mats_bytes = 2 * sum(2 * (((hp >> l) ** 2) + ((wp >> l) ** 2)) * 4 for l in range(level))
    # Per TB-plane: double-buffered in+out blocks (4x) plus ~8 plane-sized f32 temporaries
    # live during the level-0 transform (matmul operands, transposes, threshold select).
    per_plane = 12 * plane_bytes
    cap = max(1, (budget_bytes - mats_bytes) // per_plane)
    divisors = [d for d in range(1, bc + 1) if bc % d == 0 and d <= cap] or [1]
    even_steps = [d for d in divisors if (bc // d) % 2 == 0]   # keep both v7x TCs busy
    multi_steps = [d for d in divisors if bc // d >= 2]
    if even_steps:
        return max(even_steps)
    if multi_steps:
        return max(multi_steps)
    return max(divisors)


def wavelet_prior_forward(x, ths=0.1, level=3, use_bf16=False):
    """WaveletPrior.forward (non_linearity='soft').  x: (N, C, H, W) float.  Same shape out."""
    b, c, h, w = x.shape

    # ReplicationPad2d((0, w % 2, 0, h % 2))
    pad_b, pad_r = h % 2, w % 2
    if pad_b or pad_r:
        x = jnp.pad(x, ((0, 0), (0, 0), (0, pad_b), (0, pad_r)), mode="edge")
    hp, wp = x.shape[-2:]

    # TODO(synk): pytorch_wavelets pads odd intermediate sizes per level; here the padded
    # size must be divisible by 2**level.
    assert hp % (1 << level) == 0 and wp % (1 << level) == 0, (
        "padded spatial size must be divisible by 2**level")

    # scalar / per-level thresholds -> runtime SMEM input (changing ths does not recompile)
    ths_arr = jnp.asarray(ths, dtype=jnp.float32).reshape(-1)
    if ths_arr.shape[0] == 1:
        ths_arr = jnp.broadcast_to(ths_arr, (level,))
    assert ths_arr.shape[0] == level, "ths must be a scalar or have one value per level"

    bc = b * c
    xf = x.reshape(bc, hp, wp).astype(jnp.float32)

    vmem_cap = _vmem_capacity_bytes()
    tb = _choose_plane_tile(bc, hp, wp, level, budget_bytes=int(vmem_cap * 0.6))
    vmem_limit = min(int(vmem_cap * 0.72), 128 * 1024 * 1024)

    # Per-level Haar matrices (P, Q^T, P^T, Q): grid-invariant, tiny, weight-stationary
    # inside the kernel (never replicated per plane).
    mats = []
    in_specs = [pl.BlockSpec(memory_space=pltpu.MemorySpace.SMEM),          # ths (level,)
                pl.BlockSpec((tb, hp, wp), lambda i: (i, 0, 0))]            # x planes
    for l in range(level):
        hl, wl = hp >> l, wp >> l
        pm = haar_matrix(hl)
        qm = haar_matrix(wl)
        mats.extend([pm, qm.T, pm.T, qm])
        for n_ in (hl, wl, hl, wl):
            in_specs.append(pl.BlockSpec((n_, n_), lambda i: (0, 0)))

    # advisory cost so XLA schedules the surrounding pad/reshape/crop around a real cost
    flops = sum(4 * bc * (hp >> l) * (wp >> l) * ((hp >> l) + (wp >> l)) for l in range(level))
    cost = pl.CostEstimate(flops=int(flops), transcendentals=0,
                           bytes_accessed=int(2 * bc * hp * wp * 4))

    kernel = functools.partial(_wavelet_kernel, level=level, use_bf16=use_bf16)

    out = pl.pallas_call(
        kernel,
        out_shape=jax.ShapeDtypeStruct((bc, hp, wp), jnp.float32),
        grid=(bc // tb,),
        in_specs=in_specs,
        out_specs=pl.BlockSpec((tb, hp, wp), lambda i: (i, 0, 0)),
        compiler_params=pltpu.CompilerParams(
            dimension_semantics=("parallel",),
            vmem_limit_bytes=vmem_limit),
        cost_estimate=cost,
    )(ths_arr, xf, *mats)

    y = out.reshape(b, c, hp, wp)[..., :h, :w]
    return y.astype(x.dtype)


if __name__ == "__main__":
    key = jax.random.PRNGKey(0)
    x = jax.random.normal(key, (2, 4, 16, 16), dtype=jnp.float32)

    # sanity: with ths=0 the orthonormal transform reconstructs the input exactly
    y0 = jax.block_until_ready(wavelet_prior_forward(x, ths=0.0, level=3))
    assert jnp.allclose(y0, x, atol=1e-5), "perfect-reconstruction check failed"

    y = jax.block_until_ready(wavelet_prior_forward(x, ths=0.1, level=3))
    assert y.shape == x.shape and y.dtype == x.dtype

    # per-level thresholds are a runtime SMEM input (no constants baked into the kernel)
    y2 = jax.block_until_ready(wavelet_prior_forward(x, ths=[0.05, 0.1, 0.2], level=3))
    assert y2.shape == x.shape

    # optional bf16-matmul path (f32 accumulation); smoke test only
    yb = jax.block_until_ready(wavelet_prior_forward(x, ths=0.1, level=3, use_bf16=True))
    assert yb.shape == x.shape and bool(jnp.isfinite(yb).all())

    print("KERNEL_OK")
</pallas_src>

<mosaic_0001>
module attributes {stable_mosaic.version = 11 : i64} {
  func.func @_wavelet_kernel(%arg0: i32, %arg1: memref<3xf32, #tpu.memory_space<smem>>, %arg2: memref<4x16x16xf32, #tpu.memory_space<vmem>>, %arg3: memref<16x16xf32, #tpu.memory_space<vmem>>, %arg4: memref<16x16xf32, #tpu.memory_space<vmem>>, %arg5: memref<16x16xf32, #tpu.memory_space<vmem>>, %arg6: memref<16x16xf32, #tpu.memory_space<vmem>>, %arg7: memref<8x8xf32, #tpu.memory_space<vmem>>, %arg8: memref<8x8xf32, #tpu.memory_space<vmem>>, %arg9: memref<8x8xf32, #tpu.memory_space<vmem>>, %arg10: memref<8x8xf32, #tpu.memory_space<vmem>>, %arg11: memref<4x4xf32, #tpu.memory_space<vmem>>, %arg12: memref<4x4xf32, #tpu.memory_space<vmem>>, %arg13: memref<4x4xf32, #tpu.memory_space<vmem>>, %arg14: memref<4x4xf32, #tpu.memory_space<vmem>>, %arg15: memref<4x16x16xf32, #tpu.memory_space<vmem>>) attributes {dimension_semantics = [#tpu.dimension_semantics<parallel>], iteration_bounds = array<i64: 2>, scalar_prefetch = 0 : i64, scratch_operands = 0 : i64, tpu.core_type = #tpu.core_type<tc>, window_params = [{transform_indices = @transform_0, window_bounds = array<i64: 3>}, {transform_indices = @transform_1, window_bounds = array<i64: 4, 16, 16>}, {pipeline_mode = #tpu.pipeline_mode<synchronous>, transform_indices = @transform_2, window_bounds = array<i64: 16, 16>}, {pipeline_mode = #tpu.pipeline_mode<synchronous>, transform_indices = @transform_3, window_bounds = array<i64: 16, 16>}, {pipeline_mode = #tpu.pipeline_mode<synchronous>, transform_indices = @transform_4, window_bounds = array<i64: 16, 16>}, {pipeline_mode = #tpu.pipeline_mode<synchronous>, transform_indices = @transform_5, window_bounds = array<i64: 16, 16>}, {pipeline_mode = #tpu.pipeline_mode<synchronous>, transform_indices = @transform_6, window_bounds = array<i64: 8, 8>}, {pipeline_mode = #tpu.pipeline_mode<synchronous>, transform_indices = @transform_7, window_bounds = array<i64: 8, 8>}, {pipeline_mode = #tpu.pipeline_mode<synchronous>, transform_indices = @transform_8, window_bounds = array<i64: 8, 8>}, {pipeline_mode = #tpu.pipeline_mode<synchronous>, transform_indices = @transform_9, window_bounds = array<i64: 8, 8>}, {pipeline_mode = #tpu.pipeline_mode<synchronous>, transform_indices = @transform_10, window_bounds = array<i64: 4, 4>}, {pipeline_mode = #tpu.pipeline_mode<synchronous>, transform_indices = @transform_11, window_bounds = array<i64: 4, 4>}, {pipeline_mode = #tpu.pipeline_mode<synchronous>, transform_indices = @transform_12, window_bounds = array<i64: 4, 4>}, {pipeline_mode = #tpu.pipeline_mode<synchronous>, transform_indices = @transform_13, window_bounds = array<i64: 4, 4>}, {transform_indices = @transform_14, window_bounds = array<i64: 4, 16, 16>}]} {
    %c0 = arith.constant 0 : index
    %c0_0 = arith.constant 0 : index
    %c0_1 = arith.constant 0 : index
    %0 = vector.load %arg2[%c0, %c0_0, %c0_1] : memref<4x16x16xf32, #tpu.memory_space<vmem>>, vector<4x16x16xf32>
    %c0_2 = arith.constant 0 : index
    %c0_3 = arith.constant 0 : index
    %1 = vector.load %arg4[%c0_2, %c0_3] : memref<16x16xf32, #tpu.memory_space<vmem>>, vector<16x16xf32>
    %c0_4 = arith.constant 0 : index
    %c0_5 = arith.constant 0 : index
    %2 = vector.load %arg5[%c0_4, %c0_5] : memref<16x16xf32, #tpu.memory_space<vmem>>, vector<16x16xf32>
    %3 = vector.shape_cast %0 : vector<4x16x16xf32> to vector<64x16xf32>
    %cst = arith.constant dense<0.000000e+00> : vector<64x16xf32>
    %4 = tpu.matmul %3, %1, %cst {dimension_numbers = #tpu.dot_dimension_numbers<[1], [0], [0], [1], [0, 0, 1, 1], [], []>} : vector<64x16xf32>, vector<16x16xf32>, vector<64x16xf32> -> vector<64x16xf32>
    %5 = vector.shape_cast %4 : vector<64x16xf32> to vector<4x16x16xf32>
    %6 = tpu.transpose %5, [0, 2, 1] : vector<4x16x16xf32> -> vector<4x16x16xf32>
    %7 = vector.shape_cast %6 : vector<4x16x16xf32> to vector<64x16xf32>
    %cst_6 = arith.constant dense<0.000000e+00> : vector<64x16xf32>
    %8 = tpu.matmul %7, %2, %cst_6 {dimension_numbers = #tpu.dot_dimension_numbers<[1], [0], [0], [1], [0, 0, 1, 1], [], []>} : vector<64x16xf32>, vector<16x16xf32>, vector<64x16xf32> -> vector<64x16xf32>
    %9 = vector.shape_cast %8 : vector<64x16xf32> to vector<4x16x16xf32>
    %10 = tpu.transpose %9, [0, 2, 1] : vector<4x16x16xf32> -> vector<4x16x16xf32>
    %c0_7 = arith.constant 0 : index
    %11 = memref.load %arg1[%c0_7] : memref<3xf32, #tpu.memory_space<smem>>
    %12 = vector.broadcast %11 : f32 to vector<4x16x16xf32>
    %13 = arith.subf %10, %12 : vector<4x16x16xf32>
    %cst_8 = arith.constant 0.000000e+00 : f32
    %14 = vector.broadcast %cst_8 : f32 to vector<4x16x16xf32>
    %15 = arith.maximumf %13, %14 : vector<4x16x16xf32>
    %16 = vector.broadcast %11 : f32 to vector<4x16x16xf32>
    %17 = arith.addf %10, %16 : vector<4x16x16xf32>
    %cst_9 = arith.constant 0.000000e+00 : f32
    %18 = vector.broadcast %cst_9 : f32 to vector<4x16x16xf32>
    %19 = arith.minimumf %17, %18 : vector<4x16x16xf32>
    %20 = arith.addf %15, %19 : vector<4x16x16xf32>
    %21 = tpu.iota {dimensions = array<i32: 0>} : vector<16x16xi32>
    %22 = tpu.iota {dimensions = array<i32: 1>} : vector<16x16xi32>
    %c8_i32 = arith.constant 8 : i32
    %23 = vector.broadcast %c8_i32 : i32 to vector<16x16xi32>
    %24 = arith.cmpi sge, %21, %23 : vector<16x16xi32>
    %c8_i32_10 = arith.constant 8 : i32
    %25 = vector.broadcast %c8_i32_10 : i32 to vector<16x16xi32>
    %26 = arith.cmpi sge, %22, %25 : vector<16x16xi32>
    %27 = arith.ori %24, %26 : vector<16x16xi1>
    %28 = vector.shape_cast %27 : vector<16x16xi1> to vector<1x16x16xi1>
    %29 = vector.broadcast %28 : vector<1x16x16xi1> to vector<4x16x16xi1>
    %30 = arith.select %29, %20, %10 : vector<4x16x16xi1>, vector<4x16x16xf32>
    %c0_11 = arith.constant 0 : index
    %c0_12 = arith.constant 0 : index
    %c0_13 = arith.constant 0 : index
    %31 = vector.load %arg15[%c0_11, %c0_12, %c0_13] : memref<4x16x16xf32, #tpu.memory_space<vmem>>, vector<4x16x16xf32>
    tpu.vector_store %arg15[%c0_11, %c0_12, %c0_13], %30 {strides = array<i32>} : memref<4x16x16xf32, #tpu.memory_space<vmem>>, vector<4x16x16xf32>,
    %c0_14 = arith.constant 0 : index
    %c0_15 = arith.constant 0 : index
    %c0_16 = arith.constant 0 : index
    %32 = vector.load %arg15[%c0_14, %c0_15, %c0_16] : memref<4x16x16xf32, #tpu.memory_space<vmem>>, vector<4x8x8xf32>
    %c0_17 = arith.constant 0 : index
    %c0_18 = arith.constant 0 : index
    %33 = vector.load %arg8[%c0_17, %c0_18] : memref<8x8xf32, #tpu.memory_space<vmem>>, vector<8x8xf32>
    %c0_19 = arith.constant 0 : index
    %c0_20 = arith.constant 0 : index
    %34 = vector.load %arg9[%c0_19, %c0_20] : memref<8x8xf32, #tpu.memory_space<vmem>>, vector<8x8xf32>
    %35 = vector.shape_cast %32 : vector<4x8x8xf32> to vector<32x8xf32>
    %cst_21 = arith.constant dense<0.000000e+00> : vector<32x8xf32>
    %36 = tpu.matmul %35, %33, %cst_21 {dimension_numbers = #tpu.dot_dimension_numbers<[1], [0], [0], [1], [0, 0, 1, 1], [], []>} : vector<32x8xf32>, vector<8x8xf32>, vector<32x8xf32> -> vector<32x8xf32>
    %37 = vector.shape_cast %36 : vector<32x8xf32> to vector<4x8x8xf32>
    %38 = tpu.transpose %37, [0, 2, 1] : vector<4x8x8xf32> -> vector<4x8x8xf32>
    %39 = vector.shape_cast %38 : vector<4x8x8xf32> to vector<32x8xf32>
    %cst_22 = arith.constant dense<0.000000e+00> : vector<32x8xf32>
    %40 = tpu.matmul %39, %34, %cst_22 {dimension_numbers = #tpu.dot_dimension_numbers<[1], [0], [0], [1], [0, 0, 1, 1], [], []>} : vector<32x8xf32>, vector<8x8xf32>, vector<32x8xf32> -> vector<32x8xf32>
    %41 = vector.shape_cast %40 : vector<32x8xf32> to vector<4x8x8xf32>
    %42 = tpu.transpose %41, [0, 2, 1] : vector<4x8x8xf32> -> vector<4x8x8xf32>
    %c1 = arith.constant 1 : index
    %43 = memref.load %arg1[%c1] : memref<3xf32, #tpu.memory_space<smem>>
    %44 = vector.broadcast %43 : f32 to vector<4x8x8xf32>
    %45 = arith.subf %42, %44 : vector<4x8x8xf32>
    %cst_23 = arith.constant 0.000000e+00 : f32
    %46 = vector.broadcast %cst_23 : f32 to vector<4x8x8xf32>
    %47 = arith.maximumf %45, %46 : vector<4x8x8xf32>
    %48 = vector.broadcast %43 : f32 to vector<4x8x8xf32>
    %49 = arith.addf %42, %48 : vector<4x8x8xf32>
    %cst_24 = arith.constant 0.000000e+00 : f32
    %50 = vector.broadcast %cst_24 : f32 to vector<4x8x8xf32>
    %51 = arith.minimumf %49, %50 : vector<4x8x8xf32>
    %52 = arith.addf %47, %51 : vector<4x8x8xf32>
    %53 = tpu.iota {dimensions = array<i32: 0>} : vector<8x8xi32>
    %54 = tpu.iota {dimensions = array<i32: 1>} : vector<8x8xi32>
    %c4_i32 = arith.constant 4 : i32
    %55 = vector.broadcast %c4_i32 : i32 to vector<8x8xi32>
    %56 = arith.cmpi sge, %53, %55 : vector<8x8xi32>
    %c4_i32_25 = arith.constant 4 : i32
    %57 = vector.broadcast %c4_i32_25 : i32 to vector<8x8xi32>
    %58 = arith.cmpi sge, %54, %57 : vector<8x8xi32>
    %59 = arith.ori %56, %58 : vector<8x8xi1>
    %60 = vector.shape_cast %59 : vector<8x8xi1> to vector<1x8x8xi1>
    %61 = vector.broadcast %60 : vector<1x8x8xi1> to vector<4x8x8xi1>
    %62 = arith.select %61, %52, %42 : vector<4x8x8xi1>, vector<4x8x8xf32>
    %c0_26 = arith.constant 0 : index
    %c0_27 = arith.constant 0 : index
    %c0_28 = arith.constant 0 : index
    %63 = vector.load %arg15[%c0_26, %c0_27, %c0_28] : memref<4x16x16xf32, #tpu.memory_space<vmem>>, vector<4x8x8xf32>
    tpu.vector_store %arg15[%c0_26, %c0_27, %c0_28], %62 {strides = array<i32>} : memref<4x16x16xf32, #tpu.memory_space<vmem>>, vector<4x8x8xf32>,
    %c0_29 = arith.constant 0 : index
    %c0_30 = arith.constant 0 : index
    %c0_31 = arith.constant 0 : index
    %64 = vector.load %arg15[%c0_29, %c0_30, %c0_31] : memref<4x16x16xf32, #tpu.memory_space<vmem>>, vector<4x4x4xf32>
    %c0_32 = arith.constant 0 : index
    %c0_33 = arith.constant 0 : index
    %65 = vector.load %arg11[%c0_32, %c0_33] : memref<4x4xf32, #tpu.memory_space<vmem>>, vector<4x4xf32>
    %c0_34 = arith.constant 0 : index
    %c0_35 = arith.constant 0 : index
    %66 = vector.load %arg12[%c0_34, %c0_35] : memref<4x4xf32, #tpu.memory_space<vmem>>, vector<4x4xf32>
    %67 = vector.shape_cast %65 : vector<4x4xf32> to vector<1x4x4xf32>
    %68 = vector.broadcast %67 : vector<1x4x4xf32> to vector<4x4x4xf32>
    %69 = vector.shape_cast %66 : vector<4x4xf32> to vector<1x4x4xf32>
    %70 = vector.broadcast %69 : vector<1x4x4xf32> to vector<4x4x4xf32>
    "tpu.trace_start"() <{level = 10 : i32, message = "bij,bjk->bik"}> : () -> ()
    %cst_36 = arith.constant dense<0.000000e+00> : vector<4x4x4xf32>
    %71 = tpu.matmul %68, %64, %cst_36 {dimension_numbers = #tpu.dot_dimension_numbers<[2], [1], [1], [2], [0, 0, 0, 1, 1, 2], [0], [0]>} : vector<4x4x4xf32>, vector<4x4x4xf32>, vector<4x4x4xf32> -> vector<4x4x4xf32>
    "tpu.trace_stop"() : () -> ()
    "tpu.trace_start"() <{level = 10 : i32, message = "bik,bkl->bil"}> : () -> ()
    %cst_37 = arith.constant dense<0.000000e+00> : vector<4x4x4xf32>
    %72 = tpu.matmul %71, %70, %cst_37 {dimension_numbers = #tpu.dot_dimension_numbers<[2], [1], [1], [2], [0, 0, 0, 1, 1, 2], [0], [0]>} : vector<4x4x4xf32>, vector<4x4x4xf32>, vector<4x4x4xf32> -> vector<4x4x4xf32>
    "tpu.trace_stop"() : () -> ()
    %c2 = arith.constant 2 : index
    %73 = memref.load %arg1[%c2] : memref<3xf32, #tpu.memory_space<smem>>
    %74 = vector.broadcast %73 : f32 to vector<4x4x4xf32>
    %75 = arith.subf %72, %74 : vector<4x4x4xf32>
    %cst_38 = arith.constant 0.000000e+00 : f32
    %76 = vector.broadcast %cst_38 : f32 to vector<4x4x4xf32>
    %77 = arith.maximumf %75, %76 : vector<4x4x4xf32>
    %78 = vector.broadcast %73 : f32 to vector<4x4x4xf32>
    %79 = arith.addf %72, %78 : vector<4x4x4xf32>
    %cst_39 = arith.constant 0.000000e+00 : f32
    %80 = vector.broadcast %cst_39 : f32 to vector<4x4x4xf32>
    %81 = arith.minimumf %79, %80 : vector<4x4x4xf32>
    %82 = arith.addf %77, %81 : vector<4x4x4xf32>
    %83 = tpu.iota {dimensions = array<i32: 0>} : vector<4x4xi32>
    %84 = tpu.iota {dimensions = array<i32: 1>} : vector<4x4xi32>
    %c2_i32 = arith.constant 2 : i32
    %85 = vector.broadcast %c2_i32 : i32 to vector<4x4xi32>
    %86 = arith.cmpi sge, %83, %85 : vector<4x4xi32>
    %c2_i32_40 = arith.constant 2 : i32
    %87 = vector.broadcast %c2_i32_40 : i32 to vector<4x4xi32>
    %88 = arith.cmpi sge, %84, %87 : vector<4x4xi32>
    %89 = arith.ori %86, %88 : vector<4x4xi1>
    %90 = vector.shape_cast %89 : vector<4x4xi1> to vector<1x4x4xi1>
    %91 = vector.broadcast %90 : vector<1x4x4xi1> to vector<4x4x4xi1>
    %92 = arith.select %91, %82, %72 : vector<4x4x4xi1>, vector<4x4x4xf32>
    %c0_41 = arith.constant 0 : index
    %c0_42 = arith.constant 0 : index
    %c0_43 = arith.constant 0 : index
    %93 = vector.load %arg15[%c0_41, %c0_42, %c0_43] : memref<4x16x16xf32, #tpu.memory_space<vmem>>, vector<4x4x4xf32>
    tpu.vector_store %arg15[%c0_41, %c0_42, %c0_43], %92 {strides = array<i32>} : memref<4x16x16xf32, #tpu.memory_space<vmem>>, vector<4x4x4xf32>,
    %c0_44 = arith.constant 0 : index
    %c0_45 = arith.constant 0 : index
    %c0_46 = arith.constant 0 : index
    %94 = vector.load %arg15[%c0_44, %c0_45, %c0_46] : memref<4x16x16xf32, #tpu.memory_space<vmem>>, vector<4x4x4xf32>
    %c0_47 = arith.constant 0 : index
    %c0_48 = arith.constant 0 : index
    %95 = vector.load %arg13[%c0_47, %c0_48] : memref<4x4xf32, #tpu.memory_space<vmem>>, vector<4x4xf32>
    %c0_49 = arith.constant 0 : index
    %c0_50 = arith.constant 0 : index
    %96 = vector.load %arg14[%c0_49, %c0_50] : memref<4x4xf32, #tpu.memory_space<vmem>>, vector<4x4xf32>
    %97 = vector.shape_cast %95 : vector<4x4xf32> to vector<1x4x4xf32>
    %98 = vector.broadcast %97 : vector<1x4x4xf32> to vector<4x4x4xf32>
    %99 = vector.shape_cast %96 : vector<4x4xf32> to vector<1x4x4xf32>
    %100 = vector.broadcast %99 : vector<1x4x4xf32> to vector<4x4x4xf32>
    "tpu.trace_start"() <{level = 10 : i32, message = "bij,bjk->bik"}> : () -> ()
    %cst_51 = arith.constant dense<0.000000e+00> : vector<4x4x4xf32>
    %101 = tpu.matmul %98, %94, %cst_51 {dimension_numbers = #tpu.dot_dimension_numbers<[2], [1], [1], [2], [0, 0, 0, 1, 1, 2], [0], [0]>} : vector<4x4x4xf32>, vector<4x4x4xf32>, vector<4x4x4xf32> -> vector<4x4x4xf32>
    "tpu.trace_stop"() : () -> ()
    "tpu.trace_start"() <{level = 10 : i32, message = "bik,bkl->bil"}> : () -> ()
    %cst_52 = arith.constant dense<0.000000e+00> : vector<4x4x4xf32>
    %102 = tpu.matmul %101, %100, %cst_52 {dimension_numbers = #tpu.dot_dimension_numbers<[2], [1], [1], [2], [0, 0, 0, 1, 1, 2], [0], [0]>} : vector<4x4x4xf32>, vector<4x4x4xf32>, vector<4x4x4xf32> -> vector<4x4x4xf32>
    "tpu.trace_stop"() : () -> ()
    %c0_53 = arith.constant 0 : index
    %c0_54 = arith.constant 0 : index
    %c0_55 = arith.constant 0 : index
    %103 = vector.load %arg15[%c0_53, %c0_54, %c0_55] : memref<4x16x16xf32, #tpu.memory_space<vmem>>, vector<4x4x4xf32>
    tpu.vector_store %arg15[%c0_53, %c0_54, %c0_55], %102 {strides = array<i32>} : memref<4x16x16xf32, #tpu.memory_space<vmem>>, vector<4x4x4xf32>,
    %c0_56 = arith.constant 0 : index
    %c0_57 = arith.constant 0 : index
    %c0_58 = arith.constant 0 : index
    %104 = vector.load %arg15[%c0_56, %c0_57, %c0_58] : memref<4x16x16xf32, #tpu.memory_space<vmem>>, vector<4x8x8xf32>
    %c0_59 = arith.constant 0 : index
    %c0_60 = arith.constant 0 : index
    %105 = vector.load %arg7[%c0_59, %c0_60] : memref<8x8xf32, #tpu.memory_space<vmem>>, vector<8x8xf32>
    %c0_61 = arith.constant 0 : index
    %c0_62 = arith.constant 0 : index
    %106 = vector.load %arg10[%c0_61, %c0_62] : memref<8x8xf32, #tpu.memory_space<vmem>>, vector<8x8xf32>
    %107 = vector.shape_cast %104 : vector<4x8x8xf32> to vector<32x8xf32>
    %cst_63 = arith.constant dense<0.000000e+00> : vector<32x8xf32>
    %108 = tpu.matmul %107, %106, %cst_63 {dimension_numbers = #tpu.dot_dimension_numbers<[1], [0], [0], [1], [0, 0, 1, 1], [], []>} : vector<32x8xf32>, vector<8x8xf32>, vector<32x8xf32> -> vector<32x8xf32>
    %109 = vector.shape_cast %108 : vector<32x8xf32> to vector<4x8x8xf32>
    %110 = tpu.transpose %109, [0, 2, 1] : vector<4x8x8xf32> -> vector<4x8x8xf32>
    %111 = vector.shape_cast %110 : vector<4x8x8xf32> to vector<32x8xf32>
    %cst_64 = arith.constant dense<0.000000e+00> : vector<32x8xf32>
    %112 = tpu.matmul %111, %105, %cst_64 {dimension_numbers = #tpu.dot_dimension_numbers<[1], [0], [0], [1], [0, 0, 1, 1], [], []>} : vector<32x8xf32>, vector<8x8xf32>, vector<32x8xf32> -> vector<32x8xf32>
    %113 = vector.shape_cast %112 : vector<32x8xf32> to vector<4x8x8xf32>
    %114 = tpu.transpose %113, [0, 2, 1] : vector<4x8x8xf32> -> vector<4x8x8xf32>
    %c0_65 = arith.constant 0 : index
    %c0_66 = arith.constant 0 : index
    %c0_67 = arith.constant 0 : index
    %115 = vector.load %arg15[%c0_65, %c0_66, %c0_67] : memref<4x16x16xf32, #tpu.memory_space<vmem>>, vector<4x8x8xf32>
    tpu.vector_store %arg15[%c0_65, %c0_66, %c0_67], %114 {strides = array<i32>} : memref<4x16x16xf32, #tpu.memory_space<vmem>>, vector<4x8x8xf32>,
    %c0_68 = arith.constant 0 : index
    %c0_69 = arith.constant 0 : index
    %c0_70 = arith.constant 0 : index
    %116 = vector.load %arg15[%c0_68, %c0_69, %c0_70] : memref<4x16x16xf32, #tpu.memory_space<vmem>>, vector<4x16x16xf32>
    %c0_71 = arith.constant 0 : index
    %c0_72 = arith.constant 0 : index
    %117 = vector.load %arg3[%c0_71, %c0_72] : memref<16x16xf32, #tpu.memory_space<vmem>>, vector<16x16xf32>
    %c0_73 = arith.constant 0 : index
    %c0_74 = arith.constant 0 : index
    %118 = vector.load %arg6[%c0_73, %c0_74] : memref<16x16xf32, #tpu.memory_space<vmem>>, vector<16x16xf32>
    %119 = vector.shape_cast %116 : vector<4x16x16xf32> to vector<64x16xf32>
    %cst_75 = arith.constant dense<0.000000e+00> : vector<64x16xf32>
    %120 = tpu.matmul %119, %118, %cst_75 {dimension_numbers = #tpu.dot_dimension_numbers<[1], [0], [0], [1], [0, 0, 1, 1], [], []>} : vector<64x16xf32>, vector<16x16xf32>, vector<64x16xf32> -> vector<64x16xf32>
    %121 = vector.shape_cast %120 : vector<64x16xf32> to vector<4x16x16xf32>
    %122 = tpu.transpose %121, [0, 2, 1] : vector<4x16x16xf32> -> vector<4x16x16xf32>
    %123 = vector.shape_cast %122 : vector<4x16x16xf32> to vector<64x16xf32>
    %cst_76 = arith.constant dense<0.000000e+00> : vector<64x16xf32>
    %124 = tpu.matmul %123, %117, %cst_76 {dimension_numbers = #tpu.dot_dimension_numbers<[1], [0], [0], [1], [0, 0, 1, 1], [], []>} : vector<64x16xf32>, vector<16x16xf32>, vector<64x16xf32> -> vector<64x16xf32>
    %125 = vector.shape_cast %124 : vector<64x16xf32> to vector<4x16x16xf32>
    %126 = tpu.transpose %125, [0, 2, 1] : vector<4x16x16xf32> -> vector<4x16x16xf32>
    %c0_77 = arith.constant 0 : index
    %c0_78 = arith.constant 0 : index
    %c0_79 = arith.constant 0 : index
    %127 = vector.load %arg15[%c0_77, %c0_78, %c0_79] : memref<4x16x16xf32, #tpu.memory_space<vmem>>, vector<4x16x16xf32>
    tpu.vector_store %arg15[%c0_77, %c0_78, %c0_79], %126 {strides = array<i32>} : memref<4x16x16xf32, #tpu.memory_space<vmem>>, vector<4x16x16xf32>,
    return
  }
  func.func @transform_0(%arg0: i32) -> i32 {
    %c0_i32 = arith.constant 0 : i32
    %c0_i32_0 = arith.constant 0 : i32
    return %c0_i32 : i32
  }
  func.func @transform_1(%arg0: i32) -> (i32, i32, i32) {
    %c0_i32 = arith.constant 0 : i32
    %c0_i32_0 = arith.constant 0 : i32
    %c0_i32_1 = arith.constant 0 : i32
    return %arg0, %c0_i32, %c0_i32_0 : i32, i32, i32
  }
  func.func @transform_2(%arg0: i32) -> (i32, i32) {
    %c0_i32 = arith.constant 0 : i32
    %c0_i32_0 = arith.constant 0 : i32
    %c0_i32_1 = arith.constant 0 : i32
    return %c0_i32, %c0_i32_0 : i32, i32
  }
  func.func @transform_3(%arg0: i32) -> (i32, i32) {
    %c0_i32 = arith.constant 0 : i32
    %c0_i32_0 = arith.constant 0 : i32
    %c0_i32_1 = arith.constant 0 : i32
    return %c0_i32, %c0_i32_0 : i32, i32
  }
  func.func @transform_4(%arg0: i32) -> (i32, i32) {
    %c0_i32 = arith.constant 0 : i32
    %c0_i32_0 = arith.constant 0 : i32
    %c0_i32_1 = arith.constant 0 : i32
    return %c0_i32, %c0_i32_0 : i32, i32
  }
  func.func @transform_5(%arg0: i32) -> (i32, i32) {
    %c0_i32 = arith.constant 0 : i32
    %c0_i32_0 = arith.constant 0 : i32
    %c0_i32_1 = arith.constant 0 : i32
    return %c0_i32, %c0_i32_0 : i32, i32
  }
  func.func @transform_6(%arg0: i32) -> (i32, i32) {
    %c0_i32 = arith.constant 0 : i32
    %c0_i32_0 = arith.constant 0 : i32
    %c0_i32_1 = arith.constant 0 : i32
    return %c0_i32, %c0_i32_0 : i32, i32
  }
  func.func @transform_7(%arg0: i32) -> (i32, i32) {
    %c0_i32 = arith.constant 0 : i32
    %c0_i32_0 = arith.constant 0 : i32
    %c0_i32_1 = arith.constant 0 : i32
    return %c0_i32, %c0_i32_0 : i32, i32
  }
  func.func @transform_8(%arg0: i32) -> (i32, i32) {
    %c0_i32 = arith.constant 0 : i32
    %c0_i32_0 = arith.constant 0 : i32
    %c0_i32_1 = arith.constant 0 : i32
    return %c0_i32, %c0_i32_0 : i32, i32
  }
  func.func @transform_9(%arg0: i32) -> (i32, i32) {
    %c0_i32 = arith.constant 0 : i32
    %c0_i32_0 = arith.constant 0 : i32
    %c0_i32_1 = arith.constant 0 : i32
    return %c0_i32, %c0_i32_0 : i32, i32
  }
  func.func @transform_10(%arg0: i32) -> (i32, i32) {
    %c0_i32 = arith.constant 0 : i32
    %c0_i32_0 = arith.constant 0 : i32
    %c0_i32_1 = arith.constant 0 : i32
    return %c0_i32, %c0_i32_0 : i32, i32
  }
  func.func @transform_11(%arg0: i32) -> (i32, i32) {
    %c0_i32 = arith.constant 0 : i32
    %c0_i32_0 = arith.constant 0 : i32
    %c0_i32_1 = arith.constant 0 : i32
    return %c0_i32, %c0_i32_0 : i32, i32
  }
  func.func @transform_12(%arg0: i32) -> (i32, i32) {
    %c0_i32 = arith.constant 0 : i32
    %c0_i32_0 = arith.constant 0 : i32
    %c0_i32_1 = arith.constant 0 : i32
    return %c0_i32, %c0_i32_0 : i32, i32
  }
  func.func @transform_13(%arg0: i32) -> (i32, i32) {
    %c0_i32 = arith.constant 0 : i32
    %c0_i32_0 = arith.constant 0 : i32
    %c0_i32_1 = arith.constant 0 : i32
    return %c0_i32, %c0_i32_0 : i32, i32
  }
  func.func @transform_14(%arg0: i32) -> (i32, i32, i32) {
    %c0_i32 = arith.constant 0 : i32
    %c0_i32_0 = arith.constant 0 : i32
    %c0_i32_1 = arith.constant 0 : i32
    return %arg0, %c0_i32, %c0_i32_0 : i32, i32, i32
  }
}

</mosaic_0001>

<llo_original>
// kernel: tpu_custom_call.1
$region0: #{tpu_custom_call.1}
  #allocation0 [shape = 'u32[]', space=smem, size = 0x4, offset = 0x4, fixed_abs, tag = 'smem constant byte address 0x4 - core index']
  #allocation1 [shape = 'u32[144,128]{1,0:T(1,128)}', space=vmem, size = 0x12000, scoped, tag = 'internal scratch']
  %s0 = inlined_call_operand.hbm [shape: f32[3], index: 0, kind: input, shape index: {}]
  %s1 = inlined_call_operand.hbm [shape: f32[8,16,16], index: 1, kind: input, shape index: {}]
  %s2 = inlined_call_operand.hbm [shape: f32[16,16], index: 2, kind: input, shape index: {}]
  %s3 = inlined_call_operand.hbm [shape: f32[16,16], index: 3, kind: input, shape index: {}]
  %s4 = inlined_call_operand.hbm [shape: f32[16,16], index: 4, kind: input, shape index: {}]
  %s5 = inlined_call_operand.vmem [shape: f32[16,16], index: 5, kind: input, shape index: {}]
  %s6 = inlined_call_operand.hbm [shape: f32[8,8], index: 6, kind: input, shape index: {}]
  %s7 = inlined_call_operand.vmem [shape: f32[8,8], index: 7, kind: input, shape index: {}]
  %s8 = inlined_call_operand.hbm [shape: f32[8,8], index: 8, kind: input, shape index: {}]
  %s9 = inlined_call_operand.vmem [shape: f32[8,8], index: 9, kind: input, shape index: {}]
  %s10 = inlined_call_operand.vmem [shape: f32[4,4], index: 10, kind: input, shape index: {}]
  %s11 = inlined_call_operand.vmem [shape: f32[4,4], index: 11, kind: input, shape index: {}]
  %s12 = inlined_call_operand.vmem [shape: f32[4,4], index: 12, kind: input, shape index: {}]
  %s13 = inlined_call_operand.vmem [shape: f32[4,4], index: 13, kind: input, shape index: {}]
  %s14 = inlined_call_operand.hbm [shape: f32[8,16,16], index: 14, kind: output, shape index: {}]
  %s15 = sld [smem:[#allocation0]]
  $region117: #{tpu_custom_call.1} parent=0
    _
  %s17 = ssub.s32 1, %s15
  %s18 = scalar_select 0, %s17, %s15
  $region1: #{tpu_custom_call.1} parent=0
    #allocation2 [shape = 'u8[512]{0}', space=smem, size = 0x200, scoped, tag = 'input window, operand 0, single buffered']
    #allocation3 [shape = 's32[2]{0}', space=sflag, size = 0x8, scoped, tag = 'scoped memory for tpu_custom_call.1']
    #allocation4 [shape = 's32[2]{0}', space=sflag, size = 0x8, scoped, tag = 'scoped memory for tpu_custom_call.1']
    #allocation5 [shape = 's32[2]{0}', space=sflag, size = 0x8, scoped, tag = 'scoped memory for tpu_custom_call.1']
    #allocation6 [shape = 'u8[65536]{0}', space=vmem, size = 0x10000, scoped, tag = 'input window, operand 1']
    #allocation7 [shape = 'u8[8192]{0}', space=vmem, size = 0x2000, scoped, tag = 'input window, operand 2, single buffered']
    #allocation8 [shape = 's32[1]{0}', space=sflag, size = 0x4, scoped, tag = 'scoped memory for tpu_custom_call.1']
    #allocation9 [shape = 'u8[8192]{0}', space=vmem, size = 0x2000, scoped, tag = 'input window, operand 3, single buffered']
    #allocation10 [shape = 'u8[8192]{0}', space=vmem, size = 0x2000, scoped, tag = 'input window, operand 4, single buffered']
    #allocation11 [shape = 's32[1]{0}', space=sflag, size = 0x4, scoped, tag = 'scoped memory for tpu_custom_call.1']
    #allocation12 [shape = 'u8[4096]{0}', space=vmem, size = 0x1000, scoped, tag = 'input window, operand 6, single buffered']
    #allocation13 [shape = 'u8[4096]{0}', space=vmem, size = 0x1000, scoped, tag = 'input window, operand 8, single buffered']
    #allocation14 [shape = 's32[1]{0}', space=sflag, size = 0x4, scoped, tag = 'scoped memory for tpu_custom_call.1']
    #allocation15 [shape = 'u8[65536]{0}', space=vmem, size = 0x10000, scoped, tag = 'output window, operand 0']
    %19 = vsyncpa [#allocation5], 0
    %20 = vsyncpa [#allocation3], 0
    %s21 = scalar_lea.sflag [#allocation3], 1
    %22 = vsyncpa %s21, 0
    %23 = vsyncpa [#allocation8], 0
    %24 = vsyncpa [#allocation11], 0
    %25 = vsyncpa [#allocation14], 0
    %26 = vsyncpa [#allocation4], 0
    %s27 = scalar_lea.sflag [#allocation4], 1
    %28 = vsyncpa %s27, 0
    loop: start=0, step=1, limit=4
    $region2: #{tpu_custom_call.1} parent=1 // loop_pre_header
      _
    $region3: #{tpu_custom_call.1} parent=1 // loop_header
      %s30 = sphi 0, %s34
      %p31 = scmp.ge.s32.totalorder %s30, 4
      %s38 = sphi 0, %s38
      %s40 = sphi 0, %s38
      %s41 = sphi 0, %s40
      %s55 = sphi 0, %s41
      %s61 = sphi 0, %s63
      %s64 = sphi 0, %s61
      %s65 = sphi 0, %s64
      %s81 = sphi 0, %s65
      %s85 = sphi 0, %s85
      %s87 = sphi 0, %s85
      %s88 = sphi 0, %s87
      %s102 = sphi 0, %s88
      %s106 = sphi 0, %s106
      %s108 = sphi 0, %s106
      %s109 = sphi 0, %s108
      %s123 = sphi 0, %s109
      %s127 = sphi 0, %s127
      %s129 = sphi 0, %s127
      %s130 = sphi 0, %s129
      %s144 = sphi 0, %s130
      %s148 = sphi 0, %s148
      %s150 = sphi 0, %s148
      %s151 = sphi 0, %s150
      %s165 = sphi 0, %s151
      %s169 = sphi 0, %s169
      %s171 = sphi 0, %s169
      %s172 = sphi 0, %s171
      %s186 = sphi 0, %s172
      %s190 = sphi 0, %s190
      %s192 = sphi 0, %s190
      %s193 = sphi 0, %s192
      %s207 = sphi 0, %s193
      %s211 = sphi 0, %s211
      %s213 = sphi 0, %s211
      %s214 = sphi 0, %s213
      %s228 = sphi 0, %s214
      %s232 = sphi 0, %s232
      %s234 = sphi 0, %s232
      %s235 = sphi 0, %s234
      %s249 = sphi 0, %s235
      %s253 = sphi 0, %s253
      %s255 = sphi 0, %s253
      %s256 = sphi 0, %s255
      %s270 = sphi 0, %s256
      %s274 = sphi 0, %s274
      %s276 = sphi 0, %s274
      %s277 = sphi 0, %s276
      %s291 = sphi 0, %s277
      %s295 = sphi 0, %s295
      %s297 = sphi 0, %s295
      %s298 = sphi 0, %s297
      %s312 = sphi 0, %s298
      %s316 = sphi 0, %s316
      %s318 = sphi 0, %s316
      %s319 = sphi 0, %s318
      %s333 = sphi 0, %s319
      %s339 = sphi 0, %s341
      %s342 = sphi 0, %s339
      %s343 = sphi 0, %s342
      %s359 = sphi 0, %s343
    $region4: #{tpu_custom_call.1} parent=1 // loop_header_branch
      %33 = sbr.rel (%p31) target = $region8
    $region5: #{tpu_custom_call.1} parent=1 // loop_body
      %s35 = ssub.s32 %s30, 1
      %s36 = ssub.s32 %s30, 2
      %s37 = sadd.s32 %s30, 1
      %s39 = sadd.s32 %s38, 1
      %p42 = scmp.eq.s32.totalorder %s30, 1
      %p43 = scmp.ne.s32.totalorder %s38, %s40
      %p44 = scmp.eq.s32.totalorder %s30, 0
      %p45 = por %p43, %p44
      %p46 = scmp.ne.s32.totalorder %s38, %s40
      %p47 = scmp.eq.s32.totalorder %s35, 1
      %p48 = por %p46, %p47
      %p49 = scmp.ne.s32.totalorder %s40, %s41
      %p50 = scmp.eq.s32.totalorder %s35, 0
      %p51 = por %p49, %p50
      %p52 = scmp.ne.s32.totalorder %s40, %s41
      %p53 = scmp.eq.s32.totalorder %s36, 1
      %p54 = por %p52, %p53
      %p56 = scmp.ne.s32.totalorder %s41, %s55
      %p57 = scmp.eq.s32.totalorder %s36, 0
      %p58 = por %p56, %p57
      %s59 = ssub.s32 %s30, %s37
      %p60 = scmp.eq.s32.totalorder %s59, 0
      %s62 = sadd.s32 %s61, 1
      %s63 = scalar_select %p60, %s61, %s62
      %p66 = pneg %p60
      %p67 = scmp.eq.s32.totalorder %s30, 1
      %p68 = por %p66, %p67
      %p69 = scmp.ne.s32.totalorder %s61, %s64
      %p70 = scmp.eq.s32.totalorder %s30, 0
      %p71 = por %p69, %p70
      %p72 = scmp.ne.s32.totalorder %s61, %s64
      %p73 = scmp.eq.s32.totalorder %s35, 1
      %p74 = por %p72, %p73
      %p75 = scmp.ne.s32.totalorder %s64, %s65
      %p76 = scmp.eq.s32.totalorder %s35, 0
      %p77 = por %p75, %p76
      %p78 = scmp.ne.s32.totalorder %s64, %s65
      %p79 = scmp.eq.s32.totalorder %s36, 1
      %p80 = por %p78, %p79
      %p82 = scmp.ne.s32.totalorder %s65, %s81
      %p83 = scmp.eq.s32.totalorder %s36, 0
      %p84 = por %p82, %p83
      %s86 = sadd.s32 %s85, 1
      %p89 = scmp.eq.s32.totalorder %s30, 1
      %p90 = scmp.ne.s32.totalorder %s85, %s87
      %p91 = scmp.eq.s32.totalorder %s30, 0
      %p92 = por %p90, %p91
      %p93 = scmp.ne.s32.totalorder %s85, %s87
      %p94 = scmp.eq.s32.totalorder %s35, 1
      %p95 = por %p93, %p94
      %p96 = scmp.ne.s32.totalorder %s87, %s88
      %p97 = scmp.eq.s32.totalorder %s35, 0
      %p98 = por %p96, %p97
      %p99 = scmp.ne.s32.totalorder %s87, %s88
      %p100 = scmp.eq.s32.totalorder %s36, 1
      %p101 = por %p99, %p100
      %p103 = scmp.ne.s32.totalorder %s88, %s102
      %p104 = scmp.eq.s32.totalorder %s36, 0
      %p105 = por %p103, %p104
      %s107 = sadd.s32 %s106, 1
      %p110 = scmp.eq.s32.totalorder %s30, 1
      %p111 = scmp.ne.s32.totalorder %s106, %s108
      %p112 = scmp.eq.s32.totalorder %s30, 0
      %p113 = por %p111, %p112
      %p114 = scmp.ne.s32.totalorder %s106, %s108
      %p115 = scmp.eq.s32.totalorder %s35, 1
      %p116 = por %p114, %p115
      %p117 = scmp.ne.s32.totalorder %s108, %s109
      %p118 = scmp.eq.s32.totalorder %s35, 0
      %p119 = por %p117, %p118
      %p120 = scmp.ne.s32.totalorder %s108, %s109
      %p121 = scmp.eq.s32.totalorder %s36, 1
      %p122 = por %p120, %p121
      %p124 = scmp.ne.s32.totalorder %s109, %s123
      %p125 = scmp.eq.s32.totalorder %s36, 0
      %p126 = por %p124, %p125
      %s128 = sadd.s32 %s127, 1
      %p131 = scmp.eq.s32.totalorder %s30, 1
      %p132 = scmp.ne.s32.totalorder %s127, %s129
      %p133 = scmp.eq.s32.totalorder %s30, 0
      %p134 = por %p132, %p133
      %p135 = scmp.ne.s32.totalorder %s127, %s129
      %p136 = scmp.eq.s32.totalorder %s35, 1
      %p137 = por %p135, %p136
      %p138 = scmp.ne.s32.totalorder %s129, %s130
      %p139 = scmp.eq.s32.totalorder %s35, 0
      %p140 = por %p138, %p139
      %p141 = scmp.ne.s32.totalorder %s129, %s130
      %p142 = scmp.eq.s32.totalorder %s36, 1
      %p143 = por %p141, %p142
      %p145 = scmp.ne.s32.totalorder %s130, %s144
      %p146 = scmp.eq.s32.totalorder %s36, 0
      %p147 = por %p145, %p146
      %s149 = sadd.s32 %s148, 1
      %p152 = scmp.eq.s32.totalorder %s30, 1
      %p153 = scmp.ne.s32.totalorder %s148, %s150
      %p154 = scmp.eq.s32.totalorder %s30, 0
      %p155 = por %p153, %p154
      %p156 = scmp.ne.s32.totalorder %s148, %s150
      %p157 = scmp.eq.s32.totalorder %s35, 1
      %p158 = por %p156, %p157
      %p159 = scmp.ne.s32.totalorder %s150, %s151
      %p160 = scmp.eq.s32.totalorder %s35, 0
      %p161 = por %p159, %p160
      %p162 = scmp.ne.s32.totalorder %s150, %s151
      %p163 = scmp.eq.s32.totalorder %s36, 1
      %p164 = por %p162, %p163
      %p166 = scmp.ne.s32.totalorder %s151, %s165
      %p167 = scmp.eq.s32.totalorder %s36, 0
      %p168 = por %p166, %p167
      %s170 = sadd.s32 %s169, 1
      %p173 = scmp.eq.s32.totalorder %s30, 1
      %p174 = scmp.ne.s32.totalorder %s169, %s171
      %p175 = scmp.eq.s32.totalorder %s30, 0
      %p176 = por %p174, %p175
      %p177 = scmp.ne.s32.totalorder %s169, %s171
      %p178 = scmp.eq.s32.totalorder %s35, 1
      %p179 = por %p177, %p178
      %p180 = scmp.ne.s32.totalorder %s171, %s172
      %p181 = scmp.eq.s32.totalorder %s35, 0
      %p182 = por %p180, %p181
      %p183 = scmp.ne.s32.totalorder %s171, %s172
      %p184 = scmp.eq.s32.totalorder %s36, 1
      %p185 = por %p183, %p184
      %p187 = scmp.ne.s32.totalorder %s172, %s186
      %p188 = scmp.eq.s32.totalorder %s36, 0
      %p189 = por %p187, %p188
      %s191 = sadd.s32 %s190, 1
      %p194 = scmp.eq.s32.totalorder %s30, 1
      %p195 = scmp.ne.s32.totalorder %s190, %s192
      %p196 = scmp.eq.s32.totalorder %s30, 0
      %p197 = por %p195, %p196
      %p198 = scmp.ne.s32.totalorder %s190, %s192
      %p199 = scmp.eq.s32.totalorder %s35, 1
      %p200 = por %p198, %p199
      %p201 = scmp.ne.s32.totalorder %s192, %s193
      %p202 = scmp.eq.s32.totalorder %s35, 0
      %p203 = por %p201, %p202
      %p204 = scmp.ne.s32.totalorder %s192, %s193
      %p205 = scmp.eq.s32.totalorder %s36, 1
      %p206 = por %p204, %p205
      %p208 = scmp.ne.s32.totalorder %s193, %s207
      %p209 = scmp.eq.s32.totalorder %s36, 0
      %p210 = por %p208, %p209
      %s212 = sadd.s32 %s211, 1
      %p215 = scmp.eq.s32.totalorder %s30, 1
      %p216 = scmp.ne.s32.totalorder %s211, %s213
      %p217 = scmp.eq.s32.totalorder %s30, 0
      %p218 = por %p216, %p217
      %p219 = scmp.ne.s32.totalorder %s211, %s213
      %p220 = scmp.eq.s32.totalorder %s35, 1
      %p221 = por %p219, %p220
      %p222 = scmp.ne.s32.totalorder %s213, %s214
      %p223 = scmp.eq.s32.totalorder %s35, 0
      %p224 = por %p222, %p223
      %p225 = scmp.ne.s32.totalorder %s213, %s214
      %p226 = scmp.eq.s32.totalorder %s36, 1
      %p227 = por %p225, %p226
      %p229 = scmp.ne.s32.totalorder %s214, %s228
      %p230 = scmp.eq.s32.totalorder %s36, 0
      %p231 = por %p229, %p230
      %s233 = sadd.s32 %s232, 1
      %p236 = scmp.eq.s32.totalorder %s30, 1
      %p237 = scmp.ne.s32.totalorder %s232, %s234
      %p238 = scmp.eq.s32.totalorder %s30, 0
      %p239 = por %p237, %p238
      %p240 = scmp.ne.s32.totalorder %s232, %s234
      %p241 = scmp.eq.s32.totalorder %s35, 1
      %p242 = por %p240, %p241
      %p243 = scmp.ne.s32.totalorder %s234, %s235
      %p244 = scmp.eq.s32.totalorder %s35, 0
      %p245 = por %p243, %p244
      %p246 = scmp.ne.s32.totalorder %s234, %s235
      %p247 = scmp.eq.s32.totalorder %s36, 1
      %p248 = por %p246, %p247
      %p250 = scmp.ne.s32.totalorder %s235, %s249
      %p251 = scmp.eq.s32.totalorder %s36, 0
      %p252 = por %p250, %p251
      %s254 = sadd.s32 %s253, 1
      %p257 = scmp.eq.s32.totalorder %s30, 1
      %p258 = scmp.ne.s32.totalorder %s253, %s255
      %p259 = scmp.eq.s32.totalorder %s30, 0
      %p260 = por %p258, %p259
      %p261 = scmp.ne.s32.totalorder %s253, %s255
      %p262 = scmp.eq.s32.totalorder %s35, 1
      %p263 = por %p261, %p262
      %p264 = scmp.ne.s32.totalorder %s255, %s256
      %p265 = scmp.eq.s32.totalorder %s35, 0
      %p266 = por %p264, %p265
      %p267 = scmp.ne.s32.totalorder %s255, %s256
      %p268 = scmp.eq.s32.totalorder %s36, 1
      %p269 = por %p267, %p268
      %p271 = scmp.ne.s32.totalorder %s256, %s270
      %p272 = scmp.eq.s32.totalorder %s36, 0
      %p273 = por %p271, %p272
      %s275 = sadd.s32 %s274, 1
      %p278 = scmp.eq.s32.totalorder %s30, 1
      %p279 = scmp.ne.s32.totalorder %s274, %s276
      %p280 = scmp.eq.s32.totalorder %s30, 0
      %p281 = por %p279, %p280
      %p282 = scmp.ne.s32.totalorder %s274, %s276
      %p283 = scmp.eq.s32.totalorder %s35, 1
      %p284 = por %p282, %p283
      %p285 = scmp.ne.s32.totalorder %s276, %s277
      %p286 = scmp.eq.s32.totalorder %s35, 0
      %p287 = por %p285, %p286
      %p288 = scmp.ne.s32.totalorder %s276, %s277
      %p289 = scmp.eq.s32.totalorder %s36, 1
      %p290 = por %p288, %p289
      %p292 = scmp.ne.s32.totalorder %s277, %s291
      %p293 = scmp.eq.s32.totalorder %s36, 0
      %p294 = por %p292, %p293
      %s296 = sadd.s32 %s295, 1
      %p299 = scmp.eq.s32.totalorder %s30, 1
      %p300 = scmp.ne.s32.totalorder %s295, %s297
      %p301 = scmp.eq.s32.totalorder %s30, 0
      %p302 = por %p300, %p301
      %p303 = scmp.ne.s32.totalorder %s295, %s297
      %p304 = scmp.eq.s32.totalorder %s35, 1
      %p305 = por %p303, %p304
      %p306 = scmp.ne.s32.totalorder %s297, %s298
      %p307 = scmp.eq.s32.totalorder %s35, 0
      %p308 = por %p306, %p307
      %p309 = scmp.ne.s32.totalorder %s297, %s298
      %p310 = scmp.eq.s32.totalorder %s36, 1
      %p311 = por %p309, %p310
      %p313 = scmp.ne.s32.totalorder %s298, %s312
      %p314 = scmp.eq.s32.totalorder %s36, 0
      %p315 = por %p313, %p314
      %s317 = sadd.s32 %s316, 1
      %p320 = scmp.eq.s32.totalorder %s30, 1
      %p321 = scmp.ne.s32.totalorder %s316, %s318
      %p322 = scmp.eq.s32.totalorder %s30, 0
      %p323 = por %p321, %p322
      %p324 = scmp.ne.s32.totalorder %s316, %s318
      %p325 = scmp.eq.s32.totalorder %s35, 1
      %p326 = por %p324, %p325
      %p327 = scmp.ne.s32.totalorder %s318, %s319
      %p328 = scmp.eq.s32.totalorder %s35, 0
      %p329 = por %p327, %p328
      %p330 = scmp.ne.s32.totalorder %s318, %s319
      %p331 = scmp.eq.s32.totalorder %s36, 1
      %p332 = por %p330, %p331
      %p334 = scmp.ne.s32.totalorder %s319, %s333
      %p335 = scmp.eq.s32.totalorder %s36, 0
      %p336 = por %p334, %p335
      %s337 = ssub.s32 %s30, %s37
      %p338 = scmp.eq.s32.totalorder %s337, 0
      %s340 = sadd.s32 %s339, 1
      %s341 = scalar_select %p338, %s339, %s340
      %p344 = pneg %p338
      %p345 = scmp.eq.s32.totalorder %s30, 1
      %p346 = por %p344, %p345
      %p347 = scmp.ne.s32.totalorder %s339, %s342
      %p348 = scmp.eq.s32.totalorder %s30, 0
      %p349 = por %p347, %p348
      %p350 = scmp.ne.s32.totalorder %s339, %s342
      %p351 = scmp.eq.s32.totalorder %s35, 1
      %p352 = por %p350, %p351
      %p353 = scmp.ne.s32.totalorder %s342, %s343
      %p354 = scmp.eq.s32.totalorder %s35, 0
      %p355 = por %p353, %p354
      %p356 = scmp.ne.s32.totalorder %s342, %s343
      %p357 = scmp.eq.s32.totalorder %s36, 1
      %p358 = por %p356, %p357
      %p360 = scmp.ne.s32.totalorder %s343, %s359
      %p361 = scmp.eq.s32.totalorder %s36, 0
      %p362 = por %p360, %p361
      %p363 = scmp.le.s32.totalorder 1, %s30
      %p364 = scmp.lt.s32.totalorder %s30, 3
      %p365 = pnand %p363, %p364
      %p366 = pneg %p365
      // Predicated region
      $region9: #{tpu_custom_call.1} parent=5 // pred_check
        _
      $region10: #{tpu_custom_call.1} parent=5 // pred_check_branch
        %368 = sbr.rel (%p365) target = $region12
      $region11: #{tpu_custom_call.1} parent=5 // pred_region
        %s369 = ssub.s32 %s30, 1
        // Predicated region
        $region13: #{tpu_custom_call.1} parent=11 // pred_check
          %p370 = pneg %p51
        $region14: #{tpu_custom_call.1} parent=11 // pred_check_branch
          %372 = sbr.rel (%p370) target = $region16
        $region15: #{tpu_custom_call.1} parent=11 // pred_region
          %s374 = ssub.s32 16, 16
          %375 = vsyncadd [#allocation5], %s374
          %378 = dma.hbm_to_smem %s0, 16, [#allocation2], [#allocation5]
        $region16: #{tpu_custom_call.1} parent=11 // pred_fallthru
          _
        // Predicated region
        $region17: #{tpu_custom_call.1} parent=11 // pred_check
          %p379 = pneg %p98
        $region18: #{tpu_custom_call.1} parent=11 // pred_check_branch
          %381 = sbr.rel (%p379) target = $region20
        $region19: #{tpu_custom_call.1} parent=11 // pred_region
          %s383 = ssub.s32 256, 256
          %384 = vsyncadd [#allocation8], %s383
          %s385 = sshll.u32 [#allocation7], 4
          %s386 = int_to_ptr.vmem [resolvable:$true] %s385
          %391 = dma.hbm_to_vmem [thread:$0]  %s2, 256, %s386, [#allocation8], 128, 128, 8
        $region20: #{tpu_custom_call.1} parent=11 // pred_fallthru
          _
        // Predicated region
        $region21: #{tpu_custom_call.1} parent=11 // pred_check
          %p392 = pneg %p119
        $region22: #{tpu_custom_call.1} parent=11 // pred_check_branch
          %394 = sbr.rel (%p392) target = $region24
        $region23: #{tpu_custom_call.1} parent=11 // pred_region
          %s396 = ssub.s32 256, 256
          %397 = vsyncadd [#allocation8], %s396
          %s398 = sshll.u32 [#allocation9], 4
          %s399 = int_to_ptr.vmem [resolvable:$true] %s398
          %404 = dma.hbm_to_vmem [thread:$0]  %s3, 256, %s399, [#allocation8], 128, 128, 8
        $region24: #{tpu_custom_call.1} parent=11 // pred_fallthru
          _
        // Predicated region
        $region25: #{tpu_custom_call.1} parent=11 // pred_check
          %p405 = pneg %p140
        $region26: #{tpu_custom_call.1} parent=11 // pred_check_branch
          %407 = sbr.rel (%p405) target = $region28
        $region27: #{tpu_custom_call.1} parent=11 // pred_region
          %s409 = ssub.s32 256, 256
          %410 = vsyncadd [#allocation11], %s409
          %s411 = sshll.u32 [#allocation10], 4
          %s412 = int_to_ptr.vmem [resolvable:$true] %s411
          %417 = dma.hbm_to_vmem [thread:$0]  %s4, 256, %s412, [#allocation11], 128, 128, 8
        $region28: #{tpu_custom_call.1} parent=11 // pred_fallthru
          _
        // Predicated region
        $region29: #{tpu_custom_call.1} parent=11 // pred_check
          %p418 = pneg %p161
        $region30: #{tpu_custom_call.1} parent=11 // pred_check_branch
          %420 = sbr.rel (%p418) target = $region32
        $region31: #{tpu_custom_call.1} parent=11 // pred_region
          _
        $region32: #{tpu_custom_call.1} parent=11 // pred_fallthru
          _
        // Predicated region
        $region33: #{tpu_custom_call.1} parent=11 // pred_check
          %p421 = pneg %p182
        $region34: #{tpu_custom_call.1} parent=11 // pred_check_branch
          %423 = sbr.rel (%p421) target = $region36
        $region35: #{tpu_custom_call.1} parent=11 // pred_region
          %s425 = ssub.s32 128, 128
          %426 = vsyncadd [#allocation11], %s425
          %s428 = sshll.u32 [#allocation12], 4
          %s429 = int_to_ptr.vmem [resolvable:$true] %s428
          %431 = dma.hbm_to_vmem [thread:$0]  %s6, 128, %s429, [#allocation11]
        $region36: #{tpu_custom_call.1} parent=11 // pred_fallthru
          _
        // Predicated region
        $region37: #{tpu_custom_call.1} parent=11 // pred_check
          %p432 = pneg %p203
        $region38: #{tpu_custom_call.1} parent=11 // pred_check_branch
          %434 = sbr.rel (%p432) target = $region40
        $region39: #{tpu_custom_call.1} parent=11 // pred_region
          _
        $region40: #{tpu_custom_call.1} parent=11 // pred_fallthru
          _
        // Predicated region
        $region41: #{tpu_custom_call.1} parent=11 // pred_check
          %p435 = pneg %p224
        $region42: #{tpu_custom_call.1} parent=11 // pred_check_branch
          %437 = sbr.rel (%p435) target = $region44
        $region43: #{tpu_custom_call.1} parent=11 // pred_region
          %s439 = ssub.s32 128, 128
          %440 = vsyncadd [#allocation14], %s439
          %s442 = sshll.u32 [#allocation13], 4
          %s443 = int_to_ptr.vmem [resolvable:$true] %s442
          %445 = dma.hbm_to_vmem [thread:$0]  %s8, 128, %s443, [#allocation14]
        $region44: #{tpu_custom_call.1} parent=11 // pred_fallthru
          _
        // Predicated region
        $region45: #{tpu_custom_call.1} parent=11 // pred_check
          %p446 = pneg %p245
        $region46: #{tpu_custom_call.1} parent=11 // pred_check_branch
          %448 = sbr.rel (%p446) target = $region48
        $region47: #{tpu_custom_call.1} parent=11 // pred_region
          _
        $region48: #{tpu_custom_call.1} parent=11 // pred_fallthru
          _
        // Predicated region
        $region49: #{tpu_custom_call.1} parent=11 // pred_check
          %p449 = pneg %p266
        $region50: #{tpu_custom_call.1} parent=11 // pred_check_branch
          %451 = sbr.rel (%p449) target = $region52
        $region51: #{tpu_custom_call.1} parent=11 // pred_region
          _
        $region52: #{tpu_custom_call.1} parent=11 // pred_fallthru
          _
        // Predicated region
        $region53: #{tpu_custom_call.1} parent=11 // pred_check
          %p452 = pneg %p287
        $region54: #{tpu_custom_call.1} parent=11 // pred_check_branch
          %454 = sbr.rel (%p452) target = $region56
        $region55: #{tpu_custom_call.1} parent=11 // pred_region
          _
        $region56: #{tpu_custom_call.1} parent=11 // pred_fallthru
          _
        // Predicated region
        $region57: #{tpu_custom_call.1} parent=11 // pred_check
          %p455 = pneg %p308
        $region58: #{tpu_custom_call.1} parent=11 // pred_check_branch
          %457 = sbr.rel (%p455) target = $region60
        $region59: #{tpu_custom_call.1} parent=11 // pred_region
          _
        $region60: #{tpu_custom_call.1} parent=11 // pred_fallthru
          _
        // Predicated region
        $region61: #{tpu_custom_call.1} parent=11 // pred_check
          %p458 = pneg %p329
        $region62: #{tpu_custom_call.1} parent=11 // pred_check_branch
          %460 = sbr.rel (%p458) target = $region64
        $region63: #{tpu_custom_call.1} parent=11 // pred_region
          _
        $region64: #{tpu_custom_call.1} parent=11 // pred_fallthru
          _
      $region12: #{tpu_custom_call.1} parent=5 // pred_fallthru
        _
      %p461 = scmp.lt.s32.totalorder %s30, 2
      // Predicated region
      $region65: #{tpu_custom_call.1} parent=5 // pred_check
        %p462 = pneg %p461
      $region66: #{tpu_custom_call.1} parent=5 // pred_check_branch
        %464 = sbr.rel (%p462) target = $region68
      $region67: #{tpu_custom_call.1} parent=5 // pred_region
        // Predicated region
        $region69: #{tpu_custom_call.1} parent=67 // pred_check
          %p465 = pneg %p71
        $region70: #{tpu_custom_call.1} parent=67 // pred_check_branch
          %467 = sbr.rel (%p465) target = $region72
        $region71: #{tpu_custom_call.1} parent=67 // pred_region
          %s468 = sand.u32 %s61, 1
          %s469 = scalar_lea.sflag [#allocation3], %s468
          %s470 = sand.u32 %s61, 1
          %s471 = smul.addr %s470, 64
          %s472 = scalar_lea.vmem [#allocation6], %s471
          %s473 = smul.u32 4, %s30
          %s475 = ssub.s32 1024, 1024
          %476 = vsyncadd %s469, %s475
          %s477 = smul.addr %s473, 2
          %s478 = smul.addr %s477, 128
          %s479 = scalar_lea.hbm %s1, %s478
          %s480 = sshll.u32 %s472, 4
          %s481 = int_to_ptr.vmem [resolvable:$true] %s480
          %486 = dma.hbm_to_vmem [thread:$0]  %s479, 1024, %s481, %s469, 128, 128, 8
        $region72: #{tpu_custom_call.1} parent=67 // pred_fallthru
          _
      $region68: #{tpu_custom_call.1} parent=5 // pred_fallthru
        _
      %p487 = scmp.le.s32.totalorder 1, %s30
      %p488 = scmp.lt.s32.totalorder %s30, 3
      %p489 = pnand %p487, %p488
      %p490 = pneg %p489
      // Predicated region
      $region73: #{tpu_custom_call.1} parent=5 // pred_check
        _
      $region74: #{tpu_custom_call.1} parent=5 // pred_check_branch
        %492 = sbr.rel (%p489) target = $region76
      $region75: #{tpu_custom_call.1} parent=5 // pred_region
        %s493 = ssub.s32 %s30, 1
        // Predicated region
        $region77: #{tpu_custom_call.1} parent=75 // pred_check
          %p494 = pneg %p51
        $region78: #{tpu_custom_call.1} parent=75 // pred_check_branch
          %496 = sbr.rel (%p494) target = $region80
        $region79: #{tpu_custom_call.1} parent=75 // pred_region
          %497 = dma.done [#allocation5], 16
        $region80: #{tpu_custom_call.1} parent=75 // pred_fallthru
          _
        %s498 = sand.u32 %s64, 1
        %s499 = scalar_lea.sflag [#allocation3], %s498
        %s500 = sand.u32 %s64, 1
        %s501 = smul.addr %s500, 64
        %s502 = scalar_lea.vmem [#allocation6], %s501
        // Predicated region
        $region81: #{tpu_custom_call.1} parent=75 // pred_check
          %p503 = pneg %p77
        $region82: #{tpu_custom_call.1} parent=75 // pred_check_branch
          %505 = sbr.rel (%p503) target = $region84
        $region83: #{tpu_custom_call.1} parent=75 // pred_region
          %506 = dma.done %s499, 1024
        $region84: #{tpu_custom_call.1} parent=75 // pred_fallthru
          _
        // Predicated region
        $region85: #{tpu_custom_call.1} parent=75 // pred_check
          %p507 = pneg %p98
        $region86: #{tpu_custom_call.1} parent=75 // pred_check_branch
          %509 = sbr.rel (%p507) target = $region88
        $region87: #{tpu_custom_call.1} parent=75 // pred_region
          %510 = dma.done [#allocation8], 256
        $region88: #{tpu_custom_call.1} parent=75 // pred_fallthru
          _
        // Predicated region
        $region89: #{tpu_custom_call.1} parent=75 // pred_check
          %p511 = pneg %p119
        $region90: #{tpu_custom_call.1} parent=75 // pred_check_branch
          %513 = sbr.rel (%p511) target = $region92
        $region91: #{tpu_custom_call.1} parent=75 // pred_region
          %514 = dma.done [#allocation8], 256
        $region92: #{tpu_custom_call.1} parent=75 // pred_fallthru
          _
        // Predicated region
        $region93: #{tpu_custom_call.1} parent=75 // pred_check
          %p515 = pneg %p140
        $region94: #{tpu_custom_call.1} parent=75 // pred_check_branch
          %517 = sbr.rel (%p515) target = $region96
        $region95: #{tpu_custom_call.1} parent=75 // pred_region
          %518 = dma.done [#allocation11], 256
        $region96: #{tpu_custom_call.1} parent=75 // pred_fallthru
          _
        // Predicated region
        $region97: #{tpu_custom_call.1} parent=75 // pred_check
          %p519 = pneg %p182
        $region98: #{tpu_custom_call.1} parent=75 // pred_check_branch
          %521 = sbr.rel (%p519) target = $region100
        $region99: #{tpu_custom_call.1} parent=75 // pred_region
          %522 = dma.done [#allocation11], 128
        $region100: #{tpu_custom_call.1} parent=75 // pred_fallthru
          _
        // Predicated region
        $region101: #{tpu_custom_call.1} parent=75 // pred_check
          %p523 = pneg %p224
        $region102: #{tpu_custom_call.1} parent=75 // pred_check_branch
          %525 = sbr.rel (%p523) target = $region104
        $region103: #{tpu_custom_call.1} parent=75 // pred_region
          %526 = dma.done [#allocation14], 128
        $region104: #{tpu_custom_call.1} parent=75 // pred_fallthru
          _
        %527 = sfence
        %p528 = pneg %p51
        %p529 = pneg %p48
        %s530 = sand.u32 %s64, 1
        %s531 = scalar_lea.sflag [#allocation3], %s530
        %s532 = sand.u32 %s64, 1
        %s533 = smul.addr %s532, 64
        %s534 = scalar_lea.vmem [#allocation6], %s533
        %p535 = pneg %p77
        %p536 = pneg %p74
        %p537 = pneg %p98
        %p538 = pneg %p95
        %p539 = pneg %p119
        %p540 = pneg %p116
        %p541 = pneg %p140
        %p542 = pneg %p137
        %p543 = pneg %p161
        %p544 = pneg %p158
        %p545 = pneg %p182
        %p546 = pneg %p179
        %p547 = pneg %p203
        %p548 = pneg %p200
        %p549 = pneg %p224
        %p550 = pneg %p221
        %p551 = pneg %p245
        %p552 = pneg %p242
        %p553 = pneg %p266
        %p554 = pneg %p263
        %p555 = pneg %p287
        %p556 = pneg %p284
        %p557 = pneg %p308
        %p558 = pneg %p305
        %p559 = pneg %p329
        %p560 = pneg %p326
        %p561 = pneg %p355
        %p562 = pneg %p352
        %s563 = sand.u32 %s342, 1
        %s564 = scalar_lea.sflag [#allocation4], %s563
        %s565 = sand.u32 %s342, 1
        %s566 = smul.addr %s565, 64
        %s567 = scalar_lea.vmem [#allocation15], %s566
        %s568 = smul.u32 4, %s35
        %s569 = smul.u32 4, %s35
        %v570 = vld [vmem:[%s502] sm:$0xff]
        %v571 = vld [vmem:[%s502 + $0x8] sm:$0xff]
        %v572 = vld [vmem:[%s502 + $0x10] sm:$0xff]
        %v573 = vld [vmem:[%s502 + $0x18] sm:$0xff]
        %v574 = vld [vmem:[%s502 + $0x20] sm:$0xff]
        %v575 = vld [vmem:[%s502 + $0x28] sm:$0xff]
        %v576 = vld [vmem:[%s502 + $0x30] sm:$0xff]
        %v577 = vld [vmem:[%s502 + $0x38] sm:$0xff]
        %v578 = vld [vmem:[#allocation9] sm:$0xff]
        %v579 = vld [vmem:[#allocation9 + $0x8] sm:$0xff]
        %v580 = vld [vmem:[#allocation10] sm:$0xff]
        %v581 = vld [vmem:[#allocation10 + $0x8] sm:$0xff]
        %vm582 = vcmask 130048
        %v584 = vsel %vm582, %v570, 0
        %v587 = vsel %vm582, %v571, 0
        %v590 = vsel %vm582, %v572, 0
        %v593 = vsel %vm582, %v573, 0
        %v596 = vsel %vm582, %v574, 0
        %v599 = vsel %vm582, %v575, 0
        %v602 = vsel %vm582, %v576, 0
        %v605 = vsel %vm582, %v577, 0
        %607 = vmatprep.subr.mxu0 0.0
        %608 = vmatpush1.msra.mxu0 %v578
        %609 = vmatprep.subr.mxu0 0.0
        %610 = vmatpush1.msra.mxu0 %v579
        %611 = vmatprep.subr.mxu0 0.0
        %612 = vmatpush1.msra.mxu0 0.0
        %613 = vmatprep.subr.mxu0 0.0
        %614 = vmatpush1.msra.mxu0 0.0
        %615 = vmatprep.subr.mxu0 0.0
        %616 = vmatpush1.msra.mxu0 0.0
        %617 = vmatprep.subr.mxu0 0.0
        %618 = vmatpush1.msra.mxu0 0.0
        %619 = vmatprep.subr.mxu0 0.0
        %620 = vmatpush1.msra.mxu0 0.0
        %621 = vmatprep.subr.mxu0 0.0
        %622 = vmatpush1.msra.mxu0 0.0
        %623 = vmatprep.subr.mxu0 0.0
        %624 = vmatpush1.msra.mxu0 0.0
        %625 = vmatprep.subr.mxu0 0.0
        %626 = vmatpush1.msra.mxu0 0.0
        %627 = vmatprep.subr.mxu0 0.0
        %628 = vmatpush1.msra.mxu0 0.0
        %629 = vmatprep.subr.mxu0 0.0
        %630 = vmatpush1.msra.mxu0 0.0
        %631 = vmatprep.subr.mxu0 0.0
        %632 = vmatpush1.msra.mxu0 0.0
        %633 = vmatprep.subr.mxu0 0.0
        %634 = vmatpush1.msra.mxu0 0.0
        %635 = vmatprep.subr.mxu0 0.0
        %636 = vmatpush1.msra.mxu0 0.0
        %637 = vmatprep.subr.mxu0 0.0
        %638 = vmatpush1.msra.mxu0 0.0
        %639 = vmatprep.subr.mxu0 0.0
        %640 = vmatpush1.msra.mxu0 0.0
        %641 = vmatprep.subr.mxu0 0.0
        %642 = vmatpush1.msra.mxu0 0.0
        %643 = vmatprep.subr.mxu0 0.0
        %644 = vmatpush1.msra.mxu0 0.0
        %645 = vmatprep.subr.mxu0 0.0
        %646 = vmatpush1.msra.mxu0 0.0
        %647 = vmatprep.subr.mxu0 0.0
        %648 = vmatpush1.msra.mxu0 0.0
        %649 = vmatprep.subr.mxu0 0.0
        %650 = vmatpush1.msra.mxu0 0.0
        %651 = vmatprep.subr.mxu0 0.0
        %652 = vmatpush1.msra.mxu0 0.0
        %653 = vmatprep.subr.mxu0 0.0
        %654 = vmatpush1.msra.mxu0 0.0
        %655 = vmatprep.subr.mxu0 0.0
        %656 = vmatpush1.msra.mxu0 0.0
        %657 = vmatprep.subr.mxu0 0.0
        %658 = vmatpush1.msra.mxu0 0.0
        %659 = vmatprep.subr.mxu0 0.0
        %660 = vmatpush1.msra.mxu0 0.0
        %661 = vmatprep.subr.mxu0 0.0
        %662 = vmatpush1.msra.mxu0 0.0
        %663 = vmatprep.subr.mxu0 0.0
        %664 = vmatpush1.msra.mxu0 0.0
        %665 = vmatprep.subr.mxu0 0.0
        %666 = vmatpush1.msra.mxu0 0.0
        %667 = vmatprep.subr.mxu0 0.0
        %668 = vmatpush1.msra.mxu0 0.0
        %669 = vmatprep.subr.mxu0 0.0
        %670 = vmatpush1.msra.mxu0 0.0
        %671 = vmatprep.mubr.f32.mxu0 0.0
        %672 = vmatmul.mubr.f32.gmra.mrb[0].mxu0 %v584
        %v673 = vpop.f32.mrb[0].mxu0
        %v674 = vadd.f32 0.0, %v673
        %v675 = vpop.f32.mrb[0].mxu0
        %676 = vmatprep.mubr.f32.mxu0 0.0
        %677 = vmatmul.mubr.f32.gmra.mrb[0].mxu0 %v587
        %v678 = vpop.f32.mrb[0].mxu0
        %v679 = vadd.f32 0.0, %v678
        %v680 = vpop.f32.mrb[0].mxu0
        %681 = vmatprep.mubr.f32.mxu0 0.0
        %682 = vmatmul.mubr.f32.gmra.mrb[0].mxu0 %v590
        %v683 = vpop.f32.mrb[0].mxu0
        %v684 = vadd.f32 0.0, %v683
        %v685 = vpop.f32.mrb[0].mxu0
        %686 = vmatprep.mubr.f32.mxu0 0.0
        %687 = vmatmul.mubr.f32.gmra.mrb[0].mxu0 %v593
        %v688 = vpop.f32.mrb[0].mxu0
        %v689 = vadd.f32 0.0, %v688
        %v690 = vpop.f32.mrb[0].mxu0
        %691 = vmatprep.mubr.f32.mxu0 0.0
        %692 = vmatmul.mubr.f32.gmra.mrb[0].mxu0 %v596
        %v693 = vpop.f32.mrb[0].mxu0
        %v694 = vadd.f32 0.0, %v693
        %v695 = vpop.f32.mrb[0].mxu0
        %696 = vmatprep.mubr.f32.mxu0 0.0
        %697 = vmatmul.mubr.f32.gmra.mrb[0].mxu0 %v599
        %v698 = vpop.f32.mrb[0].mxu0
        %v699 = vadd.f32 0.0, %v698
        %v700 = vpop.f32.mrb[0].mxu0
        %701 = vmatprep.mubr.f32.mxu0 0.0
        %702 = vmatmul.mubr.f32.gmra.mrb[0].mxu0 %v602
        %v703 = vpop.f32.mrb[0].mxu0
        %v704 = vadd.f32 0.0, %v703
        %v705 = vpop.f32.mrb[0].mxu0
        %706 = vmatprep.mubr.f32.mxu0 0.0
        %707 = vmatmul.mubr.f32.gmra.mrb[0].mxu0 %v605
        %v708 = vpop.f32.mrb[0].mxu0
        %v709 = vadd.f32 0.0, %v708
        %v710 = vpop.f32.mrb[0].mxu0
        %711 = vdwg.mxu0
        %712 = vxpose.xlu0.b32.start [1/16] %v674, 128
        %713 = vxpose.xlu0.b32.cont [2/16] %v679, 128
        %714 = vxpose.xlu0.b32.cont [3/16] 0.0, 128
        %715 = vxpose.xlu0.b32.cont [4/16] 0.0, 128
        %716 = vxpose.xlu0.b32.cont [5/16] 0.0, 128
        %717 = vxpose.xlu0.b32.cont [6/16] 0.0, 128
        %718 = vxpose.xlu0.b32.cont [7/16] 0.0, 128
        %719 = vxpose.xlu0.b32.cont [8/16] 0.0, 128
        %720 = vxpose.xlu0.b32.cont [9/16] 0.0, 128
        %721 = vxpose.xlu0.b32.cont [10/16] 0.0, 128
        %722 = vxpose.xlu0.b32.cont [11/16] 0.0, 128
        %723 = vxpose.xlu0.b32.cont [12/16] 0.0, 128
        %724 = vxpose.xlu0.b32.cont [13/16] 0.0, 128
        %725 = vxpose.xlu0.b32.cont [14/16] 0.0, 128
        %726 = vxpose.xlu0.b32.cont [15/16] 0.0, 128
        %727 = vxpose.xlu0.b32.end [16/16] 0.0, 128
        %v728 = vpop.trf.xlu0
        %v729 = vpop.trf.xlu0
        %v730 = vpop.trf.xlu0
        %v731 = vpop.trf.xlu0
        %v732 = vpop.trf.xlu0
        %v733 = vpop.trf.xlu0
        %v734 = vpop.trf.xlu0
        %v735 = vpop.trf.xlu0
        %v736 = vpop.trf.xlu0
        %v737 = vpop.trf.xlu0
        %v738 = vpop.trf.xlu0
        %v739 = vpop.trf.xlu0
        %v740 = vpop.trf.xlu0
        %v741 = vpop.trf.xlu0
        %v742 = vpop.trf.xlu0
        %v743 = vpop.trf.xlu0
        %744 = vxpose.xlu0.b32.start [1/16] %v684, 128
        %745 = vxpose.xlu0.b32.cont [2/16] %v689, 128
        %746 = vxpose.xlu0.b32.cont [3/16] 0.0, 128
        %747 = vxpose.xlu0.b32.cont [4/16] 0.0, 128
        %748 = vxpose.xlu0.b32.cont [5/16] 0.0, 128
        %749 = vxpose.xlu0.b32.cont [6/16] 0.0, 128
        %750 = vxpose.xlu0.b32.cont [7/16] 0.0, 128
        %751 = vxpose.xlu0.b32.cont [8/16] 0.0, 128
        %752 = vxpose.xlu0.b32.cont [9/16] 0.0, 128
        %753 = vxpose.xlu0.b32.cont [10/16] 0.0, 128
        %754 = vxpose.xlu0.b32.cont [11/16] 0.0, 128
        %755 = vxpose.xlu0.b32.cont [12/16] 0.0, 128
        %756 = vxpose.xlu0.b32.cont [13/16] 0.0, 128
        %757 = vxpose.xlu0.b32.cont [14/16] 0.0, 128
        %758 = vxpose.xlu0.b32.cont [15/16] 0.0, 128
        %759 = vxpose.xlu0.b32.end [16/16] 0.0, 128
        %v760 = vpop.trf.xlu0
        %v761 = vpop.trf.xlu0
        %v762 = vpop.trf.xlu0
        %v763 = vpop.trf.xlu0
        %v764 = vpop.trf.xlu0
        %v765 = vpop.trf.xlu0
        %v766 = vpop.trf.xlu0
        %v767 = vpop.trf.xlu0
        %v768 = vpop.trf.xlu0
        %v769 = vpop.trf.xlu0
        %v770 = vpop.trf.xlu0
        %v771 = vpop.trf.xlu0
        %v772 = vpop.trf.xlu0
        %v773 = vpop.trf.xlu0
        %v774 = vpop.trf.xlu0
        %v775 = vpop.trf.xlu0
        %776 = vxpose.xlu0.b32.start [1/16] %v694, 128
        %777 = vxpose.xlu0.b32.cont [2/16] %v699, 128
        %778 = vxpose.xlu0.b32.cont [3/16] 0.0, 128
        %779 = vxpose.xlu0.b32.cont [4/16] 0.0, 128
        %780 = vxpose.xlu0.b32.cont [5/16] 0.0, 128
        %781 = vxpose.xlu0.b32.cont [6/16] 0.0, 128
        %782 = vxpose.xlu0.b32.cont [7/16] 0.0, 128
        %783 = vxpose.xlu0.b32.cont [8/16] 0.0, 128
        %784 = vxpose.xlu0.b32.cont [9/16] 0.0, 128
        %785 = vxpose.xlu0.b32.cont [10/16] 0.0, 128
        %786 = vxpose.xlu0.b32.cont [11/16] 0.0, 128
        %787 = vxpose.xlu0.b32.cont [12/16] 0.0, 128
        %788 = vxpose.xlu0.b32.cont [13/16] 0.0, 128
        %789 = vxpose.xlu0.b32.cont [14/16] 0.0, 128
        %790 = vxpose.xlu0.b32.cont [15/16] 0.0, 128
        %791 = vxpose.xlu0.b32.end [16/16] 0.0, 128
        %v792 = vpop.trf.xlu0
        %v793 = vpop.trf.xlu0
        %v794 = vpop.trf.xlu0
        %v795 = vpop.trf.xlu0
        %v796 = vpop.trf.xlu0
        %v797 = vpop.trf.xlu0
        %v798 = vpop.trf.xlu0
        %v799 = vpop.trf.xlu0
        %v800 = vpop.trf.xlu0
        %v801 = vpop.trf.xlu0
        %v802 = vpop.trf.xlu0
        %v803 = vpop.trf.xlu0
        %v804 = vpop.trf.xlu0
        %v805 = vpop.trf.xlu0
        %v806 = vpop.trf.xlu0
        %v807 = vpop.trf.xlu0
        %808 = vxpose.xlu0.b32.start [1/16] %v704, 128
        %809 = vxpose.xlu0.b32.cont [2/16] %v709, 128
        %810 = vxpose.xlu0.b32.cont [3/16] 0.0, 128
        %811 = vxpose.xlu0.b32.cont [4/16] 0.0, 128
        %812 = vxpose.xlu0.b32.cont [5/16] 0.0, 128
        %813 = vxpose.xlu0.b32.cont [6/16] 0.0, 128
        %814 = vxpose.xlu0.b32.cont [7/16] 0.0, 128
        %815 = vxpose.xlu0.b32.cont [8/16] 0.0, 128
        %816 = vxpose.xlu0.b32.cont [9/16] 0.0, 128
        %817 = vxpose.xlu0.b32.cont [10/16] 0.0, 128
        %818 = vxpose.xlu0.b32.cont [11/16] 0.0, 128
        %819 = vxpose.xlu0.b32.cont [12/16] 0.0, 128
        %820 = vxpose.xlu0.b32.cont [13/16] 0.0, 128
        %821 = vxpose.xlu0.b32.cont [14/16] 0.0, 128
        %822 = vxpose.xlu0.b32.cont [15/16] 0.0, 128
        %823 = vxpose.xlu0.b32.end [16/16] 0.0, 128
        %v824 = vpop.trf.xlu0
        %v825 = vpop.trf.xlu0
        %v826 = vpop.trf.xlu0
        %v827 = vpop.trf.xlu0
        %v828 = vpop.trf.xlu0
        %v829 = vpop.trf.xlu0
        %v830 = vpop.trf.xlu0
        %v831 = vpop.trf.xlu0
        %v832 = vpop.trf.xlu0
        %v833 = vpop.trf.xlu0
        %v834 = vpop.trf.xlu0
        %v835 = vpop.trf.xlu0
        %v836 = vpop.trf.xlu0
        %v837 = vpop.trf.xlu0
        %v838 = vpop.trf.xlu0
        %v839 = vpop.trf.xlu0
        %v841 = vsel %vm582, %v728, 0
        %v844 = vsel %vm582, %v729, 0
        %v847 = vsel %vm582, %v760, 0
        %v850 = vsel %vm582, %v761, 0
        %v853 = vsel %vm582, %v792, 0
        %v856 = vsel %vm582, %v793, 0
        %v859 = vsel %vm582, %v824, 0
        %v862 = vsel %vm582, %v825, 0
        %864 = vmatprep.subr.mxu0 0.0
        %865 = vmatpush1.msra.mxu0 %v580
        %866 = vmatprep.subr.mxu0 0.0
        %867 = vmatpush1.msra.mxu0 %v581
        %868 = vmatprep.subr.mxu0 0.0
        %869 = vmatpush1.msra.mxu0 0.0
        %870 = vmatprep.subr.mxu0 0.0
        %871 = vmatpush1.msra.mxu0 0.0
        %872 = vmatprep.subr.mxu0 0.0
        %873 = vmatpush1.msra.mxu0 0.0
        %874 = vmatprep.subr.mxu0 0.0
        %875 = vmatpush1.msra.mxu0 0.0
        %876 = vmatprep.subr.mxu0 0.0
        %877 = vmatpush1.msra.mxu0 0.0
        %878 = vmatprep.subr.mxu0 0.0
        %879 = vmatpush1.msra.mxu0 0.0
        %880 = vmatprep.subr.mxu0 0.0
        %881 = vmatpush1.msra.mxu0 0.0
        %882 = vmatprep.subr.mxu0 0.0
        %883 = vmatpush1.msra.mxu0 0.0
        %884 = vmatprep.subr.mxu0 0.0
        %885 = vmatpush1.msra.mxu0 0.0
        %886 = vmatprep.subr.mxu0 0.0
        %887 = vmatpush1.msra.mxu0 0.0
        %888 = vmatprep.subr.mxu0 0.0
        %889 = vmatpush1.msra.mxu0 0.0
        %890 = vmatprep.subr.mxu0 0.0
        %891 = vmatpush1.msra.mxu0 0.0
        %892 = vmatprep.subr.mxu0 0.0
        %893 = vmatpush1.msra.mxu0 0.0
        %894 = vmatprep.subr.mxu0 0.0
        %895 = vmatpush1.msra.mxu0 0.0
        %896 = vmatprep.subr.mxu0 0.0
        %897 = vmatpush1.msra.mxu0 0.0
        %898 = vmatprep.subr.mxu0 0.0
        %899 = vmatpush1.msra.mxu0 0.0
        %900 = vmatprep.subr.mxu0 0.0
        %901 = vmatpush1.msra.mxu0 0.0
        %902 = vmatprep.subr.mxu0 0.0
        %903 = vmatpush1.msra.mxu0 0.0
        %904 = vmatprep.subr.mxu0 0.0
        %905 = vmatpush1.msra.mxu0 0.0
        %906 = vmatprep.subr.mxu0 0.0
        %907 = vmatpush1.msra.mxu0 0.0
        %908 = vmatprep.subr.mxu0 0.0
        %909 = vmatpush1.msra.mxu0 0.0
        %910 = vmatprep.subr.mxu0 0.0
        %911 = vmatpush1.msra.mxu0 0.0
        %912 = vmatprep.subr.mxu0 0.0
        %913 = vmatpush1.msra.mxu0 0.0
        %914 = vmatprep.subr.mxu0 0.0
        %915 = vmatpush1.msra.mxu0 0.0
        %916 = vmatprep.subr.mxu0 0.0
        %917 = vmatpush1.msra.mxu0 0.0
        %918 = vmatprep.subr.mxu0 0.0
        %919 = vmatpush1.msra.mxu0 0.0
        %920 = vmatprep.subr.mxu0 0.0
        %921 = vmatpush1.msra.mxu0 0.0
        %922 = vmatprep.subr.mxu0 0.0
        %923 = vmatpush1.msra.mxu0 0.0
        %924 = vmatprep.subr.mxu0 0.0
        %925 = vmatpush1.msra.mxu0 0.0
        %926 = vmatprep.subr.mxu0 0.0
        %927 = vmatpush1.msra.mxu0 0.0
        %928 = vmatprep.mubr.f32.mxu0 0.0
        %929 = vmatmul.mubr.f32.gmra.mrb[0].mxu0 %v841
        %v930 = vpop.f32.mrb[0].mxu0
        %v931 = vadd.f32 0.0, %v930
        %v932 = vpop.f32.mrb[0].mxu0
        %933 = vmatprep.mubr.f32.mxu0 0.0
        %934 = vmatmul.mubr.f32.gmra.mrb[0].mxu0 %v844
        %v935 = vpop.f32.mrb[0].mxu0
        %v936 = vadd.f32 0.0, %v935
        %v937 = vpop.f32.mrb[0].mxu0
        %938 = vmatprep.mubr.f32.mxu0 0.0
        %939 = vmatmul.mubr.f32.gmra.mrb[0].mxu0 %v847
        %v940 = vpop.f32.mrb[0].mxu0
        %v941 = vadd.f32 0.0, %v940
        %v942 = vpop.f32.mrb[0].mxu0
        %943 = vmatprep.mubr.f32.mxu0 0.0
        %944 = vmatmul.mubr.f32.gmra.mrb[0].mxu0 %v850
        %v945 = vpop.f32.mrb[0].mxu0
        %v946 = vadd.f32 0.0, %v945
        %v947 = vpop.f32.mrb[0].mxu0
        %948 = vmatprep.mubr.f32.mxu0 0.0
        %949 = vmatmul.mubr.f32.gmra.mrb[0].mxu0 %v853
        %v950 = vpop.f32.mrb[0].mxu0
        %v951 = vadd.f32 0.0, %v950
        %v952 = vpop.f32.mrb[0].mxu0
        %953 = vmatprep.mubr.f32.mxu0 0.0
        %954 = vmatmul.mubr.f32.gmra.mrb[0].mxu0 %v856
        %v955 = vpop.f32.mrb[0].mxu0
        %v956 = vadd.f32 0.0, %v955
        %v957 = vpop.f32.mrb[0].mxu0
        %958 = vmatprep.mubr.f32.mxu0 0.0
        %959 = vmatmul.mubr.f32.gmra.mrb[0].mxu0 %v859
        %v960 = vpop.f32.mrb[0].mxu0
        %v961 = vadd.f32 0.0, %v960
        %v962 = vpop.f32.mrb[0].mxu0
        %963 = vmatprep.mubr.f32.mxu0 0.0
        %964 = vmatmul.mubr.f32.gmra.mrb[0].mxu0 %v862
        %v965 = vpop.f32.mrb[0].mxu0
        %v966 = vadd.f32 0.0, %v965
        %v967 = vpop.f32.mrb[0].mxu0
        %968 = vdwg.mxu0
        %969 = vxpose.xlu0.b32.start [1/16] %v931, 128
        %970 = vxpose.xlu0.b32.cont [2/16] %v936, 128
        %971 = vxpose.xlu0.b32.cont [3/16] 0.0, 128
        %972 = vxpose.xlu0.b32.cont [4/16] 0.0, 128
        %973 = vxpose.xlu0.b32.cont [5/16] 0.0, 128
        %974 = vxpose.xlu0.b32.cont [6/16] 0.0, 128
        %975 = vxpose.xlu0.b32.cont [7/16] 0.0, 128
        %976 = vxpose.xlu0.b32.cont [8/16] 0.0, 128
        %977 = vxpose.xlu0.b32.cont [9/16] 0.0, 128
        %978 = vxpose.xlu0.b32.cont [10/16] 0.0, 128
        %979 = vxpose.xlu0.b32.cont [11/16] 0.0, 128
        %980 = vxpose.xlu0.b32.cont [12/16] 0.0, 128
        %981 = vxpose.xlu0.b32.cont [13/16] 0.0, 128
        %982 = vxpose.xlu0.b32.cont [14/16] 0.0, 128
        %983 = vxpose.xlu0.b32.cont [15/16] 0.0, 128
        %984 = vxpose.xlu0.b32.end [16/16] 0.0, 128
        %v985 = vpop.trf.xlu0
        %v986 = vpop.trf.xlu0
        %v987 = vpop.trf.xlu0
        %v988 = vpop.trf.xlu0
        %v989 = vpop.trf.xlu0
        %v990 = vpop.trf.xlu0
        %v991 = vpop.trf.xlu0
        %v992 = vpop.trf.xlu0
        %v993 = vpop.trf.xlu0
        %v994 = vpop.trf.xlu0
        %v995 = vpop.trf.xlu0
        %v996 = vpop.trf.xlu0
        %v997 = vpop.trf.xlu0
        %v998 = vpop.trf.xlu0
        %v999 = vpop.trf.xlu0
        %v1000 = vpop.trf.xlu0
        %1001 = vxpose.xlu0.b32.start [1/16] %v941, 128
        %1002 = vxpose.xlu0.b32.cont [2/16] %v946, 128
        %1003 = vxpose.xlu0.b32.cont [3/16] 0.0, 128
        %1004 = vxpose.xlu0.b32.cont [4/16] 0.0, 128
        %1005 = vxpose.xlu0.b32.cont [5/16] 0.0, 128
        %1006 = vxpose.xlu0.b32.cont [6/16] 0.0, 128
        %1007 = vxpose.xlu0.b32.cont [7/16] 0.0, 128
        %1008 = vxpose.xlu0.b32.cont [8/16] 0.0, 128
        %1009 = vxpose.xlu0.b32.cont [9/16] 0.0, 128
        %1010 = vxpose.xlu0.b32.cont [10/16] 0.0, 128
        %1011 = vxpose.xlu0.b32.cont [11/16] 0.0, 128
        %1012 = vxpose.xlu0.b32.cont [12/16] 0.0, 128
        %1013 = vxpose.xlu0.b32.cont [13/16] 0.0, 128
        %1014 = vxpose.xlu0.b32.cont [14/16] 0.0, 128
        %1015 = vxpose.xlu0.b32.cont [15/16] 0.0, 128
        %1016 = vxpose.xlu0.b32.end [16/16] 0.0, 128
        %v1017 = vpop.trf.xlu0
        %v1018 = vpop.trf.xlu0
        %v1019 = vpop.trf.xlu0
        %v1020 = vpop.trf.xlu0
        %v1021 = vpop.trf.xlu0
        %v1022 = vpop.trf.xlu0
        %v1023 = vpop.trf.xlu0
        %v1024 = vpop.trf.xlu0
        %v1025 = vpop.trf.xlu0
        %v1026 = vpop.trf.xlu0
        %v1027 = vpop.trf.xlu0
        %v1028 = vpop.trf.xlu0
        %v1029 = vpop.trf.xlu0
        %v1030 = vpop.trf.xlu0
        %v1031 = vpop.trf.xlu0
        %v1032 = vpop.trf.xlu0
        %1033 = vxpose.xlu0.b32.start [1/16] %v951, 128
        %1034 = vxpose.xlu0.b32.cont [2/16] %v956, 128
        %1035 = vxpose.xlu0.b32.cont [3/16] 0.0, 128
        %1036 = vxpose.xlu0.b32.cont [4/16] 0.0, 128
        %1037 = vxpose.xlu0.b32.cont [5/16] 0.0, 128
        %1038 = vxpose.xlu0.b32.cont [6/16] 0.0, 128
        %1039 = vxpose.xlu0.b32.cont [7/16] 0.0, 128
        %1040 = vxpose.xlu0.b32.cont [8/16] 0.0, 128
        %1041 = vxpose.xlu0.b32.cont [9/16] 0.0, 128
        %1042 = vxpose.xlu0.b32.cont [10/16] 0.0, 128
        %1043 = vxpose.xlu0.b32.cont [11/16] 0.0, 128
        %1044 = vxpose.xlu0.b32.cont [12/16] 0.0, 128
        %1045 = vxpose.xlu0.b32.cont [13/16] 0.0, 128
        %1046 = vxpose.xlu0.b32.cont [14/16] 0.0, 128
        %1047 = vxpose.xlu0.b32.cont [15/16] 0.0, 128
        %1048 = vxpose.xlu0.b32.end [16/16] 0.0, 128
        %v1049 = vpop.trf.xlu0
        %v1050 = vpop.trf.xlu0
        %v1051 = vpop.trf.xlu0
        %v1052 = vpop.trf.xlu0
        %v1053 = vpop.trf.xlu0
        %v1054 = vpop.trf.xlu0
        %v1055 = vpop.trf.xlu0
        %v1056 = vpop.trf.xlu0
        %v1057 = vpop.trf.xlu0
        %v1058 = vpop.trf.xlu0
        %v1059 = vpop.trf.xlu0
        %v1060 = vpop.trf.xlu0
        %v1061 = vpop.trf.xlu0
        %v1062 = vpop.trf.xlu0
        %v1063 = vpop.trf.xlu0
        %v1064 = vpop.trf.xlu0
        %1065 = vxpose.xlu0.b32.start [1/16] %v961, 128
        %1066 = vxpose.xlu0.b32.cont [2/16] %v966, 128
        %1067 = vxpose.xlu0.b32.cont [3/16] 0.0, 128
        %1068 = vxpose.xlu0.b32.cont [4/16] 0.0, 128
        %1069 = vxpose.xlu0.b32.cont [5/16] 0.0, 128
        %1070 = vxpose.xlu0.b32.cont [6/16] 0.0, 128
        %1071 = vxpose.xlu0.b32.cont [7/16] 0.0, 128
        %1072 = vxpose.xlu0.b32.cont [8/16] 0.0, 128
        %1073 = vxpose.xlu0.b32.cont [9/16] 0.0, 128
        %1074 = vxpose.xlu0.b32.cont [10/16] 0.0, 128
        %1075 = vxpose.xlu0.b32.cont [11/16] 0.0, 128
        %1076 = vxpose.xlu0.b32.cont [12/16] 0.0, 128
        %1077 = vxpose.xlu0.b32.cont [13/16] 0.0, 128
        %1078 = vxpose.xlu0.b32.cont [14/16] 0.0, 128
        %1079 = vxpose.xlu0.b32.cont [15/16] 0.0, 128
        %1080 = vxpose.xlu0.b32.end [16/16] 0.0, 128
        %v1081 = vpop.trf.xlu0
        %v1082 = vpop.trf.xlu0
        %v1083 = vpop.trf.xlu0
        %v1084 = vpop.trf.xlu0
        %v1085 = vpop.trf.xlu0
        %v1086 = vpop.trf.xlu0
        %v1087 = vpop.trf.xlu0
        %v1088 = vpop.trf.xlu0
        %v1089 = vpop.trf.xlu0
        %v1090 = vpop.trf.xlu0
        %v1091 = vpop.trf.xlu0
        %v1092 = vpop.trf.xlu0
        %v1093 = vpop.trf.xlu0
        %v1094 = vpop.trf.xlu0
        %v1095 = vpop.trf.xlu0
        %v1096 = vpop.trf.xlu0
        %s1097 = sld [smem:[#allocation2]]
        %v1098 = vstv %s1097
        %v1099 = vsub.f32 %v985, %v1098
        %v1100 = vsub.f32 %v986, %v1098
        %v1101 = vsub.f32 %v1017, %v1098
        %v1102 = vsub.f32 %v1018, %v1098
        %v1103 = vsub.f32 %v1049, %v1098
        %v1104 = vsub.f32 %v1050, %v1098
        %v1105 = vsub.f32 %v1081, %v1098
        %v1106 = vsub.f32 %v1082, %v1098
        %v1107 = vmax.f32 %v1099, 0.0
        %v1108 = vmax.f32 %v1100, 0.0
        %v1109 = vmax.f32 %v1101, 0.0
        %v1110 = vmax.f32 %v1102, 0.0
        %v1111 = vmax.f32 %v1103, 0.0
        %v1112 = vmax.f32 %v1104, 0.0
        %v1113 = vmax.f32 %v1105, 0.0
        %v1114 = vmax.f32 %v1106, 0.0
        %v1115 = vadd.f32 %v985, %v1098
        %v1116 = vadd.f32 %v986, %v1098
        %v1117 = vadd.f32 %v1017, %v1098
        %v1118 = vadd.f32 %v1018, %v1098
        %v1119 = vadd.f32 %v1049, %v1098
        %v1120 = vadd.f32 %v1050, %v1098
        %v1121 = vadd.f32 %v1081, %v1098
        %v1122 = vadd.f32 %v1082, %v1098
        %v1123 = vmin.f32 %v1115, 0.0
        %v1124 = vmin.f32 %v1116, 0.0
        %v1125 = vmin.f32 %v1117, 0.0
        %v1126 = vmin.f32 %v1118, 0.0
        %v1127 = vmin.f32 %v1119, 0.0
        %v1128 = vmin.f32 %v1120, 0.0
        %v1129 = vmin.f32 %v1121, 0.0
        %v1130 = vmin.f32 %v1122, 0.0
        %v1131 = vadd.f32 %v1107, %v1123
        %v1132 = vadd.f32 %v1108, %v1124
        %v1133 = vadd.f32 %v1109, %v1125
        %v1134 = vadd.f32 %v1110, %v1126
        %v1135 = vadd.f32 %v1111, %v1127
        %v1136 = vadd.f32 %v1112, %v1128
        %v1137 = vadd.f32 %v1113, %v1129
        %v1138 = vadd.f32 %v1114, %v1130
        %v1139 = vlaneseq
        %v1140 = vshrl.u32 %v1139, 7
        %v1141 = vadd.s32 %v1140, 8
        %v1142 = vlaneseq
        %v1143 = vand.u32 %v1142, 127
        %vm1144 = vcmp.ge.s32.totalorder %v1140, 8
        %vm1145 = vcmp.ge.s32.totalorder %v1141, 8
        %vm1146 = vcmp.ge.s32.totalorder %v1143, 8
        %vm1147 = vmor %vm1144, %vm1146
        %vm1148 = vmor %vm1145, %vm1146
        %v1149 = vsel %vm1147, 1, 0
        %v1150 = vsel %vm1148, 1, 0
        %vm1151 = vcmp.eq.s32.totalorder %v1149, 1
        %vm1152 = vcmp.eq.s32.totalorder %v1150, 1
        %v1153 = vsel %vm1151, %v1131, %v985
        %v1154 = vsel %vm1152, %v1132, %v986
        %v1155 = vsel %vm1151, %v1133, %v1017
        %v1156 = vsel %vm1152, %v1134, %v1018
        %v1157 = vsel %vm1151, %v1135, %v1049
        %v1158 = vsel %vm1152, %v1136, %v1050
        %v1159 = vsel %vm1151, %v1137, %v1081
        %v1160 = vsel %vm1152, %v1138, %v1082
        %1161 = vst.msk [vmem:[%s567] sm:$0xff] %vm582, %v1153
        %1162 = vst.msk [vmem:[%s567 + $0x8] sm:$0xff] %vm582, %v1154
        %1163 = vst.msk [vmem:[%s567 + $0x10] sm:$0xff] %vm582, %v1155
        %1164 = vst.msk [vmem:[%s567 + $0x18] sm:$0xff] %vm582, %v1156
        %1165 = vst.msk [vmem:[%s567 + $0x20] sm:$0xff] %vm582, %v1157
        %1166 = vst.msk [vmem:[%s567 + $0x28] sm:$0xff] %vm582, %v1158
        %1167 = vst.msk [vmem:[%s567 + $0x30] sm:$0xff] %vm582, %v1159
        %1168 = vst.msk [vmem:[%s567 + $0x38] sm:$0xff] %vm582, %v1160
        %v1169 = vld [vmem:[%s567] sm:$0xff]
        %v1170 = vld [vmem:[%s567 + $0x10] sm:$0xff]
        %v1171 = vld [vmem:[%s567 + $0x20] sm:$0xff]
        %v1172 = vld [vmem:[%s567 + $0x30] sm:$0xff]
        %v1173 = vld [vmem:[%s7] sm:$0xff]
        %v1174 = vld [vmem:[#allocation13] sm:$0xff]
        %vm1175 = vcmask 64512
        %v1177 = vsel %vm1175, %v1169, 0
        %v1180 = vsel %vm1175, %v1170, 0
        %v1183 = vsel %vm1175, %v1171, 0
        %v1186 = vsel %vm1175, %v1172, 0
        %1188 = vmatprep.subr.mxu0 0.0
        %1189 = vmatpush1.msra.mxu0 %v1173
        %1190 = vmatprep.subr.mxu0 0.0
        %1191 = vmatpush1.msra.mxu0 0.0
        %1192 = vmatprep.subr.mxu0 0.0
        %1193 = vmatpush1.msra.mxu0 0.0
        %1194 = vmatprep.subr.mxu0 0.0
        %1195 = vmatpush1.msra.mxu0 0.0
        %1196 = vmatprep.subr.mxu0 0.0
        %1197 = vmatpush1.msra.mxu0 0.0
        %1198 = vmatprep.subr.mxu0 0.0
        %1199 = vmatpush1.msra.mxu0 0.0
        %1200 = vmatprep.subr.mxu0 0.0
        %1201 = vmatpush1.msra.mxu0 0.0
        %1202 = vmatprep.subr.mxu0 0.0
        %1203 = vmatpush1.msra.mxu0 0.0
        %1204 = vmatprep.subr.mxu0 0.0
        %1205 = vmatpush1.msra.mxu0 0.0
        %1206 = vmatprep.subr.mxu0 0.0
        %1207 = vmatpush1.msra.mxu0 0.0
        %1208 = vmatprep.subr.mxu0 0.0
        %1209 = vmatpush1.msra.mxu0 0.0
        %1210 = vmatprep.subr.mxu0 0.0
        %1211 = vmatpush1.msra.mxu0 0.0
        %1212 = vmatprep.subr.mxu0 0.0
        %1213 = vmatpush1.msra.mxu0 0.0
        %1214 = vmatprep.subr.mxu0 0.0
        %1215 = vmatpush1.msra.mxu0 0.0
        %1216 = vmatprep.subr.mxu0 0.0
        %1217 = vmatpush1.msra.mxu0 0.0
        %1218 = vmatprep.subr.mxu0 0.0
        %1219 = vmatpush1.msra.mxu0 0.0
        %1220 = vmatprep.subr.mxu0 0.0
        %1221 = vmatpush1.msra.mxu0 0.0
        %1222 = vmatprep.subr.mxu0 0.0
        %1223 = vmatpush1.msra.mxu0 0.0
        %1224 = vmatprep.subr.mxu0 0.0
        %1225 = vmatpush1.msra.mxu0 0.0
        %1226 = vmatprep.subr.mxu0 0.0
        %1227 = vmatpush1.msra.mxu0 0.0
        %1228 = vmatprep.subr.mxu0 0.0
        %1229 = vmatpush1.msra.mxu0 0.0
        %1230 = vmatprep.subr.mxu0 0.0
        %1231 = vmatpush1.msra.mxu0 0.0
        %1232 = vmatprep.subr.mxu0 0.0
        %1233 = vmatpush1.msra.mxu0 0.0
        %1234 = vmatprep.subr.mxu0 0.0
        %1235 = vmatpush1.msra.mxu0 0.0
        %1236 = vmatprep.subr.mxu0 0.0
        %1237 = vmatpush1.msra.mxu0 0.0
        %1238 = vmatprep.subr.mxu0 0.0
        %1239 = vmatpush1.msra.mxu0 0.0
        %1240 = vmatprep.subr.mxu0 0.0
        %1241 = vmatpush1.msra.mxu0 0.0
        %1242 = vmatprep.subr.mxu0 0.0
        %1243 = vmatpush1.msra.mxu0 0.0
        %1244 = vmatprep.subr.mxu0 0.0
        %1245 = vmatpush1.msra.mxu0 0.0
        %1246 = vmatprep.subr.mxu0 0.0
        %1247 = vmatpush1.msra.mxu0 0.0
        %1248 = vmatprep.subr.mxu0 0.0
        %1249 = vmatpush1.msra.mxu0 0.0
        %1250 = vmatprep.subr.mxu0 0.0
        %1251 = vmatpush1.msra.mxu0 0.0
        %1252 = vmatprep.mubr.f32.mxu0 0.0
        %1253 = vmatmul.mubr.f32.gmra.mrb[0].mxu0 %v1177
        %v1254 = vpop.f32.mrb[0].mxu0
        %v1255 = vadd.f32 0.0, %v1254
        %v1256 = vpop.f32.mrb[0].mxu0
        %1257 = vmatprep.mubr.f32.mxu0 0.0
        %1258 = vmatmul.mubr.f32.gmra.mrb[0].mxu0 %v1180
        %v1259 = vpop.f32.mrb[0].mxu0
        %v1260 = vadd.f32 0.0, %v1259
        %v1261 = vpop.f32.mrb[0].mxu0
        %1262 = vmatprep.mubr.f32.mxu0 0.0
        %1263 = vmatmul.mubr.f32.gmra.mrb[0].mxu0 %v1183
        %v1264 = vpop.f32.mrb[0].mxu0
        %v1265 = vadd.f32 0.0, %v1264
        %v1266 = vpop.f32.mrb[0].mxu0
        %1267 = vmatprep.mubr.f32.mxu0 0.0
        %1268 = vmatmul.mubr.f32.gmra.mrb[0].mxu0 %v1186
        %v1269 = vpop.f32.mrb[0].mxu0
        %v1270 = vadd.f32 0.0, %v1269
        %v1271 = vpop.f32.mrb[0].mxu0
        %1272 = vdwg.mxu0
        %1273 = vxpose.xlu0.b32.start [1/16] %v1255, 128
        %1274 = vxpose.xlu0.b32.cont [2/16] 0.0, 128
        %1275 = vxpose.xlu0.b32.cont [3/16] 0.0, 128
        %1276 = vxpose.xlu0.b32.cont [4/16] 0.0, 128
        %1277 = vxpose.xlu0.b32.cont [5/16] 0.0, 128
        %1278 = vxpose.xlu0.b32.cont [6/16] 0.0, 128
        %1279 = vxpose.xlu0.b32.cont [7/16] 0.0, 128
        %1280 = vxpose.xlu0.b32.cont [8/16] 0.0, 128
        %1281 = vxpose.xlu0.b32.cont [9/16] 0.0, 128
        %1282 = vxpose.xlu0.b32.cont [10/16] 0.0, 128
        %1283 = vxpose.xlu0.b32.cont [11/16] 0.0, 128
        %1284 = vxpose.xlu0.b32.cont [12/16] 0.0, 128
        %1285 = vxpose.xlu0.b32.cont [13/16] 0.0, 128
        %1286 = vxpose.xlu0.b32.cont [14/16] 0.0, 128
        %1287 = vxpose.xlu0.b32.cont [15/16] 0.0, 128
        %1288 = vxpose.xlu0.b32.end [16/16] 0.0, 128
        %v1289 = vpop.trf.xlu0
        %v1290 = vpop.trf.xlu0
        %v1291 = vpop.trf.xlu0
        %v1292 = vpop.trf.xlu0
        %v1293 = vpop.trf.xlu0
        %v1294 = vpop.trf.xlu0
        %v1295 = vpop.trf.xlu0
        %v1296 = vpop.trf.xlu0
        %v1297 = vpop.trf.xlu0
        %v1298 = vpop.trf.xlu0
        %v1299 = vpop.trf.xlu0
        %v1300 = vpop.trf.xlu0
        %v1301 = vpop.trf.xlu0
        %v1302 = vpop.trf.xlu0
        %v1303 = vpop.trf.xlu0
        %v1304 = vpop.trf.xlu0
        %1305 = vxpose.xlu0.b32.start [1/16] %v1260, 128
        %1306 = vxpose.xlu0.b32.cont [2/16] 0.0, 128
        %1307 = vxpose.xlu0.b32.cont [3/16] 0.0, 128
        %1308 = vxpose.xlu0.b32.cont [4/16] 0.0, 128
        %1309 = vxpose.xlu0.b32.cont [5/16] 0.0, 128
        %1310 = vxpose.xlu0.b32.cont [6/16] 0.0, 128
        %1311 = vxpose.xlu0.b32.cont [7/16] 0.0, 128
        %1312 = vxpose.xlu0.b32.cont [8/16] 0.0, 128
        %1313 = vxpose.xlu0.b32.cont [9/16] 0.0, 128
        %1314 = vxpose.xlu0.b32.cont [10/16] 0.0, 128
        %1315 = vxpose.xlu0.b32.cont [11/16] 0.0, 128
        %1316 = vxpose.xlu0.b32.cont [12/16] 0.0, 128
        %1317 = vxpose.xlu0.b32.cont [13/16] 0.0, 128
        %1318 = vxpose.xlu0.b32.cont [14/16] 0.0, 128
        %1319 = vxpose.xlu0.b32.cont [15/16] 0.0, 128
        %1320 = vxpose.xlu0.b32.end [16/16] 0.0, 128
        %v1321 = vpop.trf.xlu0
        %v1322 = vpop.trf.xlu0
        %v1323 = vpop.trf.xlu0
        %v1324 = vpop.trf.xlu0
        %v1325 = vpop.trf.xlu0
        %v1326 = vpop.trf.xlu0
        %v1327 = vpop.trf.xlu0
        %v1328 = vpop.trf.xlu0
        %v1329 = vpop.trf.xlu0
        %v1330 = vpop.trf.xlu0
        %v1331 = vpop.trf.xlu0
        %v1332 = vpop.trf.xlu0
        %v1333 = vpop.trf.xlu0
        %v1334 = vpop.trf.xlu0
        %v1335 = vpop.trf.xlu0
        %v1336 = vpop.trf.xlu0
        %1337 = vxpose.xlu0.b32.start [1/16] %v1265, 128
        %1338 = vxpose.xlu0.b32.cont [2/16] 0.0, 128
        %1339 = vxpose.xlu0.b32.cont [3/16] 0.0, 128
        %1340 = vxpose.xlu0.b32.cont [4/16] 0.0, 128
        %1341 = vxpose.xlu0.b32.cont [5/16] 0.0, 128
        %1342 = vxpose.xlu0.b32.cont [6/16] 0.0, 128
        %1343 = vxpose.xlu0.b32.cont [7/16] 0.0, 128
        %1344 = vxpose.xlu0.b32.cont [8/16] 0.0, 128
        %1345 = vxpose.xlu0.b32.cont [9/16] 0.0, 128
        %1346 = vxpose.xlu0.b32.cont [10/16] 0.0, 128
        %1347 = vxpose.xlu0.b32.cont [11/16] 0.0, 128
        %1348 = vxpose.xlu0.b32.cont [12/16] 0.0, 128
        %1349 = vxpose.xlu0.b32.cont [13/16] 0.0, 128
        %1350 = vxpose.xlu0.b32.cont [14/16] 0.0, 128
        %1351 = vxpose.xlu0.b32.cont [15/16] 0.0, 128
        %1352 = vxpose.xlu0.b32.end [16/16] 0.0, 128
        %v1353 = vpop.trf.xlu0
        %v1354 = vpop.trf.xlu0
        %v1355 = vpop.trf.xlu0
        %v1356 = vpop.trf.xlu0
        %v1357 = vpop.trf.xlu0
        %v1358 = vpop.trf.xlu0
        %v1359 = vpop.trf.xlu0
        %v1360 = vpop.trf.xlu0
        %v1361 = vpop.trf.xlu0
        %v1362 = vpop.trf.xlu0
        %v1363 = vpop.trf.xlu0
        %v1364 = vpop.trf.xlu0
        %v1365 = vpop.trf.xlu0
        %v1366 = vpop.trf.xlu0
        %v1367 = vpop.trf.xlu0
        %v1368 = vpop.trf.xlu0
        %1369 = vxpose.xlu0.b32.start [1/16] %v1270, 128
        %1370 = vxpose.xlu0.b32.cont [2/16] 0.0, 128
        %1371 = vxpose.xlu0.b32.cont [3/16] 0.0, 128
        %1372 = vxpose.xlu0.b32.cont [4/16] 0.0, 128
        %1373 = vxpose.xlu0.b32.cont [5/16] 0.0, 128
        %1374 = vxpose.xlu0.b32.cont [6/16] 0.0, 128
        %1375 = vxpose.xlu0.b32.cont [7/16] 0.0, 128
        %1376 = vxpose.xlu0.b32.cont [8/16] 0.0, 128
        %1377 = vxpose.xlu0.b32.cont [9/16] 0.0, 128
        %1378 = vxpose.xlu0.b32.cont [10/16] 0.0, 128
        %1379 = vxpose.xlu0.b32.cont [11/16] 0.0, 128
        %1380 = vxpose.xlu0.b32.cont [12/16] 0.0, 128
        %1381 = vxpose.xlu0.b32.cont [13/16] 0.0, 128
        %1382 = vxpose.xlu0.b32.cont [14/16] 0.0, 128
        %1383 = vxpose.xlu0.b32.cont [15/16] 0.0, 128
        %1384 = vxpose.xlu0.b32.end [16/16] 0.0, 128
        %v1385 = vpop.trf.xlu0
        %v1386 = vpop.trf.xlu0
        %v1387 = vpop.trf.xlu0
        %v1388 = vpop.trf.xlu0
        %v1389 = vpop.trf.xlu0
        %v1390 = vpop.trf.xlu0
        %v1391 = vpop.trf.xlu0
        %v1392 = vpop.trf.xlu0
        %v1393 = vpop.trf.xlu0
        %v1394 = vpop.trf.xlu0
        %v1395 = vpop.trf.xlu0
        %v1396 = vpop.trf.xlu0
        %v1397 = vpop.trf.xlu0
        %v1398 = vpop.trf.xlu0
        %v1399 = vpop.trf.xlu0
        %v1400 = vpop.trf.xlu0
        %v1402 = vsel %vm1175, %v1289, 0
        %v1405 = vsel %vm1175, %v1321, 0
        %v1408 = vsel %vm1175, %v1353, 0
        %v1411 = vsel %vm1175, %v1385, 0
        %1413 = vmatprep.subr.mxu0 0.0
        %1414 = vmatpush1.msra.mxu0 %v1174
        %1415 = vmatprep.subr.mxu0 0.0
        %1416 = vmatpush1.msra.mxu0 0.0
        %1417 = vmatprep.subr.mxu0 0.0
        %1418 = vmatpush1.msra.mxu0 0.0
        %1419 = vmatprep.subr.mxu0 0.0
        %1420 = vmatpush1.msra.mxu0 0.0
        %1421 = vmatprep.subr.mxu0 0.0
        %1422 = vmatpush1.msra.mxu0 0.0
        %1423 = vmatprep.subr.mxu0 0.0
        %1424 = vmatpush1.msra.mxu0 0.0
        %1425 = vmatprep.subr.mxu0 0.0
        %1426 = vmatpush1.msra.mxu0 0.0
        %1427 = vmatprep.subr.mxu0 0.0
        %1428 = vmatpush1.msra.mxu0 0.0
        %1429 = vmatprep.subr.mxu0 0.0
        %1430 = vmatpush1.msra.mxu0 0.0
        %1431 = vmatprep.subr.mxu0 0.0
        %1432 = vmatpush1.msra.mxu0 0.0
        %1433 = vmatprep.subr.mxu0 0.0
        %1434 = vmatpush1.msra.mxu0 0.0
        %1435 = vmatprep.subr.mxu0 0.0
        %1436 = vmatpush1.msra.mxu0 0.0
        %1437 = vmatprep.subr.mxu0 0.0
        %1438 = vmatpush1.msra.mxu0 0.0
        %1439 = vmatprep.subr.mxu0 0.0
        %1440 = vmatpush1.msra.mxu0 0.0
        %1441 = vmatprep.subr.mxu0 0.0
        %1442 = vmatpush1.msra.mxu0 0.0
        %1443 = vmatprep.subr.mxu0 0.0
        %1444 = vmatpush1.msra.mxu0 0.0
        %1445 = vmatprep.subr.mxu0 0.0
        %1446 = vmatpush1.msra.mxu0 0.0
        %1447 = vmatprep.subr.mxu0 0.0
        %1448 = vmatpush1.msra.mxu0 0.0
        %1449 = vmatprep.subr.mxu0 0.0
        %1450 = vmatpush1.msra.mxu0 0.0
        %1451 = vmatprep.subr.mxu0 0.0
        %1452 = vmatpush1.msra.mxu0 0.0
        %1453 = vmatprep.subr.mxu0 0.0
        %1454 = vmatpush1.msra.mxu0 0.0
        %1455 = vmatprep.subr.mxu0 0.0
        %1456 = vmatpush1.msra.mxu0 0.0
        %1457 = vmatprep.subr.mxu0 0.0
        %1458 = vmatpush1.msra.mxu0 0.0
        %1459 = vmatprep.subr.mxu0 0.0
        %1460 = vmatpush1.msra.mxu0 0.0
        %1461 = vmatprep.subr.mxu0 0.0
        %1462 = vmatpush1.msra.mxu0 0.0
        %1463 = vmatprep.subr.mxu0 0.0
        %1464 = vmatpush1.msra.mxu0 0.0
        %1465 = vmatprep.subr.mxu0 0.0
        %1466 = vmatpush1.msra.mxu0 0.0
        %1467 = vmatprep.subr.mxu0 0.0
        %1468 = vmatpush1.msra.mxu0 0.0
        %1469 = vmatprep.subr.mxu0 0.0
        %1470 = vmatpush1.msra.mxu0 0.0
        %1471 = vmatprep.subr.mxu0 0.0
        %1472 = vmatpush1.msra.mxu0 0.0
        %1473 = vmatprep.subr.mxu0 0.0
        %1474 = vmatpush1.msra.mxu0 0.0
        %1475 = vmatprep.subr.mxu0 0.0
        %1476 = vmatpush1.msra.mxu0 0.0
        %1477 = vmatprep.mubr.f32.mxu0 0.0
        %1478 = vmatmul.mubr.f32.gmra.mrb[0].mxu0 %v1402
        %v1479 = vpop.f32.mrb[0].mxu0
        %v1480 = vadd.f32 0.0, %v1479
        %v1481 = vpop.f32.mrb[0].mxu0
        %1482 = vmatprep.mubr.f32.mxu0 0.0
        %1483 = vmatmul.mubr.f32.gmra.mrb[0].mxu0 %v1405
        %v1484 = vpop.f32.mrb[0].mxu0
        %v1485 = vadd.f32 0.0, %v1484
        %v1486 = vpop.f32.mrb[0].mxu0
        %1487 = vmatprep.mubr.f32.mxu0 0.0
        %1488 = vmatmul.mubr.f32.gmra.mrb[0].mxu0 %v1408
        %v1489 = vpop.f32.mrb[0].mxu0
        %v1490 = vadd.f32 0.0, %v1489
        %v1491 = vpop.f32.mrb[0].mxu0
        %1492 = vmatprep.mubr.f32.mxu0 0.0
        %1493 = vmatmul.mubr.f32.gmra.mrb[0].mxu0 %v1411
        %v1494 = vpop.f32.mrb[0].mxu0
        %v1495 = vadd.f32 0.0, %v1494
        %v1496 = vpop.f32.mrb[0].mxu0
        %1497 = vdwg.mxu0
        %1498 = vxpose.xlu0.b32.start [1/16] %v1480, 128
        %1499 = vxpose.xlu0.b32.cont [2/16] 0.0, 128
        %1500 = vxpose.xlu0.b32.cont [3/16] 0.0, 128
        %1501 = vxpose.xlu0.b32.cont [4/16] 0.0, 128
        %1502 = vxpose.xlu0.b32.cont [5/16] 0.0, 128
        %1503 = vxpose.xlu0.b32.cont [6/16] 0.0, 128
        %1504 = vxpose.xlu0.b32.cont [7/16] 0.0, 128
        %1505 = vxpose.xlu0.b32.cont [8/16] 0.0, 128
        %1506 = vxpose.xlu0.b32.cont [9/16] 0.0, 128
        %1507 = vxpose.xlu0.b32.cont [10/16] 0.0, 128
        %1508 = vxpose.xlu0.b32.cont [11/16] 0.0, 128
        %1509 = vxpose.xlu0.b32.cont [12/16] 0.0, 128
        %1510 = vxpose.xlu0.b32.cont [13/16] 0.0, 128
        %1511 = vxpose.xlu0.b32.cont [14/16] 0.0, 128
        %1512 = vxpose.xlu0.b32.cont [15/16] 0.0, 128
        %1513 = vxpose.xlu0.b32.end [16/16] 0.0, 128
        %v1514 = vpop.trf.xlu0
        %v1515 = vpop.trf.xlu0
        %v1516 = vpop.trf.xlu0
        %v1517 = vpop.trf.xlu0
        %v1518 = vpop.trf.xlu0
        %v1519 = vpop.trf.xlu0
        %v1520 = vpop.trf.xlu0
        %v1521 = vpop.trf.xlu0
        %v1522 = vpop.trf.xlu0
        %v1523 = vpop.trf.xlu0
        %v1524 = vpop.trf.xlu0
        %v1525 = vpop.trf.xlu0
        %v1526 = vpop.trf.xlu0
        %v1527 = vpop.trf.xlu0
        %v1528 = vpop.trf.xlu0
        %v1529 = vpop.trf.xlu0
        %1530 = vxpose.xlu0.b32.start [1/16] %v1485, 128
        %1531 = vxpose.xlu0.b32.cont [2/16] 0.0, 128
        %1532 = vxpose.xlu0.b32.cont [3/16] 0.0, 128
        %1533 = vxpose.xlu0.b32.cont [4/16] 0.0, 128
        %1534 = vxpose.xlu0.b32.cont [5/16] 0.0, 128
        %1535 = vxpose.xlu0.b32.cont [6/16] 0.0, 128
        %1536 = vxpose.xlu0.b32.cont [7/16] 0.0, 128
        %1537 = vxpose.xlu0.b32.cont [8/16] 0.0, 128
        %1538 = vxpose.xlu0.b32.cont [9/16] 0.0, 128
        %1539 = vxpose.xlu0.b32.cont [10/16] 0.0, 128
        %1540 = vxpose.xlu0.b32.cont [11/16] 0.0, 128
        %1541 = vxpose.xlu0.b32.cont [12/16] 0.0, 128
        %1542 = vxpose.xlu0.b32.cont [13/16] 0.0, 128
        %1543 = vxpose.xlu0.b32.cont [14/16] 0.0, 128
        %1544 = vxpose.xlu0.b32.cont [15/16] 0.0, 128
        %1545 = vxpose.xlu0.b32.end [16/16] 0.0, 128
        %v1546 = vpop.trf.xlu0
        %v1547 = vpop.trf.xlu0
        %v1548 = vpop.trf.xlu0
        %v1549 = vpop.trf.xlu0
        %v1550 = vpop.trf.xlu0
        %v1551 = vpop.trf.xlu0
        %v1552 = vpop.trf.xlu0
        %v1553 = vpop.trf.xlu0
        %v1554 = vpop.trf.xlu0
        %v1555 = vpop.trf.xlu0
        %v1556 = vpop.trf.xlu0
        %v1557 = vpop.trf.xlu0
        %v1558 = vpop.trf.xlu0
        %v1559 = vpop.trf.xlu0
        %v1560 = vpop.trf.xlu0
        %v1561 = vpop.trf.xlu0
        %1562 = vxpose.xlu0.b32.start [1/16] %v1490, 128
        %1563 = vxpose.xlu0.b32.cont [2/16] 0.0, 128
        %1564 = vxpose.xlu0.b32.cont [3/16] 0.0, 128
        %1565 = vxpose.xlu0.b32.cont [4/16] 0.0, 128
        %1566 = vxpose.xlu0.b32.cont [5/16] 0.0, 128
        %1567 = vxpose.xlu0.b32.cont [6/16] 0.0, 128
        %1568 = vxpose.xlu0.b32.cont [7/16] 0.0, 128
        %1569 = vxpose.xlu0.b32.cont [8/16] 0.0, 128
        %1570 = vxpose.xlu0.b32.cont [9/16] 0.0, 128
        %1571 = vxpose.xlu0.b32.cont [10/16] 0.0, 128
        %1572 = vxpose.xlu0.b32.cont [11/16] 0.0, 128
        %1573 = vxpose.xlu0.b32.cont [12/16] 0.0, 128
        %1574 = vxpose.xlu0.b32.cont [13/16] 0.0, 128
        %1575 = vxpose.xlu0.b32.cont [14/16] 0.0, 128
        %1576 = vxpose.xlu0.b32.cont [15/16] 0.0, 128
        %1577 = vxpose.xlu0.b32.end [16/16] 0.0, 128
        %v1578 = vpop.trf.xlu0
        %v1579 = vpop.trf.xlu0
        %v1580 = vpop.trf.xlu0
        %v1581 = vpop.trf.xlu0
        %v1582 = vpop.trf.xlu0
        %v1583 = vpop.trf.xlu0
        %v1584 = vpop.trf.xlu0
        %v1585 = vpop.trf.xlu0
        %v1586 = vpop.trf.xlu0
        %v1587 = vpop.trf.xlu0
        %v1588 = vpop.trf.xlu0
        %v1589 = vpop.trf.xlu0
        %v1590 = vpop.trf.xlu0
        %v1591 = vpop.trf.xlu0
        %v1592 = vpop.trf.xlu0
        %v1593 = vpop.trf.xlu0
        %1594 = vxpose.xlu0.b32.start [1/16] %v1495, 128
        %1595 = vxpose.xlu0.b32.cont [2/16] 0.0, 128
        %1596 = vxpose.xlu0.b32.cont [3/16] 0.0, 128
        %1597 = vxpose.xlu0.b32.cont [4/16] 0.0, 128
        %1598 = vxpose.xlu0.b32.cont [5/16] 0.0, 128
        %1599 = vxpose.xlu0.b32.cont [6/16] 0.0, 128
        %1600 = vxpose.xlu0.b32.cont [7/16] 0.0, 128
        %1601 = vxpose.xlu0.b32.cont [8/16] 0.0, 128
        %1602 = vxpose.xlu0.b32.cont [9/16] 0.0, 128
        %1603 = vxpose.xlu0.b32.cont [10/16] 0.0, 128
        %1604 = vxpose.xlu0.b32.cont [11/16] 0.0, 128
        %1605 = vxpose.xlu0.b32.cont [12/16] 0.0, 128
        %1606 = vxpose.xlu0.b32.cont [13/16] 0.0, 128
        %1607 = vxpose.xlu0.b32.cont [14/16] 0.0, 128
        %1608 = vxpose.xlu0.b32.cont [15/16] 0.0, 128
        %1609 = vxpose.xlu0.b32.end [16/16] 0.0, 128
        %v1610 = vpop.trf.xlu0
        %v1611 = vpop.trf.xlu0
        %v1612 = vpop.trf.xlu0
        %v1613 = vpop.trf.xlu0
        %v1614 = vpop.trf.xlu0
        %v1615 = vpop.trf.xlu0
        %v1616 = vpop.trf.xlu0
        %v1617 = vpop.trf.xlu0
        %v1618 = vpop.trf.xlu0
        %v1619 = vpop.trf.xlu0
        %v1620 = vpop.trf.xlu0
        %v1621 = vpop.trf.xlu0
        %v1622 = vpop.trf.xlu0
        %v1623 = vpop.trf.xlu0
        %v1624 = vpop.trf.xlu0
        %v1625 = vpop.trf.xlu0
        %s1626 = sld [smem:[#allocation2 + $0x1]]
        %v1627 = vstv %s1626
        %v1628 = vsub.f32 %v1514, %v1627
        %v1629 = vsub.f32 %v1546, %v1627
        %v1630 = vsub.f32 %v1578, %v1627
        %v1631 = vsub.f32 %v1610, %v1627
        %v1632 = vmax.f32 %v1628, 0.0
        %v1633 = vmax.f32 %v1629, 0.0
        %v1634 = vmax.f32 %v1630, 0.0
        %v1635 = vmax.f32 %v1631, 0.0
        %v1636 = vadd.f32 %v1514, %v1627
        %v1637 = vadd.f32 %v1546, %v1627
        %v1638 = vadd.f32 %v1578, %v1627
        %v1639 = vadd.f32 %v1610, %v1627
        %v1640 = vmin.f32 %v1636, 0.0
        %v1641 = vmin.f32 %v1637, 0.0
        %v1642 = vmin.f32 %v1638, 0.0
        %v1643 = vmin.f32 %v1639, 0.0
        %v1644 = vadd.f32 %v1632, %v1640
        %v1645 = vadd.f32 %v1633, %v1641
        %v1646 = vadd.f32 %v1634, %v1642
        %v1647 = vadd.f32 %v1635, %v1643
        %vm1648 = vcmp.ge.s32.totalorder %v1140, 4
        %vm1649 = vcmp.ge.s32.totalorder %v1143, 4
        %vm1650 = vmor %vm1648, %vm1649
        %v1651 = vsel %vm1650, 1, 0
        %vm1652 = vcmp.eq.s32.totalorder %v1651, 1
        %v1653 = vsel %vm1652, %v1644, %v1514
        %v1654 = vsel %vm1652, %v1645, %v1546
        %v1655 = vsel %vm1652, %v1646, %v1578
        %v1656 = vsel %vm1652, %v1647, %v1610
        %1657 = vst.msk [vmem:[%s567] sm:$0xff] %vm1175, %v1653
        %1658 = vst.msk [vmem:[%s567 + $0x10] sm:$0xff] %vm1175, %v1654
        %1659 = vst.msk [vmem:[%s567 + $0x20] sm:$0xff] %vm1175, %v1655
        %1660 = vst.msk [vmem:[%s567 + $0x30] sm:$0xff] %vm1175, %v1656
        %v1661 = vld [vmem:[%s567] sm:$0xf]
        %v1662 = vld [vmem:[%s567 + $0x10] sm:$0xf]
        %v1663 = vld [vmem:[%s567 + $0x20] sm:$0xf]
        %v1664 = vld [vmem:[%s567 + $0x30] sm:$0xf]
        %v1665 = vld [vmem:[%s10] sm:$0xf]
        %v1666 = vld [vmem:[%s11] sm:$0xf]
        %vm1667 = vcmask 31744
        %v1669 = vsel %vm1667, %v1665, 0
        %vm1671 = vcmask 1043456
        %v1673 = vsel %vm1671, %v1661, 0
        %1675 = vmatprep.subr.mxu0 0.0
        %1676 = vmatpush1.msra.mxu0 %v1673
        %1677 = vmatprep.subr.mxu0 0.0
        %1678 = vmatpush1.msra.mxu0 0.0
        %1679 = vmatprep.subr.mxu0 0.0
        %1680 = vmatpush1.msra.mxu0 0.0
        %1681 = vmatprep.subr.mxu0 0.0
        %1682 = vmatpush1.msra.mxu0 0.0
        %1683 = vmatprep.subr.mxu0 0.0
        %1684 = vmatpush1.msra.mxu0 0.0
        %1685 = vmatprep.subr.mxu0 0.0
        %1686 = vmatpush1.msra.mxu0 0.0
        %1687 = vmatprep.subr.mxu0 0.0
        %1688 = vmatpush1.msra.mxu0 0.0
        %1689 = vmatprep.subr.mxu0 0.0
        %1690 = vmatpush1.msra.mxu0 0.0
        %1691 = vmatprep.subr.mxu0 0.0
        %1692 = vmatpush1.msra.mxu0 0.0
        %1693 = vmatprep.subr.mxu0 0.0
        %1694 = vmatpush1.msra.mxu0 0.0
        %1695 = vmatprep.subr.mxu0 0.0
        %1696 = vmatpush1.msra.mxu0 0.0
        %1697 = vmatprep.subr.mxu0 0.0
        %1698 = vmatpush1.msra.mxu0 0.0
        %1699 = vmatprep.subr.mxu0 0.0
        %1700 = vmatpush1.msra.mxu0 0.0
        %1701 = vmatprep.subr.mxu0 0.0
        %1702 = vmatpush1.msra.mxu0 0.0
        %1703 = vmatprep.subr.mxu0 0.0
        %1704 = vmatpush1.msra.mxu0 0.0
        %1705 = vmatprep.subr.mxu0 0.0
        %1706 = vmatpush1.msra.mxu0 0.0
        %1707 = vmatprep.subr.mxu0 0.0
        %1708 = vmatpush1.msra.mxu0 0.0
        %1709 = vmatprep.subr.mxu0 0.0
        %1710 = vmatpush1.msra.mxu0 0.0
        %1711 = vmatprep.subr.mxu0 0.0
        %1712 = vmatpush1.msra.mxu0 0.0
        %1713 = vmatprep.subr.mxu0 0.0
        %1714 = vmatpush1.msra.mxu0 0.0
        %1715 = vmatprep.subr.mxu0 0.0
        %1716 = vmatpush1.msra.mxu0 0.0
        %1717 = vmatprep.subr.mxu0 0.0
        %1718 = vmatpush1.msra.mxu0 0.0
        %1719 = vmatprep.subr.mxu0 0.0
        %1720 = vmatpush1.msra.mxu0 0.0
        %1721 = vmatprep.subr.mxu0 0.0
        %1722 = vmatpush1.msra.mxu0 0.0
        %1723 = vmatprep.subr.mxu0 0.0
        %1724 = vmatpush1.msra.mxu0 0.0
        %1725 = vmatprep.subr.mxu0 0.0
        %1726 = vmatpush1.msra.mxu0 0.0
        %1727 = vmatprep.subr.mxu0 0.0
        %1728 = vmatpush1.msra.mxu0 0.0
        %1729 = vmatprep.subr.mxu0 0.0
        %1730 = vmatpush1.msra.mxu0 0.0
        %1731 = vmatprep.subr.mxu0 0.0
        %1732 = vmatpush1.msra.mxu0 0.0
        %1733 = vmatprep.subr.mxu0 0.0
        %1734 = vmatpush1.msra.mxu0 0.0
        %1735 = vmatprep.subr.mxu0 0.0
        %1736 = vmatpush1.msra.mxu0 0.0
        %1737 = vmatprep.subr.mxu0 0.0
        %1738 = vmatpush1.msra.mxu0 0.0
        %1739 = vmatprep.mubr.f32.mxu0 0.0
        %1740 = vmatmul.mubr.f32.gmra.mrb[0].mxu0 %v1669
        %v1741 = vpop.f32.mrb[0].mxu0
        %v1742 = vadd.f32 0.0, %v1741
        %v1743 = vpop.f32.mrb[0].mxu0
        %1744 = vdwg.mxu0
        %v1746 = vsel %vm1671, %v1662, 0
        %1748 = vmatprep.subr.mxu0 0.0
        %1749 = vmatpush1.msra.mxu0 %v1746
        %1750 = vmatprep.subr.mxu0 0.0
        %1751 = vmatpush1.msra.mxu0 0.0
        %1752 = vmatprep.subr.mxu0 0.0
        %1753 = vmatpush1.msra.mxu0 0.0
        %1754 = vmatprep.subr.mxu0 0.0
        %1755 = vmatpush1.msra.mxu0 0.0
        %1756 = vmatprep.subr.mxu0 0.0
        %1757 = vmatpush1.msra.mxu0 0.0
        %1758 = vmatprep.subr.mxu0 0.0
        %1759 = vmatpush1.msra.mxu0 0.0
        %1760 = vmatprep.subr.mxu0 0.0
        %1761 = vmatpush1.msra.mxu0 0.0
        %1762 = vmatprep.subr.mxu0 0.0
        %1763 = vmatpush1.msra.mxu0 0.0
        %1764 = vmatprep.subr.mxu0 0.0
        %1765 = vmatpush1.msra.mxu0 0.0
        %1766 = vmatprep.subr.mxu0 0.0
        %1767 = vmatpush1.msra.mxu0 0.0
        %1768 = vmatprep.subr.mxu0 0.0
        %1769 = vmatpush1.msra.mxu0 0.0
        %1770 = vmatprep.subr.mxu0 0.0
        %1771 = vmatpush1.msra.mxu0 0.0
        %1772 = vmatprep.subr.mxu0 0.0
        %1773 = vmatpush1.msra.mxu0 0.0
        %1774 = vmatprep.subr.mxu0 0.0
        %1775 = vmatpush1.msra.mxu0 0.0
        %1776 = vmatprep.subr.mxu0 0.0
        %1777 = vmatpush1.msra.mxu0 0.0
        %1778 = vmatprep.subr.mxu0 0.0
        %1779 = vmatpush1.msra.mxu0 0.0
        %1780 = vmatprep.subr.mxu0 0.0
        %1781 = vmatpush1.msra.mxu0 0.0
        %1782 = vmatprep.subr.mxu0 0.0
        %1783 = vmatpush1.msra.mxu0 0.0
        %1784 = vmatprep.subr.mxu0 0.0
        %1785 = vmatpush1.msra.mxu0 0.0
        %1786 = vmatprep.subr.mxu0 0.0
        %1787 = vmatpush1.msra.mxu0 0.0
        %1788 = vmatprep.subr.mxu0 0.0
        %1789 = vmatpush1.msra.mxu0 0.0
        %1790 = vmatprep.subr.mxu0 0.0
        %1791 = vmatpush1.msra.mxu0 0.0
        %1792 = vmatprep.subr.mxu0 0.0
        %1793 = vmatpush1.msra.mxu0 0.0
        %1794 = vmatprep.subr.mxu0 0.0
        %1795 = vmatpush1.msra.mxu0 0.0
        %1796 = vmatprep.subr.mxu0 0.0
        %1797 = vmatpush1.msra.mxu0 0.0
        %1798 = vmatprep.subr.mxu0 0.0
        %1799 = vmatpush1.msra.mxu0 0.0
        %1800 = vmatprep.subr.mxu0 0.0
        %1801 = vmatpush1.msra.mxu0 0.0
        %1802 = vmatprep.subr.mxu0 0.0
        %1803 = vmatpush1.msra.mxu0 0.0
        %1804 = vmatprep.subr.mxu0 0.0
        %1805 = vmatpush1.msra.mxu0 0.0
        %1806 = vmatprep.subr.mxu0 0.0
        %1807 = vmatpush1.msra.mxu0 0.0
        %1808 = vmatprep.subr.mxu0 0.0
        %1809 = vmatpush1.msra.mxu0 0.0
        %1810 = vmatprep.subr.mxu0 0.0
        %1811 = vmatpush1.msra.mxu0 0.0
        %1812 = vmatprep.mubr.f32.mxu0 0.0
        %1813 = vmatmul.mubr.f32.gmra.mrb[0].mxu0 %v1669
        %v1814 = vpop.f32.mrb[0].mxu0
        %v1815 = vadd.f32 0.0, %v1814
        %v1816 = vpop.f32.mrb[0].mxu0
        %1817 = vdwg.mxu0
        %v1819 = vsel %vm1671, %v1663, 0
        %1821 = vmatprep.subr.mxu0 0.0
        %1822 = vmatpush1.msra.mxu0 %v1819
        %1823 = vmatprep.subr.mxu0 0.0
        %1824 = vmatpush1.msra.mxu0 0.0
        %1825 = vmatprep.subr.mxu0 0.0
        %1826 = vmatpush1.msra.mxu0 0.0
        %1827 = vmatprep.subr.mxu0 0.0
        %1828 = vmatpush1.msra.mxu0 0.0
        %1829 = vmatprep.subr.mxu0 0.0
        %1830 = vmatpush1.msra.mxu0 0.0
        %1831 = vmatprep.subr.mxu0 0.0
        %1832 = vmatpush1.msra.mxu0 0.0
        %1833 = vmatprep.subr.mxu0 0.0
        %1834 = vmatpush1.msra.mxu0 0.0
        %1835 = vmatprep.subr.mxu0 0.0
        %1836 = vmatpush1.msra.mxu0 0.0
        %1837 = vmatprep.subr.mxu0 0.0
        %1838 = vmatpush1.msra.mxu0 0.0
        %1839 = vmatprep.subr.mxu0 0.0
        %1840 = vmatpush1.msra.mxu0 0.0
        %1841 = vmatprep.subr.mxu0 0.0
        %1842 = vmatpush1.msra.mxu0 0.0
        %1843 = vmatprep.subr.mxu0 0.0
        %1844 = vmatpush1.msra.mxu0 0.0
        %1845 = vmatprep.subr.mxu0 0.0
        %1846 = vmatpush1.msra.mxu0 0.0
        %1847 = vmatprep.subr.mxu0 0.0
        %1848 = vmatpush1.msra.mxu0 0.0
        %1849 = vmatprep.subr.mxu0 0.0
        %1850 = vmatpush1.msra.mxu0 0.0
        %1851 = vmatprep.subr.mxu0 0.0
        %1852 = vmatpush1.msra.mxu0 0.0
        %1853 = vmatprep.subr.mxu0 0.0
        %1854 = vmatpush1.msra.mxu0 0.0
        %1855 = vmatprep.subr.mxu0 0.0
        %1856 = vmatpush1.msra.mxu0 0.0
        %1857 = vmatprep.subr.mxu0 0.0
        %1858 = vmatpush1.msra.mxu0 0.0
        %1859 = vmatprep.subr.mxu0 0.0
        %1860 = vmatpush1.msra.mxu0 0.0
        %1861 = vmatprep.subr.mxu0 0.0
        %1862 = vmatpush1.msra.mxu0 0.0
        %1863 = vmatprep.subr.mxu0 0.0
        %1864 = vmatpush1.msra.mxu0 0.0
        %1865 = vmatprep.subr.mxu0 0.0
        %1866 = vmatpush1.msra.mxu0 0.0
        %1867 = vmatprep.subr.mxu0 0.0
        %1868 = vmatpush1.msra.mxu0 0.0
        %1869 = vmatprep.subr.mxu0 0.0
        %1870 = vmatpush1.msra.mxu0 0.0
        %1871 = vmatprep.subr.mxu0 0.0
        %1872 = vmatpush1.msra.mxu0 0.0
        %1873 = vmatprep.subr.mxu0 0.0
        %1874 = vmatpush1.msra.mxu0 0.0
        %1875 = vmatprep.subr.mxu0 0.0
        %1876 = vmatpush1.msra.mxu0 0.0
        %1877 = vmatprep.subr.mxu0 0.0
        %1878 = vmatpush1.msra.mxu0 0.0
        %1879 = vmatprep.subr.mxu0 0.0
        %1880 = vmatpush1.msra.mxu0 0.0
        %1881 = vmatprep.subr.mxu0 0.0
        %1882 = vmatpush1.msra.mxu0 0.0
        %1883 = vmatprep.subr.mxu0 0.0
        %1884 = vmatpush1.msra.mxu0 0.0
        %1885 = vmatprep.mubr.f32.mxu0 0.0
        %1886 = vmatmul.mubr.f32.gmra.mrb[0].mxu0 %v1669
        %v1887 = vpop.f32.mrb[0].mxu0
        %v1888 = vadd.f32 0.0, %v1887
        %v1889 = vpop.f32.mrb[0].mxu0
        %1890 = vdwg.mxu0
        %v1892 = vsel %vm1671, %v1664, 0
        %1894 = vmatprep.subr.mxu0 0.0
        %1895 = vmatpush1.msra.mxu0 %v1892
        %1896 = vmatprep.subr.mxu0 0.0
        %1897 = vmatpush1.msra.mxu0 0.0
        %1898 = vmatprep.subr.mxu0 0.0
        %1899 = vmatpush1.msra.mxu0 0.0
        %1900 = vmatprep.subr.mxu0 0.0
        %1901 = vmatpush1.msra.mxu0 0.0
        %1902 = vmatprep.subr.mxu0 0.0
        %1903 = vmatpush1.msra.mxu0 0.0
        %1904 = vmatprep.subr.mxu0 0.0
        %1905 = vmatpush1.msra.mxu0 0.0
        %1906 = vmatprep.subr.mxu0 0.0
        %1907 = vmatpush1.msra.mxu0 0.0
        %1908 = vmatprep.subr.mxu0 0.0
        %1909 = vmatpush1.msra.mxu0 0.0
        %1910 = vmatprep.subr.mxu0 0.0
        %1911 = vmatpush1.msra.mxu0 0.0
        %1912 = vmatprep.subr.mxu0 0.0
        %1913 = vmatpush1.msra.mxu0 0.0
        %1914 = vmatprep.subr.mxu0 0.0
        %1915 = vmatpush1.msra.mxu0 0.0
        %1916 = vmatprep.subr.mxu0 0.0
        %1917 = vmatpush1.msra.mxu0 0.0
        %1918 = vmatprep.subr.mxu0 0.0
        %1919 = vmatpush1.msra.mxu0 0.0
        %1920 = vmatprep.subr.mxu0 0.0
        %1921 = vmatpush1.msra.mxu0 0.0
        %1922 = vmatprep.subr.mxu0 0.0
        %1923 = vmatpush1.msra.mxu0 0.0
        %1924 = vmatprep.subr.mxu0 0.0
        %1925 = vmatpush1.msra.mxu0 0.0
        %1926 = vmatprep.subr.mxu0 0.0
        %1927 = vmatpush1.msra.mxu0 0.0
        %1928 = vmatprep.subr.mxu0 0.0
        %1929 = vmatpush1.msra.mxu0 0.0
        %1930 = vmatprep.subr.mxu0 0.0
        %1931 = vmatpush1.msra.mxu0 0.0
        %1932 = vmatprep.subr.mxu0 0.0
        %1933 = vmatpush1.msra.mxu0 0.0
        %1934 = vmatprep.subr.mxu0 0.0
        %1935 = vmatpush1.msra.mxu0 0.0
        %1936 = vmatprep.subr.mxu0 0.0
        %1937 = vmatpush1.msra.mxu0 0.0
        %1938 = vmatprep.subr.mxu0 0.0
        %1939 = vmatpush1.msra.mxu0 0.0
        %1940 = vmatprep.subr.mxu0 0.0
        %1941 = vmatpush1.msra.mxu0 0.0
        %1942 = vmatprep.subr.mxu0 0.0
        %1943 = vmatpush1.msra.mxu0 0.0
        %1944 = vmatprep.subr.mxu0 0.0
        %1945 = vmatpush1.msra.mxu0 0.0
        %1946 = vmatprep.subr.mxu0 0.0
        %1947 = vmatpush1.msra.mxu0 0.0
        %1948 = vmatprep.subr.mxu0 0.0
        %1949 = vmatpush1.msra.mxu0 0.0
        %1950 = vmatprep.subr.mxu0 0.0
        %1951 = vmatpush1.msra.mxu0 0.0
        %1952 = vmatprep.subr.mxu0 0.0
        %1953 = vmatpush1.msra.mxu0 0.0
        %1954 = vmatprep.subr.mxu0 0.0
        %1955 = vmatpush1.msra.mxu0 0.0
        %1956 = vmatprep.subr.mxu0 0.0
        %1957 = vmatpush1.msra.mxu0 0.0
        %1958 = vmatprep.mubr.f32.mxu0 0.0
        %1959 = vmatmul.mubr.f32.gmra.mrb[0].mxu0 %v1669
        %v1960 = vpop.f32.mrb[0].mxu0
        %v1961 = vadd.f32 0.0, %v1960
        %v1962 = vpop.f32.mrb[0].mxu0
        %1963 = vdwg.mxu0
        %v1965 = vsel %vm1667, %v1742, 0
        %v1968 = vsel %vm1671, %v1666, 0
        %1970 = vmatprep.subr.mxu0 0.0
        %1971 = vmatpush1.msra.mxu0 %v1968
        %1972 = vmatprep.subr.mxu0 0.0
        %1973 = vmatpush1.msra.mxu0 0.0
        %1974 = vmatprep.subr.mxu0 0.0
        %1975 = vmatpush1.msra.mxu0 0.0
        %1976 = vmatprep.subr.mxu0 0.0
        %1977 = vmatpush1.msra.mxu0 0.0
        %1978 = vmatprep.subr.mxu0 0.0
        %1979 = vmatpush1.msra.mxu0 0.0
        %1980 = vmatprep.subr.mxu0 0.0
        %1981 = vmatpush1.msra.mxu0 0.0
        %1982 = vmatprep.subr.mxu0 0.0
        %1983 = vmatpush1.msra.mxu0 0.0
        %1984 = vmatprep.subr.mxu0 0.0
        %1985 = vmatpush1.msra.mxu0 0.0
        %1986 = vmatprep.subr.mxu0 0.0
        %1987 = vmatpush1.msra.mxu0 0.0
        %1988 = vmatprep.subr.mxu0 0.0
        %1989 = vmatpush1.msra.mxu0 0.0
        %1990 = vmatprep.subr.mxu0 0.0
        %1991 = vmatpush1.msra.mxu0 0.0
        %1992 = vmatprep.subr.mxu0 0.0
        %1993 = vmatpush1.msra.mxu0 0.0
        %1994 = vmatprep.subr.mxu0 0.0
        %1995 = vmatpush1.msra.mxu0 0.0
        %1996 = vmatprep.subr.mxu0 0.0
        %1997 = vmatpush1.msra.mxu0 0.0
        %1998 = vmatprep.subr.mxu0 0.0
        %1999 = vmatpush1.msra.mxu0 0.0
        %2000 = vmatprep.subr.mxu0 0.0
        %2001 = vmatpush1.msra.mxu0 0.0
        %2002 = vmatprep.subr.mxu0 0.0
        %2003 = vmatpush1.msra.mxu0 0.0
        %2004 = vmatprep.subr.mxu0 0.0
        %2005 = vmatpush1.msra.mxu0 0.0
        %2006 = vmatprep.subr.mxu0 0.0
        %2007 = vmatpush1.msra.mxu0 0.0
        %2008 = vmatprep.subr.mxu0 0.0
        %2009 = vmatpush1.msra.mxu0 0.0
        %2010 = vmatprep.subr.mxu0 0.0
        %2011 = vmatpush1.msra.mxu0 0.0
        %2012 = vmatprep.subr.mxu0 0.0
        %2013 = vmatpush1.msra.mxu0 0.0
        %2014 = vmatprep.subr.mxu0 0.0
        %2015 = vmatpush1.msra.mxu0 0.0
        %2016 = vmatprep.subr.mxu0 0.0
        %2017 = vmatpush1.msra.mxu0 0.0
        %2018 = vmatprep.subr.mxu0 0.0
        %2019 = vmatpush1.msra.mxu0 0.0
        %2020 = vmatprep.subr.mxu0 0.0
        %2021 = vmatpush1.msra.mxu0 0.0
        %2022 = vmatprep.subr.mxu0 0.0
        %2023 = vmatpush1.msra.mxu0 0.0
        %2024 = vmatprep.subr.mxu0 0.0
        %2025 = vmatpush1.msra.mxu0 0.0
        %2026 = vmatprep.subr.mxu0 0.0
        %2027 = vmatpush1.msra.mxu0 0.0
        %2028 = vmatprep.subr.mxu0 0.0
        %2029 = vmatpush1.msra.mxu0 0.0
        %2030 = vmatprep.subr.mxu0 0.0
        %2031 = vmatpush1.msra.mxu0 0.0
        %2032 = vmatprep.subr.mxu0 0.0
        %2033 = vmatpush1.msra.mxu0 0.0
        %2034 = vmatprep.mubr.f32.mxu0 0.0
        %2035 = vmatmul.mubr.f32.gmra.mrb[0].mxu0 %v1965
        %v2036 = vpop.f32.mrb[0].mxu0
        %v2037 = vadd.f32 0.0, %v2036
        %v2038 = vpop.f32.mrb[0].mxu0
        %2039 = vdwg.mxu0
        %v2041 = vsel %vm1667, %v1815, 0
        %2043 = vmatprep.subr.mxu0 0.0
        %2044 = vmatpush1.msra.mxu0 %v1968
        %2045 = vmatprep.subr.mxu0 0.0
        %2046 = vmatpush1.msra.mxu0 0.0
        %2047 = vmatprep.subr.mxu0 0.0
        %2048 = vmatpush1.msra.mxu0 0.0
        %2049 = vmatprep.subr.mxu0 0.0
        %2050 = vmatpush1.msra.mxu0 0.0
        %2051 = vmatprep.subr.mxu0 0.0
        %2052 = vmatpush1.msra.mxu0 0.0
        %2053 = vmatprep.subr.mxu0 0.0
        %2054 = vmatpush1.msra.mxu0 0.0
        %2055 = vmatprep.subr.mxu0 0.0
        %2056 = vmatpush1.msra.mxu0 0.0
        %2057 = vmatprep.subr.mxu0 0.0
        %2058 = vmatpush1.msra.mxu0 0.0
        %2059 = vmatprep.subr.mxu0 0.0
        %2060 = vmatpush1.msra.mxu0 0.0
        %2061 = vmatprep.subr.mxu0 0.0
        %2062 = vmatpush1.msra.mxu0 0.0
        %2063 = vmatprep.subr.mxu0 0.0
        %2064 = vmatpush1.msra.mxu0 0.0
        %2065 = vmatprep.subr.mxu0 0.0
        %2066 = vmatpush1.msra.mxu0 0.0
        %2067 = vmatprep.subr.mxu0 0.0
        %2068 = vmatpush1.msra.mxu0 0.0
        %2069 = vmatprep.subr.mxu0 0.0
        %2070 = vmatpush1.msra.mxu0 0.0
        %2071 = vmatprep.subr.mxu0 0.0
        %2072 = vmatpush1.msra.mxu0 0.0
        %2073 = vmatprep.subr.mxu0 0.0
        %2074 = vmatpush1.msra.mxu0 0.0
        %2075 = vmatprep.subr.mxu0 0.0
        %2076 = vmatpush1.msra.mxu0 0.0
        %2077 = vmatprep.subr.mxu0 0.0
        %2078 = vmatpush1.msra.mxu0 0.0
        %2079 = vmatprep.subr.mxu0 0.0
        %2080 = vmatpush1.msra.mxu0 0.0
        %2081 = vmatprep.subr.mxu0 0.0
        %2082 = vmatpush1.msra.mxu0 0.0
        %2083 = vmatprep.subr.mxu0 0.0
        %2084 = vmatpush1.msra.mxu0 0.0
        %2085 = vmatprep.subr.mxu0 0.0
        %2086 = vmatpush1.msra.mxu0 0.0
        %2087 = vmatprep.subr.mxu0 0.0
        %2088 = vmatpush1.msra.mxu0 0.0
        %2089 = vmatprep.subr.mxu0 0.0
        %2090 = vmatpush1.msra.mxu0 0.0
        %2091 = vmatprep.subr.mxu0 0.0
        %2092 = vmatpush1.msra.mxu0 0.0
        %2093 = vmatprep.subr.mxu0 0.0
        %2094 = vmatpush1.msra.mxu0 0.0
        %2095 = vmatprep.subr.mxu0 0.0
        %2096 = vmatpush1.msra.mxu0 0.0
        %2097 = vmatprep.subr.mxu0 0.0
        %2098 = vmatpush1.msra.mxu0 0.0
        %2099 = vmatprep.subr.mxu0 0.0
        %2100 = vmatpush1.msra.mxu0 0.0
        %2101 = vmatprep.subr.mxu0 0.0
        %2102 = vmatpush1.msra.mxu0 0.0
        %2103 = vmatprep.subr.mxu0 0.0
        %2104 = vmatpush1.msra.mxu0 0.0
        %2105 = vmatprep.subr.mxu0 0.0
        %2106 = vmatpush1.msra.mxu0 0.0
        %2107 = vmatprep.mubr.f32.mxu0 0.0
        %2108 = vmatmul.mubr.f32.gmra.mrb[0].mxu0 %v2041
        %v2109 = vpop.f32.mrb[0].mxu0
        %v2110 = vadd.f32 0.0, %v2109
        %v2111 = vpop.f32.mrb[0].mxu0
        %2112 = vdwg.mxu0
        %v2114 = vsel %vm1667, %v1888, 0
        %2116 = vmatprep.subr.mxu0 0.0
        %2117 = vmatpush1.msra.mxu0 %v1968
        %2118 = vmatprep.subr.mxu0 0.0
        %2119 = vmatpush1.msra.mxu0 0.0
        %2120 = vmatprep.subr.mxu0 0.0
        %2121 = vmatpush1.msra.mxu0 0.0
        %2122 = vmatprep.subr.mxu0 0.0
        %2123 = vmatpush1.msra.mxu0 0.0
        %2124 = vmatprep.subr.mxu0 0.0
        %2125 = vmatpush1.msra.mxu0 0.0
        %2126 = vmatprep.subr.mxu0 0.0
        %2127 = vmatpush1.msra.mxu0 0.0
        %2128 = vmatprep.subr.mxu0 0.0
        %2129 = vmatpush1.msra.mxu0 0.0
        %2130 = vmatprep.subr.mxu0 0.0
        %2131 = vmatpush1.msra.mxu0 0.0
        %2132 = vmatprep.subr.mxu0 0.0
        %2133 = vmatpush1.msra.mxu0 0.0
        %2134 = vmatprep.subr.mxu0 0.0
        %2135 = vmatpush1.msra.mxu0 0.0
        %2136 = vmatprep.subr.mxu0 0.0
        %2137 = vmatpush1.msra.mxu0 0.0
        %2138 = vmatprep.subr.mxu0 0.0
        %2139 = vmatpush1.msra.mxu0 0.0
        %2140 = vmatprep.subr.mxu0 0.0
        %2141 = vmatpush1.msra.mxu0 0.0
        %2142 = vmatprep.subr.mxu0 0.0
        %2143 = vmatpush1.msra.mxu0 0.0
        %2144 = vmatprep.subr.mxu0 0.0
        %2145 = vmatpush1.msra.mxu0 0.0
        %2146 = vmatprep.subr.mxu0 0.0
        %2147 = vmatpush1.msra.mxu0 0.0
        %2148 = vmatprep.subr.mxu0 0.0
        %2149 = vmatpush1.msra.mxu0 0.0
        %2150 = vmatprep.subr.mxu0 0.0
        %2151 = vmatpush1.msra.mxu0 0.0
        %2152 = vmatprep.subr.mxu0 0.0
        %2153 = vmatpush1.msra.mxu0 0.0
        %2154 = vmatprep.subr.mxu0 0.0
        %2155 = vmatpush1.msra.mxu0 0.0
        %2156 = vmatprep.subr.mxu0 0.0
        %2157 = vmatpush1.msra.mxu0 0.0
        %2158 = vmatprep.subr.mxu0 0.0
        %2159 = vmatpush1.msra.mxu0 0.0
        %2160 = vmatprep.subr.mxu0 0.0
        %2161 = vmatpush1.msra.mxu0 0.0
        %2162 = vmatprep.subr.mxu0 0.0
        %2163 = vmatpush1.msra.mxu0 0.0
        %2164 = vmatprep.subr.mxu0 0.0
        %2165 = vmatpush1.msra.mxu0 0.0
        %2166 = vmatprep.subr.mxu0 0.0
        %2167 = vmatpush1.msra.mxu0 0.0
        %2168 = vmatprep.subr.mxu0 0.0
        %2169 = vmatpush1.msra.mxu0 0.0
        %2170 = vmatprep.subr.mxu0 0.0
        %2171 = vmatpush1.msra.mxu0 0.0
        %2172 = vmatprep.subr.mxu0 0.0
        %2173 = vmatpush1.msra.mxu0 0.0
        %2174 = vmatprep.subr.mxu0 0.0
        %2175 = vmatpush1.msra.mxu0 0.0
        %2176 = vmatprep.subr.mxu0 0.0
        %2177 = vmatpush1.msra.mxu0 0.0
        %2178 = vmatprep.subr.mxu0 0.0
        %2179 = vmatpush1.msra.mxu0 0.0
        %2180 = vmatprep.mubr.f32.mxu0 0.0
        %2181 = vmatmul.mubr.f32.gmra.mrb[0].mxu0 %v2114
        %v2182 = vpop.f32.mrb[0].mxu0
        %v2183 = vadd.f32 0.0, %v2182
        %v2184 = vpop.f32.mrb[0].mxu0
        %2185 = vdwg.mxu0
        %v2187 = vsel %vm1667, %v1961, 0
        %2189 = vmatprep.subr.mxu0 0.0
        %2190 = vmatpush1.msra.mxu0 %v1968
        %2191 = vmatprep.subr.mxu0 0.0
        %2192 = vmatpush1.msra.mxu0 0.0
        %2193 = vmatprep.subr.mxu0 0.0
        %2194 = vmatpush1.msra.mxu0 0.0
        %2195 = vmatprep.subr.mxu0 0.0
        %2196 = vmatpush1.msra.mxu0 0.0
        %2197 = vmatprep.subr.mxu0 0.0
        %2198 = vmatpush1.msra.mxu0 0.0
        %2199 = vmatprep.subr.mxu0 0.0
        %2200 = vmatpush1.msra.mxu0 0.0
        %2201 = vmatprep.subr.mxu0 0.0
        %2202 = vmatpush1.msra.mxu0 0.0
        %2203 = vmatprep.subr.mxu0 0.0
        %2204 = vmatpush1.msra.mxu0 0.0
        %2205 = vmatprep.subr.mxu0 0.0
        %2206 = vmatpush1.msra.mxu0 0.0
        %2207 = vmatprep.subr.mxu0 0.0
        %2208 = vmatpush1.msra.mxu0 0.0
        %2209 = vmatprep.subr.mxu0 0.0
        %2210 = vmatpush1.msra.mxu0 0.0
        %2211 = vmatprep.subr.mxu0 0.0
        %2212 = vmatpush1.msra.mxu0 0.0
        %2213 = vmatprep.subr.mxu0 0.0
        %2214 = vmatpush1.msra.mxu0 0.0
        %2215 = vmatprep.subr.mxu0 0.0
        %2216 = vmatpush1.msra.mxu0 0.0
        %2217 = vmatprep.subr.mxu0 0.0
        %2218 = vmatpush1.msra.mxu0 0.0
        %2219 = vmatprep.subr.mxu0 0.0
        %2220 = vmatpush1.msra.mxu0 0.0
        %2221 = vmatprep.subr.mxu0 0.0
        %2222 = vmatpush1.msra.mxu0 0.0
        %2223 = vmatprep.subr.mxu0 0.0
        %2224 = vmatpush1.msra.mxu0 0.0
        %2225 = vmatprep.subr.mxu0 0.0
        %2226 = vmatpush1.msra.mxu0 0.0
        %2227 = vmatprep.subr.mxu0 0.0
        %2228 = vmatpush1.msra.mxu0 0.0
        %2229 = vmatprep.subr.mxu0 0.0
        %2230 = vmatpush1.msra.mxu0 0.0
        %2231 = vmatprep.subr.mxu0 0.0
        %2232 = vmatpush1.msra.mxu0 0.0
        %2233 = vmatprep.subr.mxu0 0.0
        %2234 = vmatpush1.msra.mxu0 0.0
        %2235 = vmatprep.subr.mxu0 0.0
        %2236 = vmatpush1.msra.mxu0 0.0
        %2237 = vmatprep.subr.mxu0 0.0
        %2238 = vmatpush1.msra.mxu0 0.0
        %2239 = vmatprep.subr.mxu0 0.0
        %2240 = vmatpush1.msra.mxu0 0.0
        %2241 = vmatprep.subr.mxu0 0.0
        %2242 = vmatpush1.msra.mxu0 0.0
        %2243 = vmatprep.subr.mxu0 0.0
        %2244 = vmatpush1.msra.mxu0 0.0
        %2245 = vmatprep.subr.mxu0 0.0
        %2246 = vmatpush1.msra.mxu0 0.0
        %2247 = vmatprep.subr.mxu0 0.0
        %2248 = vmatpush1.msra.mxu0 0.0
        %2249 = vmatprep.subr.mxu0 0.0
        %2250 = vmatpush1.msra.mxu0 0.0
        %2251 = vmatprep.subr.mxu0 0.0
        %2252 = vmatpush1.msra.mxu0 0.0
        %2253 = vmatprep.mubr.f32.mxu0 0.0
        %2254 = vmatmul.mubr.f32.gmra.mrb[0].mxu0 %v2187
        %v2255 = vpop.f32.mrb[0].mxu0
        %v2256 = vadd.f32 0.0, %v2255
        %v2257 = vpop.f32.mrb[0].mxu0
        %2258 = vdwg.mxu0
        %s2259 = sld [smem:[#allocation2 + $0x2]]
        %v2260 = vstv %s2259
        %v2261 = vsub.f32 %v2037, %v2260
        %v2262 = vsub.f32 %v2110, %v2260
        %v2263 = vsub.f32 %v2183, %v2260
        %v2264 = vsub.f32 %v2256, %v2260
        %v2265 = vmax.f32 %v2261, 0.0
        %v2266 = vmax.f32 %v2262, 0.0
        %v2267 = vmax.f32 %v2263, 0.0
        %v2268 = vmax.f32 %v2264, 0.0
        %v2269 = vadd.f32 %v2037, %v2260
        %v2270 = vadd.f32 %v2110, %v2260
        %v2271 = vadd.f32 %v2183, %v2260
        %v2272 = vadd.f32 %v2256, %v2260
        %v2273 = vmin.f32 %v2269, 0.0
        %v2274 = vmin.f32 %v2270, 0.0
        %v2275 = vmin.f32 %v2271, 0.0
        %v2276 = vmin.f32 %v2272, 0.0
        %v2277 = vadd.f32 %v2265, %v2273
        %v2278 = vadd.f32 %v2266, %v2274
        %v2279 = vadd.f32 %v2267, %v2275
        %v2280 = vadd.f32 %v2268, %v2276
        %vm2281 = vcmp.ge.s32.totalorder %v1140, 2
        %vm2282 = vcmp.ge.s32.totalorder %v1143, 2
        %vm2283 = vmor %vm2281, %vm2282
        %v2284 = vsel %vm2283, 1, 0
        %vm2285 = vcmp.eq.s32.totalorder %v2284, 1
        %v2286 = vsel %vm2285, %v2277, %v2037
        %v2287 = vsel %vm2285, %v2278, %v2110
        %v2288 = vsel %vm2285, %v2279, %v2183
        %v2289 = vsel %vm2285, %v2280, %v2256
        %vm2290 = vcmask 27648
        %2291 = vst.msk [vmem:[%s567] sm:$0xf] %vm2290, %v2286
        %2292 = vst.msk [vmem:[%s567 + $0x10] sm:$0xf] %vm2290, %v2287
        %2293 = vst.msk [vmem:[%s567 + $0x20] sm:$0xf] %vm2290, %v2288
        %2294 = vst.msk [vmem:[%s567 + $0x30] sm:$0xf] %vm2290, %v2289
        %v2295 = vld [vmem:[%s567] sm:$0xf]
        %v2296 = vld [vmem:[%s567 + $0x10] sm:$0xf]
        %v2297 = vld [vmem:[%s567 + $0x20] sm:$0xf]
        %v2298 = vld [vmem:[%s567 + $0x30] sm:$0xf]
        %v2299 = vld [vmem:[%s12] sm:$0xf]
        %v2300 = vld [vmem:[%s13] sm:$0xf]
        %v2302 = vsel %vm1667, %v2299, 0
        %v2305 = vsel %vm1671, %v2295, 0
        %2307 = vmatprep.subr.mxu0 0.0
        %2308 = vmatpush1.msra.mxu0 %v2305
        %2309 = vmatprep.subr.mxu0 0.0
        %2310 = vmatpush1.msra.mxu0 0.0
        %2311 = vmatprep.subr.mxu0 0.0
        %2312 = vmatpush1.msra.mxu0 0.0
        %2313 = vmatprep.subr.mxu0 0.0
        %2314 = vmatpush1.msra.mxu0 0.0
        %2315 = vmatprep.subr.mxu0 0.0
        %2316 = vmatpush1.msra.mxu0 0.0
        %2317 = vmatprep.subr.mxu0 0.0
        %2318 = vmatpush1.msra.mxu0 0.0
        %2319 = vmatprep.subr.mxu0 0.0
        %2320 = vmatpush1.msra.mxu0 0.0
        %2321 = vmatprep.subr.mxu0 0.0
        %2322 = vmatpush1.msra.mxu0 0.0
        %2323 = vmatprep.subr.mxu0 0.0
        %2324 = vmatpush1.msra.mxu0 0.0
        %2325 = vmatprep.subr.mxu0 0.0
        %2326 = vmatpush1.msra.mxu0 0.0
        %2327 = vmatprep.subr.mxu0 0.0
        %2328 = vmatpush1.msra.mxu0 0.0
        %2329 = vmatprep.subr.mxu0 0.0
        %2330 = vmatpush1.msra.mxu0 0.0
        %2331 = vmatprep.subr.mxu0 0.0
        %2332 = vmatpush1.msra.mxu0 0.0
        %2333 = vmatprep.subr.mxu0 0.0
        %2334 = vmatpush1.msra.mxu0 0.0
        %2335 = vmatprep.subr.mxu0 0.0
        %2336 = vmatpush1.msra.mxu0 0.0
        %2337 = vmatprep.subr.mxu0 0.0
        %2338 = vmatpush1.msra.mxu0 0.0
        %2339 = vmatprep.subr.mxu0 0.0
        %2340 = vmatpush1.msra.mxu0 0.0
        %2341 = vmatprep.subr.mxu0 0.0
        %2342 = vmatpush1.msra.mxu0 0.0
        %2343 = vmatprep.subr.mxu0 0.0
        %2344 = vmatpush1.msra.mxu0 0.0
        %2345 = vmatprep.subr.mxu0 0.0
        %2346 = vmatpush1.msra.mxu0 0.0
        %2347 = vmatprep.subr.mxu0 0.0
        %2348 = vmatpush1.msra.mxu0 0.0
        %2349 = vmatprep.subr.mxu0 0.0
        %2350 = vmatpush1.msra.mxu0 0.0
        %2351 = vmatprep.subr.mxu0 0.0
        %2352 = vmatpush1.msra.mxu0 0.0
        %2353 = vmatprep.subr.mxu0 0.0
        %2354 = vmatpush1.msra.mxu0 0.0
        %2355 = vmatprep.subr.mxu0 0.0
        %2356 = vmatpush1.msra.mxu0 0.0
        %2357 = vmatprep.subr.mxu0 0.0
        %2358 = vmatpush1.msra.mxu0 0.0
        %2359 = vmatprep.subr.mxu0 0.0
        %2360 = vmatpush1.msra.mxu0 0.0
        %2361 = vmatprep.subr.mxu0 0.0
        %2362 = vmatpush1.msra.mxu0 0.0
        %2363 = vmatprep.subr.mxu0 0.0
        %2364 = vmatpush1.msra.mxu0 0.0
        %2365 = vmatprep.subr.mxu0 0.0
        %2366 = vmatpush1.msra.mxu0 0.0
        %2367 = vmatprep.subr.mxu0 0.0
        %2368 = vmatpush1.msra.mxu0 0.0
        %2369 = vmatprep.subr.mxu0 0.0
        %2370 = vmatpush1.msra.mxu0 0.0
        %2371 = vmatprep.mubr.f32.mxu0 0.0
        %2372 = vmatmul.mubr.f32.gmra.mrb[0].mxu0 %v2302
        %v2373 = vpop.f32.mrb[0].mxu0
        %v2374 = vadd.f32 0.0, %v2373
        %v2375 = vpop.f32.mrb[0].mxu0
        %2376 = vdwg.mxu0
        %v2378 = vsel %vm1671, %v2296, 0
        %2380 = vmatprep.subr.mxu0 0.0
        %2381 = vmatpush1.msra.mxu0 %v2378
        %2382 = vmatprep.subr.mxu0 0.0
        %2383 = vmatpush1.msra.mxu0 0.0
        %2384 = vmatprep.subr.mxu0 0.0
        %2385 = vmatpush1.msra.mxu0 0.0
        %2386 = vmatprep.subr.mxu0 0.0
        %2387 = vmatpush1.msra.mxu0 0.0
        %2388 = vmatprep.subr.mxu0 0.0
        %2389 = vmatpush1.msra.mxu0 0.0
        %2390 = vmatprep.subr.mxu0 0.0
        %2391 = vmatpush1.msra.mxu0 0.0
        %2392 = vmatprep.subr.mxu0 0.0
        %2393 = vmatpush1.msra.mxu0 0.0
        %2394 = vmatprep.subr.mxu0 0.0
        %2395 = vmatpush1.msra.mxu0 0.0
        %2396 = vmatprep.subr.mxu0 0.0
        %2397 = vmatpush1.msra.mxu0 0.0
        %2398 = vmatprep.subr.mxu0 0.0
        %2399 = vmatpush1.msra.mxu0 0.0
        %2400 = vmatprep.subr.mxu0 0.0
        %2401 = vmatpush1.msra.mxu0 0.0
        %2402 = vmatprep.subr.mxu0 0.0
        %2403 = vmatpush1.msra.mxu0 0.0
        %2404 = vmatprep.subr.mxu0 0.0
        %2405 = vmatpush1.msra.mxu0 0.0
        %2406 = vmatprep.subr.mxu0 0.0
        %2407 = vmatpush1.msra.mxu0 0.0
        %2408 = vmatprep.subr.mxu0 0.0
        %2409 = vmatpush1.msra.mxu0 0.0
        %2410 = vmatprep.subr.mxu0 0.0
        %2411 = vmatpush1.msra.mxu0 0.0
        %2412 = vmatprep.subr.mxu0 0.0
        %2413 = vmatpush1.msra.mxu0 0.0
        %2414 = vmatprep.subr.mxu0 0.0
        %2415 = vmatpush1.msra.mxu0 0.0
        %2416 = vmatprep.subr.mxu0 0.0
        %2417 = vmatpush1.msra.mxu0 0.0
        %2418 = vmatprep.subr.mxu0 0.0
        %2419 = vmatpush1.msra.mxu0 0.0
        %2420 = vmatprep.subr.mxu0 0.0
        %2421 = vmatpush1.msra.mxu0 0.0
        %2422 = vmatprep.subr.mxu0 0.0
        %2423 = vmatpush1.msra.mxu0 0.0
        %2424 = vmatprep.subr.mxu0 0.0
        %2425 = vmatpush1.msra.mxu0 0.0
        %2426 = vmatprep.subr.mxu0 0.0
        %2427 = vmatpush1.msra.mxu0 0.0
        %2428 = vmatprep.subr.mxu0 0.0
        %2429 = vmatpush1.msra.mxu0 0.0
        %2430 = vmatprep.subr.mxu0 0.0
        %2431 = vmatpush1.msra.mxu0 0.0
        %2432 = vmatprep.subr.mxu0 0.0
        %2433 = vmatpush1.msra.mxu0 0.0
        %2434 = vmatprep.subr.mxu0 0.0
        %2435 = vmatpush1.msra.mxu0 0.0
        %2436 = vmatprep.subr.mxu0 0.0
        %2437 = vmatpush1.msra.mxu0 0.0
        %2438 = vmatprep.subr.mxu0 0.0
        %2439 = vmatpush1.msra.mxu0 0.0
        %2440 = vmatprep.subr.mxu0 0.0
        %2441 = vmatpush1.msra.mxu0 0.0
        %2442 = vmatprep.subr.mxu0 0.0
        %2443 = vmatpush1.msra.mxu0 0.0
        %2444 = vmatprep.mubr.f32.mxu0 0.0
        %2445 = vmatmul.mubr.f32.gmra.mrb[0].mxu0 %v2302
        %v2446 = vpop.f32.mrb[0].mxu0
        %v2447 = vadd.f32 0.0, %v2446
        %v2448 = vpop.f32.mrb[0].mxu0
        %2449 = vdwg.mxu0
        %v2451 = vsel %vm1671, %v2297, 0
        %2453 = vmatprep.subr.mxu0 0.0
        %2454 = vmatpush1.msra.mxu0 %v2451
        %2455 = vmatprep.subr.mxu0 0.0
        %2456 = vmatpush1.msra.mxu0 0.0
        %2457 = vmatprep.subr.mxu0 0.0
        %2458 = vmatpush1.msra.mxu0 0.0
        %2459 = vmatprep.subr.mxu0 0.0
        %2460 = vmatpush1.msra.mxu0 0.0
        %2461 = vmatprep.subr.mxu0 0.0
        %2462 = vmatpush1.msra.mxu0 0.0
        %2463 = vmatprep.subr.mxu0 0.0
        %2464 = vmatpush1.msra.mxu0 0.0
        %2465 = vmatprep.subr.mxu0 0.0
        %2466 = vmatpush1.msra.mxu0 0.0
        %2467 = vmatprep.subr.mxu0 0.0
        %2468 = vmatpush1.msra.mxu0 0.0
        %2469 = vmatprep.subr.mxu0 0.0
        %2470 = vmatpush1.msra.mxu0 0.0
        %2471 = vmatprep.subr.mxu0 0.0
        %2472 = vmatpush1.msra.mxu0 0.0
        %2473 = vmatprep.subr.mxu0 0.0
        %2474 = vmatpush1.msra.mxu0 0.0
        %2475 = vmatprep.subr.mxu0 0.0
        %2476 = vmatpush1.msra.mxu0 0.0
        %2477 = vmatprep.subr.mxu0 0.0
        %2478 = vmatpush1.msra.mxu0 0.0
        %2479 = vmatprep.subr.mxu0 0.0
        %2480 = vmatpush1.msra.mxu0 0.0
        %2481 = vmatprep.subr.mxu0 0.0
        %2482 = vmatpush1.msra.mxu0 0.0
        %2483 = vmatprep.subr.mxu0 0.0
        %2484 = vmatpush1.msra.mxu0 0.0
        %2485 = vmatprep.subr.mxu0 0.0
        %2486 = vmatpush1.msra.mxu0 0.0
        %2487 = vmatprep.subr.mxu0 0.0
        %2488 = vmatpush1.msra.mxu0 0.0
        %2489 = vmatprep.subr.mxu0 0.0
        %2490 = vmatpush1.msra.mxu0 0.0
        %2491 = vmatprep.subr.mxu0 0.0
        %2492 = vmatpush1.msra.mxu0 0.0
        %2493 = vmatprep.subr.mxu0 0.0
        %2494 = vmatpush1.msra.mxu0 0.0
        %2495 = vmatprep.subr.mxu0 0.0
        %2496 = vmatpush1.msra.mxu0 0.0
        %2497 = vmatprep.subr.mxu0 0.0
        %2498 = vmatpush1.msra.mxu0 0.0
        %2499 = vmatprep.subr.mxu0 0.0
        %2500 = vmatpush1.msra.mxu0 0.0
        %2501 = vmatprep.subr.mxu0 0.0
        %2502 = vmatpush1.msra.mxu0 0.0
        %2503 = vmatprep.subr.mxu0 0.0
        %2504 = vmatpush1.msra.mxu0 0.0
        %2505 = vmatprep.subr.mxu0 0.0
        %2506 = vmatpush1.msra.mxu0 0.0
        %2507 = vmatprep.subr.mxu0 0.0
        %2508 = vmatpush1.msra.mxu0 0.0
        %2509 = vmatprep.subr.mxu0 0.0
        %2510 = vmatpush1.msra.mxu0 0.0
        %2511 = vmatprep.subr.mxu0 0.0
        %2512 = vmatpush1.msra.mxu0 0.0
        %2513 = vmatprep.subr.mxu0 0.0
        %2514 = vmatpush1.msra.mxu0 0.0
        %2515 = vmatprep.subr.mxu0 0.0
        %2516 = vmatpush1.msra.mxu0 0.0
        %2517 = vmatprep.mubr.f32.mxu0 0.0
        %2518 = vmatmul.mubr.f32.gmra.mrb[0].mxu0 %v2302
        %v2519 = vpop.f32.mrb[0].mxu0
        %v2520 = vadd.f32 0.0, %v2519
        %v2521 = vpop.f32.mrb[0].mxu0
        %2522 = vdwg.mxu0
        %v2524 = vsel %vm1671, %v2298, 0
        %2526 = vmatprep.subr.mxu0 0.0
        %2527 = vmatpush1.msra.mxu0 %v2524
        %2528 = vmatprep.subr.mxu0 0.0
        %2529 = vmatpush1.msra.mxu0 0.0
        %2530 = vmatprep.subr.mxu0 0.0
        %2531 = vmatpush1.msra.mxu0 0.0
        %2532 = vmatprep.subr.mxu0 0.0
        %2533 = vmatpush1.msra.mxu0 0.0
        %2534 = vmatprep.subr.mxu0 0.0
        %2535 = vmatpush1.msra.mxu0 0.0
        %2536 = vmatprep.subr.mxu0 0.0
        %2537 = vmatpush1.msra.mxu0 0.0
        %2538 = vmatprep.subr.mxu0 0.0
        %2539 = vmatpush1.msra.mxu0 0.0
        %2540 = vmatprep.subr.mxu0 0.0
        %2541 = vmatpush1.msra.mxu0 0.0
        %2542 = vmatprep.subr.mxu0 0.0
        %2543 = vmatpush1.msra.mxu0 0.0
        %2544 = vmatprep.subr.mxu0 0.0
        %2545 = vmatpush1.msra.mxu0 0.0
        %2546 = vmatprep.subr.mxu0 0.0
        %2547 = vmatpush1.msra.mxu0 0.0
        %2548 = vmatprep.subr.mxu0 0.0
        %2549 = vmatpush1.msra.mxu0 0.0
        %2550 = vmatprep.subr.mxu0 0.0
        %2551 = vmatpush1.msra.mxu0 0.0
        %2552 = vmatprep.subr.mxu0 0.0
        %2553 = vmatpush1.msra.mxu0 0.0
        %2554 = vmatprep.subr.mxu0 0.0
        %2555 = vmatpush1.msra.mxu0 0.0
        %2556 = vmatprep.subr.mxu0 0.0
        %2557 = vmatpush1.msra.mxu0 0.0
        %2558 = vmatprep.subr.mxu0 0.0
        %2559 = vmatpush1.msra.mxu0 0.0
        %2560 = vmatprep.subr.mxu0 0.0
        %2561 = vmatpush1.msra.mxu0 0.0
        %2562 = vmatprep.subr.mxu0 0.0
        %2563 = vmatpush1.msra.mxu0 0.0
        %2564 = vmatprep.subr.mxu0 0.0
        %2565 = vmatpush1.msra.mxu0 0.0
        %2566 = vmatprep.subr.mxu0 0.0
        %2567 = vmatpush1.msra.mxu0 0.0
        %2568 = vmatprep.subr.mxu0 0.0
        %2569 = vmatpush1.msra.mxu0 0.0
        %2570 = vmatprep.subr.mxu0 0.0
        %2571 = vmatpush1.msra.mxu0 0.0
        %2572 = vmatprep.subr.mxu0 0.0
        %2573 = vmatpush1.msra.mxu0 0.0
        %2574 = vmatprep.subr.mxu0 0.0
        %2575 = vmatpush1.msra.mxu0 0.0
        %2576 = vmatprep.subr.mxu0 0.0
        %2577 = vmatpush1.msra.mxu0 0.0
        %2578 = vmatprep.subr.mxu0 0.0
        %2579 = vmatpush1.msra.mxu0 0.0
        %2580 = vmatprep.subr.mxu0 0.0
        %2581 = vmatpush1.msra.mxu0 0.0
        %2582 = vmatprep.subr.mxu0 0.0
        %2583 = vmatpush1.msra.mxu0 0.0
        %2584 = vmatprep.subr.mxu0 0.0
        %2585 = vmatpush1.msra.mxu0 0.0
        %2586 = vmatprep.subr.mxu0 0.0
        %2587 = vmatpush1.msra.mxu0 0.0
        %2588 = vmatprep.subr.mxu0 0.0
        %2589 = vmatpush1.msra.mxu0 0.0
        %2590 = vmatprep.mubr.f32.mxu0 0.0
        %2591 = vmatmul.mubr.f32.gmra.mrb[0].mxu0 %v2302
        %v2592 = vpop.f32.mrb[0].mxu0
        %v2593 = vadd.f32 0.0, %v2592
        %v2594 = vpop.f32.mrb[0].mxu0
        %2595 = vdwg.mxu0
        %v2597 = vsel %vm1667, %v2374, 0
        %v2600 = vsel %vm1671, %v2300, 0
        %2602 = vmatprep.subr.mxu0 0.0
        %2603 = vmatpush1.msra.mxu0 %v2600
        %2604 = vmatprep.subr.mxu0 0.0
        %2605 = vmatpush1.msra.mxu0 0.0
        %2606 = vmatprep.subr.mxu0 0.0
        %2607 = vmatpush1.msra.mxu0 0.0
        %2608 = vmatprep.subr.mxu0 0.0
        %2609 = vmatpush1.msra.mxu0 0.0
        %2610 = vmatprep.subr.mxu0 0.0
        %2611 = vmatpush1.msra.mxu0 0.0
        %2612 = vmatprep.subr.mxu0 0.0
        %2613 = vmatpush1.msra.mxu0 0.0
        %2614 = vmatprep.subr.mxu0 0.0
        %2615 = vmatpush1.msra.mxu0 0.0
        %2616 = vmatprep.subr.mxu0 0.0
        %2617 = vmatpush1.msra.mxu0 0.0
        %2618 = vmatprep.subr.mxu0 0.0
        %2619 = vmatpush1.msra.mxu0 0.0
        %2620 = vmatprep.subr.mxu0 0.0
        %2621 = vmatpush1.msra.mxu0 0.0
        %2622 = vmatprep.subr.mxu0 0.0
        %2623 = vmatpush1.msra.mxu0 0.0
        %2624 = vmatprep.subr.mxu0 0.0
        %2625 = vmatpush1.msra.mxu0 0.0
        %2626 = vmatprep.subr.mxu0 0.0
        %2627 = vmatpush1.msra.mxu0 0.0
        %2628 = vmatprep.subr.mxu0 0.0
        %2629 = vmatpush1.msra.mxu0 0.0
        %2630 = vmatprep.subr.mxu0 0.0
        %2631 = vmatpush1.msra.mxu0 0.0
        %2632 = vmatprep.subr.mxu0 0.0
        %2633 = vmatpush1.msra.mxu0 0.0
        %2634 = vmatprep.subr.mxu0 0.0
        %2635 = vmatpush1.msra.mxu0 0.0
        %2636 = vmatprep.subr.mxu0 0.0
        %2637 = vmatpush1.msra.mxu0 0.0
        %2638 = vmatprep.subr.mxu0 0.0
        %2639 = vmatpush1.msra.mxu0 0.0
        %2640 = vmatprep.subr.mxu0 0.0
        %2641 = vmatpush1.msra.mxu0 0.0
        %2642 = vmatprep.subr.mxu0 0.0
        %2643 = vmatpush1.msra.mxu0 0.0
        %2644 = vmatprep.subr.mxu0 0.0
        %2645 = vmatpush1.msra.mxu0 0.0
        %2646 = vmatprep.subr.mxu0 0.0
        %2647 = vmatpush1.msra.mxu0 0.0
        %2648 = vmatprep.subr.mxu0 0.0
        %2649 = vmatpush1.msra.mxu0 0.0
        %2650 = vmatprep.subr.mxu0 0.0
        %2651 = vmatpush1.msra.mxu0 0.0
        %2652 = vmatprep.subr.mxu0 0.0
        %2653 = vmatpush1.msra.mxu0 0.0
        %2654 = vmatprep.subr.mxu0 0.0
        %2655 = vmatpush1.msra.mxu0 0.0
        %2656 = vmatprep.subr.mxu0 0.0
        %2657 = vmatpush1.msra.mxu0 0.0
        %2658 = vmatprep.subr.mxu0 0.0
        %2659 = vmatpush1.msra.mxu0 0.0
        %2660 = vmatprep.subr.mxu0 0.0
        %2661 = vmatpush1.msra.mxu0 0.0
        %2662 = vmatprep.subr.mxu0 0.0
        %2663 = vmatpush1.msra.mxu0 0.0
        %2664 = vmatprep.subr.mxu0 0.0
        %2665 = vmatpush1.msra.mxu0 0.0
        %2666 = vmatprep.mubr.f32.mxu0 0.0
        %2667 = vmatmul.mubr.f32.gmra.mrb[0].mxu0 %v2597
        %v2668 = vpop.f32.mrb[0].mxu0
        %v2669 = vadd.f32 0.0, %v2668
        %v2670 = vpop.f32.mrb[0].mxu0
        %2671 = vdwg.mxu0
        %v2673 = vsel %vm1667, %v2447, 0
        %2675 = vmatprep.subr.mxu0 0.0
        %2676 = vmatpush1.msra.mxu0 %v2600
        %2677 = vmatprep.subr.mxu0 0.0
        %2678 = vmatpush1.msra.mxu0 0.0
        %2679 = vmatprep.subr.mxu0 0.0
        %2680 = vmatpush1.msra.mxu0 0.0
        %2681 = vmatprep.subr.mxu0 0.0
        %2682 = vmatpush1.msra.mxu0 0.0
        %2683 = vmatprep.subr.mxu0 0.0
        %2684 = vmatpush1.msra.mxu0 0.0
        %2685 = vmatprep.subr.mxu0 0.0
        %2686 = vmatpush1.msra.mxu0 0.0
        %2687 = vmatprep.subr.mxu0 0.0
        %2688 = vmatpush1.msra.mxu0 0.0
        %2689 = vmatprep.subr.mxu0 0.0
        %2690 = vmatpush1.msra.mxu0 0.0
        %2691 = vmatprep.subr.mxu0 0.0
        %2692 = vmatpush1.msra.mxu0 0.0
        %2693 = vmatprep.subr.mxu0 0.0
        %2694 = vmatpush1.msra.mxu0 0.0
        %2695 = vmatprep.subr.mxu0 0.0
        %2696 = vmatpush1.msra.mxu0 0.0
        %2697 = vmatprep.subr.mxu0 0.0
        %2698 = vmatpush1.msra.mxu0 0.0
        %2699 = vmatprep.subr.mxu0 0.0
        %2700 = vmatpush1.msra.mxu0 0.0
        %2701 = vmatprep.subr.mxu0 0.0
        %2702 = vmatpush1.msra.mxu0 0.0
        %2703 = vmatprep.subr.mxu0 0.0
        %2704 = vmatpush1.msra.mxu0 0.0
        %2705 = vmatprep.subr.mxu0 0.0
        %2706 = vmatpush1.msra.mxu0 0.0
        %2707 = vmatprep.subr.mxu0 0.0
        %2708 = vmatpush1.msra.mxu0 0.0
        %2709 = vmatprep.subr.mxu0 0.0
        %2710 = vmatpush1.msra.mxu0 0.0
        %2711 = vmatprep.subr.mxu0 0.0
        %2712 = vmatpush1.msra.mxu0 0.0
        %2713 = vmatprep.subr.mxu0 0.0
        %2714 = vmatpush1.msra.mxu0 0.0
        %2715 = vmatprep.subr.mxu0 0.0
        %2716 = vmatpush1.msra.mxu0 0.0
        %2717 = vmatprep.subr.mxu0 0.0
        %2718 = vmatpush1.msra.mxu0 0.0
        %2719 = vmatprep.subr.mxu0 0.0
        %2720 = vmatpush1.msra.mxu0 0.0
        %2721 = vmatprep.subr.mxu0 0.0
        %2722 = vmatpush1.msra.mxu0 0.0
        %2723 = vmatprep.subr.mxu0 0.0
        %2724 = vmatpush1.msra.mxu0 0.0
        %2725 = vmatprep.subr.mxu0 0.0
        %2726 = vmatpush1.msra.mxu0 0.0
        %2727 = vmatprep.subr.mxu0 0.0
        %2728 = vmatpush1.msra.mxu0 0.0
        %2729 = vmatprep.subr.mxu0 0.0
        %2730 = vmatpush1.msra.mxu0 0.0
        %2731 = vmatprep.subr.mxu0 0.0
        %2732 = vmatpush1.msra.mxu0 0.0
        %2733 = vmatprep.subr.mxu0 0.0
        %2734 = vmatpush1.msra.mxu0 0.0
        %2735 = vmatprep.subr.mxu0 0.0
        %2736 = vmatpush1.msra.mxu0 0.0
        %2737 = vmatprep.subr.mxu0 0.0
        %2738 = vmatpush1.msra.mxu0 0.0
        %2739 = vmatprep.mubr.f32.mxu0 0.0
        %2740 = vmatmul.mubr.f32.gmra.mrb[0].mxu0 %v2673
        %v2741 = vpop.f32.mrb[0].mxu0
        %v2742 = vadd.f32 0.0, %v2741
        %v2743 = vpop.f32.mrb[0].mxu0
        %2744 = vdwg.mxu0
        %v2746 = vsel %vm1667, %v2520, 0
        %2748 = vmatprep.subr.mxu0 0.0
        %2749 = vmatpush1.msra.mxu0 %v2600
        %2750 = vmatprep.subr.mxu0 0.0
        %2751 = vmatpush1.msra.mxu0 0.0
        %2752 = vmatprep.subr.mxu0 0.0
        %2753 = vmatpush1.msra.mxu0 0.0
        %2754 = vmatprep.subr.mxu0 0.0
        %2755 = vmatpush1.msra.mxu0 0.0
        %2756 = vmatprep.subr.mxu0 0.0
        %2757 = vmatpush1.msra.mxu0 0.0
        %2758 = vmatprep.subr.mxu0 0.0
        %2759 = vmatpush1.msra.mxu0 0.0
        %2760 = vmatprep.subr.mxu0 0.0
        %2761 = vmatpush1.msra.mxu0 0.0
        %2762 = vmatprep.subr.mxu0 0.0
        %2763 = vmatpush1.msra.mxu0 0.0
        %2764 = vmatprep.subr.mxu0 0.0
        %2765 = vmatpush1.msra.mxu0 0.0
        %2766 = vmatprep.subr.mxu0 0.0
        %2767 = vmatpush1.msra.mxu0 0.0
        %2768 = vmatprep.subr.mxu0 0.0
        %2769 = vmatpush1.msra.mxu0 0.0
        %2770 = vmatprep.subr.mxu0 0.0
        %2771 = vmatpush1.msra.mxu0 0.0
        %2772 = vmatprep.subr.mxu0 0.0
        %2773 = vmatpush1.msra.mxu0 0.0
        %2774 = vmatprep.subr.mxu0 0.0
        %2775 = vmatpush1.msra.mxu0 0.0
        %2776 = vmatprep.subr.mxu0 0.0
        %2777 = vmatpush1.msra.mxu0 0.0
        %2778 = vmatprep.subr.mxu0 0.0
        %2779 = vmatpush1.msra.mxu0 0.0
        %2780 = vmatprep.subr.mxu0 0.0
        %2781 = vmatpush1.msra.mxu0 0.0
        %2782 = vmatprep.subr.mxu0 0.0
        %2783 = vmatpush1.msra.mxu0 0.0
        %2784 = vmatprep.subr.mxu0 0.0
        %2785 = vmatpush1.msra.mxu0 0.0
        %2786 = vmatprep.subr.mxu0 0.0
        %2787 = vmatpush1.msra.mxu0 0.0
        %2788 = vmatprep.subr.mxu0 0.0
        %2789 = vmatpush1.msra.mxu0 0.0
        %2790 = vmatprep.subr.mxu0 0.0
        %2791 = vmatpush1.msra.mxu0 0.0
        %2792 = vmatprep.subr.mxu0 0.0
        %2793 = vmatpush1.msra.mxu0 0.0
        %2794 = vmatprep.subr.mxu0 0.0
        %2795 = vmatpush1.msra.mxu0 0.0
        %2796 = vmatprep.subr.mxu0 0.0
        %2797 = vmatpush1.msra.mxu0 0.0
        %2798 = vmatprep.subr.mxu0 0.0
        %2799 = vmatpush1.msra.mxu0 0.0
        %2800 = vmatprep.subr.mxu0 0.0
        %2801 = vmatpush1.msra.mxu0 0.0
        %2802 = vmatprep.subr.mxu0 0.0
        %2803 = vmatpush1.msra.mxu0 0.0
        %2804 = vmatprep.subr.mxu0 0.0
        %2805 = vmatpush1.msra.mxu0 0.0
        %2806 = vmatprep.subr.mxu0 0.0
        %2807 = vmatpush1.msra.mxu0 0.0
        %2808 = vmatprep.subr.mxu0 0.0
        %2809 = vmatpush1.msra.mxu0 0.0
        %2810 = vmatprep.subr.mxu0 0.0
        %2811 = vmatpush1.msra.mxu0 0.0
        %2812 = vmatprep.mubr.f32.mxu0 0.0
        %2813 = vmatmul.mubr.f32.gmra.mrb[0].mxu0 %v2746
        %v2814 = vpop.f32.mrb[0].mxu0
        %v2815 = vadd.f32 0.0, %v2814
        %v2816 = vpop.f32.mrb[0].mxu0
        %2817 = vdwg.mxu0
        %v2819 = vsel %vm1667, %v2593, 0
        %2821 = vmatprep.subr.mxu0 0.0
        %2822 = vmatpush1.msra.mxu0 %v2600
        %2823 = vmatprep.subr.mxu0 0.0
        %2824 = vmatpush1.msra.mxu0 0.0
        %2825 = vmatprep.subr.mxu0 0.0
        %2826 = vmatpush1.msra.mxu0 0.0
        %2827 = vmatprep.subr.mxu0 0.0
        %2828 = vmatpush1.msra.mxu0 0.0
        %2829 = vmatprep.subr.mxu0 0.0
        %2830 = vmatpush1.msra.mxu0 0.0
        %2831 = vmatprep.subr.mxu0 0.0
        %2832 = vmatpush1.msra.mxu0 0.0
        %2833 = vmatprep.subr.mxu0 0.0
        %2834 = vmatpush1.msra.mxu0 0.0
        %2835 = vmatprep.subr.mxu0 0.0
        %2836 = vmatpush1.msra.mxu0 0.0
        %2837 = vmatprep.subr.mxu0 0.0
        %2838 = vmatpush1.msra.mxu0 0.0
        %2839 = vmatprep.subr.mxu0 0.0
        %2840 = vmatpush1.msra.mxu0 0.0
        %2841 = vmatprep.subr.mxu0 0.0
        %2842 = vmatpush1.msra.mxu0 0.0
        %2843 = vmatprep.subr.mxu0 0.0
        %2844 = vmatpush1.msra.mxu0 0.0
        %2845 = vmatprep.subr.mxu0 0.0
        %2846 = vmatpush1.msra.mxu0 0.0
        %2847 = vmatprep.subr.mxu0 0.0
        %2848 = vmatpush1.msra.mxu0 0.0
        %2849 = vmatprep.subr.mxu0 0.0
        %2850 = vmatpush1.msra.mxu0 0.0
        %2851 = vmatprep.subr.mxu0 0.0
        %2852 = vmatpush1.msra.mxu0 0.0
        %2853 = vmatprep.subr.mxu0 0.0
        %2854 = vmatpush1.msra.mxu0 0.0
        %2855 = vmatprep.subr.mxu0 0.0
        %2856 = vmatpush1.msra.mxu0 0.0
        %2857 = vmatprep.subr.mxu0 0.0
        %2858 = vmatpush1.msra.mxu0 0.0
        %2859 = vmatprep.subr.mxu0 0.0
        %2860 = vmatpush1.msra.mxu0 0.0
        %2861 = vmatprep.subr.mxu0 0.0
        %2862 = vmatpush1.msra.mxu0 0.0
        %2863 = vmatprep.subr.mxu0 0.0
        %2864 = vmatpush1.msra.mxu0 0.0
        %2865 = vmatprep.subr.mxu0 0.0
        %2866 = vmatpush1.msra.mxu0 0.0
        %2867 = vmatprep.subr.mxu0 0.0
        %2868 = vmatpush1.msra.mxu0 0.0
        %2869 = vmatprep.subr.mxu0 0.0
        %2870 = vmatpush1.msra.mxu0 0.0
        %2871 = vmatprep.subr.mxu0 0.0
        %2872 = vmatpush1.msra.mxu0 0.0
        %2873 = vmatprep.subr.mxu0 0.0
        %2874 = vmatpush1.msra.mxu0 0.0
        %2875 = vmatprep.subr.mxu0 0.0
        %2876 = vmatpush1.msra.mxu0 0.0
        %2877 = vmatprep.subr.mxu0 0.0
        %2878 = vmatpush1.msra.mxu0 0.0
        %2879 = vmatprep.subr.mxu0 0.0
        %2880 = vmatpush1.msra.mxu0 0.0
        %2881 = vmatprep.subr.mxu0 0.0
        %2882 = vmatpush1.msra.mxu0 0.0
        %2883 = vmatprep.subr.mxu0 0.0
        %2884 = vmatpush1.msra.mxu0 0.0
        %2885 = vmatprep.mubr.f32.mxu0 0.0
        %2886 = vmatmul.mubr.f32.gmra.mrb[0].mxu0 %v2819
        %v2887 = vpop.f32.mrb[0].mxu0
        %v2888 = vadd.f32 0.0, %v2887
        %v2889 = vpop.f32.mrb[0].mxu0
        %2890 = vdwg.mxu0
        %2891 = vst.msk [vmem:[%s567] sm:$0xf] %vm2290, %v2669
        %2892 = vst.msk [vmem:[%s567 + $0x10] sm:$0xf] %vm2290, %v2742
        %2893 = vst.msk [vmem:[%s567 + $0x20] sm:$0xf] %vm2290, %v2815
        %2894 = vst.msk [vmem:[%s567 + $0x30] sm:$0xf] %vm2290, %v2888
        %v2895 = vld [vmem:[%s567] sm:$0xff]
        %v2896 = vld [vmem:[%s567 + $0x10] sm:$0xff]
        %v2897 = vld [vmem:[%s567 + $0x20] sm:$0xff]
        %v2898 = vld [vmem:[%s567 + $0x30] sm:$0xff]
        %v2899 = vld [vmem:[#allocation12] sm:$0xff]
        %v2900 = vld [vmem:[%s9] sm:$0xff]
        %v2902 = vsel %vm1175, %v2895, 0
        %v2905 = vsel %vm1175, %v2896, 0
        %v2908 = vsel %vm1175, %v2897, 0
        %v2911 = vsel %vm1175, %v2898, 0
        %2913 = vmatprep.subr.mxu0 0.0
        %2914 = vmatpush1.msra.mxu0 %v2900
        %2915 = vmatprep.subr.mxu0 0.0
        %2916 = vmatpush1.msra.mxu0 0.0
        %2917 = vmatprep.subr.mxu0 0.0
        %2918 = vmatpush1.msra.mxu0 0.0
        %2919 = vmatprep.subr.mxu0 0.0
        %2920 = vmatpush1.msra.mxu0 0.0
        %2921 = vmatprep.subr.mxu0 0.0
        %2922 = vmatpush1.msra.mxu0 0.0
        %2923 = vmatprep.subr.mxu0 0.0
        %2924 = vmatpush1.msra.mxu0 0.0
        %2925 = vmatprep.subr.mxu0 0.0
        %2926 = vmatpush1.msra.mxu0 0.0
        %2927 = vmatprep.subr.mxu0 0.0
        %2928 = vmatpush1.msra.mxu0 0.0
        %2929 = vmatprep.subr.mxu0 0.0
        %2930 = vmatpush1.msra.mxu0 0.0
        %2931 = vmatprep.subr.mxu0 0.0
        %2932 = vmatpush1.msra.mxu0 0.0
        %2933 = vmatprep.subr.mxu0 0.0
        %2934 = vmatpush1.msra.mxu0 0.0
        %2935 = vmatprep.subr.mxu0 0.0
        %2936 = vmatpush1.msra.mxu0 0.0
        %2937 = vmatprep.subr.mxu0 0.0
        %2938 = vmatpush1.msra.mxu0 0.0
        %2939 = vmatprep.subr.mxu0 0.0
        %2940 = vmatpush1.msra.mxu0 0.0
        %2941 = vmatprep.subr.mxu0 0.0
        %2942 = vmatpush1.msra.mxu0 0.0
        %2943 = vmatprep.subr.mxu0 0.0
        %2944 = vmatpush1.msra.mxu0 0.0
        %2945 = vmatprep.subr.mxu0 0.0
        %2946 = vmatpush1.msra.mxu0 0.0
        %2947 = vmatprep.subr.mxu0 0.0
        %2948 = vmatpush1.msra.mxu0 0.0
        %2949 = vmatprep.subr.mxu0 0.0
        %2950 = vmatpush1.msra.mxu0 0.0
        %2951 = vmatprep.subr.mxu0 0.0
        %2952 = vmatpush1.msra.mxu0 0.0
        %2953 = vmatprep.subr.mxu0 0.0
        %2954 = vmatpush1.msra.mxu0 0.0
        %2955 = vmatprep.subr.mxu0 0.0
        %2956 = vmatpush1.msra.mxu0 0.0
        %2957 = vmatprep.subr.mxu0 0.0
        %2958 = vmatpush1.msra.mxu0 0.0
        %2959 = vmatprep.subr.mxu0 0.0
        %2960 = vmatpush1.msra.mxu0 0.0
        %2961 = vmatprep.subr.mxu0 0.0
        %2962 = vmatpush1.msra.mxu0 0.0
        %2963 = vmatprep.subr.mxu0 0.0
        %2964 = vmatpush1.msra.mxu0 0.0
        %2965 = vmatprep.subr.mxu0 0.0
        %2966 = vmatpush1.msra.mxu0 0.0
        %2967 = vmatprep.subr.mxu0 0.0
        %2968 = vmatpush1.msra.mxu0 0.0
        %2969 = vmatprep.subr.mxu0 0.0
        %2970 = vmatpush1.msra.mxu0 0.0
        %2971 = vmatprep.subr.mxu0 0.0
        %2972 = vmatpush1.msra.mxu0 0.0
        %2973 = vmatprep.subr.mxu0 0.0
        %2974 = vmatpush1.msra.mxu0 0.0
        %2975 = vmatprep.subr.mxu0 0.0
        %2976 = vmatpush1.msra.mxu0 0.0
        %2977 = vmatprep.mubr.f32.mxu0 0.0
        %2978 = vmatmul.mubr.f32.gmra.mrb[0].mxu0 %v2902
        %v2979 = vpop.f32.mrb[0].mxu0
        %v2980 = vadd.f32 0.0, %v2979
        %v2981 = vpop.f32.mrb[0].mxu0
        %2982 = vmatprep.mubr.f32.mxu0 0.0
        %2983 = vmatmul.mubr.f32.gmra.mrb[0].mxu0 %v2905
        %v2984 = vpop.f32.mrb[0].mxu0
        %v2985 = vadd.f32 0.0, %v2984
        %v2986 = vpop.f32.mrb[0].mxu0
        %2987 = vmatprep.mubr.f32.mxu0 0.0
        %2988 = vmatmul.mubr.f32.gmra.mrb[0].mxu0 %v2908
        %v2989 = vpop.f32.mrb[0].mxu0
        %v2990 = vadd.f32 0.0, %v2989
        %v2991 = vpop.f32.mrb[0].mxu0
        %2992 = vmatprep.mubr.f32.mxu0 0.0
        %2993 = vmatmul.mubr.f32.gmra.mrb[0].mxu0 %v2911
        %v2994 = vpop.f32.mrb[0].mxu0
        %v2995 = vadd.f32 0.0, %v2994
        %v2996 = vpop.f32.mrb[0].mxu0
        %2997 = vdwg.mxu0
        %2998 = vxpose.xlu0.b32.start [1/16] %v2980, 128
        %2999 = vxpose.xlu0.b32.cont [2/16] 0.0, 128
        %3000 = vxpose.xlu0.b32.cont [3/16] 0.0, 128
        %3001 = vxpose.xlu0.b32.cont [4/16] 0.0, 128
        %3002 = vxpose.xlu0.b32.cont [5/16] 0.0, 128
        %3003 = vxpose.xlu0.b32.cont [6/16] 0.0, 128
        %3004 = vxpose.xlu0.b32.cont [7/16] 0.0, 128
        %3005 = vxpose.xlu0.b32.cont [8/16] 0.0, 128
        %3006 = vxpose.xlu0.b32.cont [9/16] 0.0, 128
        %3007 = vxpose.xlu0.b32.cont [10/16] 0.0, 128
        %3008 = vxpose.xlu0.b32.cont [11/16] 0.0, 128
        %3009 = vxpose.xlu0.b32.cont [12/16] 0.0, 128
        %3010 = vxpose.xlu0.b32.cont [13/16] 0.0, 128
        %3011 = vxpose.xlu0.b32.cont [14/16] 0.0, 128
        %3012 = vxpose.xlu0.b32.cont [15/16] 0.0, 128
        %3013 = vxpose.xlu0.b32.end [16/16] 0.0, 128
        %v3014 = vpop.trf.xlu0
        %v3015 = vpop.trf.xlu0
        %v3016 = vpop.trf.xlu0
        %v3017 = vpop.trf.xlu0
        %v3018 = vpop.trf.xlu0
        %v3019 = vpop.trf.xlu0
        %v3020 = vpop.trf.xlu0
        %v3021 = vpop.trf.xlu0
        %v3022 = vpop.trf.xlu0
        %v3023 = vpop.trf.xlu0
        %v3024 = vpop.trf.xlu0
        %v3025 = vpop.trf.xlu0
        %v3026 = vpop.trf.xlu0
        %v3027 = vpop.trf.xlu0
        %v3028 = vpop.trf.xlu0
        %v3029 = vpop.trf.xlu0
        %3030 = vxpose.xlu0.b32.start [1/16] %v2985, 128
        %3031 = vxpose.xlu0.b32.cont [2/16] 0.0, 128
        %3032 = vxpose.xlu0.b32.cont [3/16] 0.0, 128
        %3033 = vxpose.xlu0.b32.cont [4/16] 0.0, 128
        %3034 = vxpose.xlu0.b32.cont [5/16] 0.0, 128
        %3035 = vxpose.xlu0.b32.cont [6/16] 0.0, 128
        %3036 = vxpose.xlu0.b32.cont [7/16] 0.0, 128
        %3037 = vxpose.xlu0.b32.cont [8/16] 0.0, 128
        %3038 = vxpose.xlu0.b32.cont [9/16] 0.0, 128
        %3039 = vxpose.xlu0.b32.cont [10/16] 0.0, 128
        %3040 = vxpose.xlu0.b32.cont [11/16] 0.0, 128
        %3041 = vxpose.xlu0.b32.cont [12/16] 0.0, 128
        %3042 = vxpose.xlu0.b32.cont [13/16] 0.0, 128
        %3043 = vxpose.xlu0.b32.cont [14/16] 0.0, 128
        %3044 = vxpose.xlu0.b32.cont [15/16] 0.0, 128
        %3045 = vxpose.xlu0.b32.end [16/16] 0.0, 128
        %v3046 = vpop.trf.xlu0
        %v3047 = vpop.trf.xlu0
        %v3048 = vpop.trf.xlu0
        %v3049 = vpop.trf.xlu0
        %v3050 = vpop.trf.xlu0
        %v3051 = vpop.trf.xlu0
        %v3052 = vpop.trf.xlu0
        %v3053 = vpop.trf.xlu0
        %v3054 = vpop.trf.xlu0
        %v3055 = vpop.trf.xlu0
        %v3056 = vpop.trf.xlu0
        %v3057 = vpop.trf.xlu0
        %v3058 = vpop.trf.xlu0
        %v3059 = vpop.trf.xlu0
        %v3060 = vpop.trf.xlu0
        %v3061 = vpop.trf.xlu0
        %3062 = vxpose.xlu0.b32.start [1/16] %v2990, 128
        %3063 = vxpose.xlu0.b32.cont [2/16] 0.0, 128
        %3064 = vxpose.xlu0.b32.cont [3/16] 0.0, 128
        %3065 = vxpose.xlu0.b32.cont [4/16] 0.0, 128
        %3066 = vxpose.xlu0.b32.cont [5/16] 0.0, 128
        %3067 = vxpose.xlu0.b32.cont [6/16] 0.0, 128
        %3068 = vxpose.xlu0.b32.cont [7/16] 0.0, 128
        %3069 = vxpose.xlu0.b32.cont [8/16] 0.0, 128
        %3070 = vxpose.xlu0.b32.cont [9/16] 0.0, 128
        %3071 = vxpose.xlu0.b32.cont [10/16] 0.0, 128
        %3072 = vxpose.xlu0.b32.cont [11/16] 0.0, 128
        %3073 = vxpose.xlu0.b32.cont [12/16] 0.0, 128
        %3074 = vxpose.xlu0.b32.cont [13/16] 0.0, 128
        %3075 = vxpose.xlu0.b32.cont [14/16] 0.0, 128
        %3076 = vxpose.xlu0.b32.cont [15/16] 0.0, 128
        %3077 = vxpose.xlu0.b32.end [16/16] 0.0, 128
        %v3078 = vpop.trf.xlu0
        %v3079 = vpop.trf.xlu0
        %v3080 = vpop.trf.xlu0
        %v3081 = vpop.trf.xlu0
        %v3082 = vpop.trf.xlu0
        %v3083 = vpop.trf.xlu0
        %v3084 = vpop.trf.xlu0
        %v3085 = vpop.trf.xlu0
        %v3086 = vpop.trf.xlu0
        %v3087 = vpop.trf.xlu0
        %v3088 = vpop.trf.xlu0
        %v3089 = vpop.trf.xlu0
        %v3090 = vpop.trf.xlu0
        %v3091 = vpop.trf.xlu0
        %v3092 = vpop.trf.xlu0
        %v3093 = vpop.trf.xlu0
        %3094 = vxpose.xlu0.b32.start [1/16] %v2995, 128
        %3095 = vxpose.xlu0.b32.cont [2/16] 0.0, 128
        %3096 = vxpose.xlu0.b32.cont [3/16] 0.0, 128
        %3097 = vxpose.xlu0.b32.cont [4/16] 0.0, 128
        %3098 = vxpose.xlu0.b32.cont [5/16] 0.0, 128
        %3099 = vxpose.xlu0.b32.cont [6/16] 0.0, 128
        %3100 = vxpose.xlu0.b32.cont [7/16] 0.0, 128
        %3101 = vxpose.xlu0.b32.cont [8/16] 0.0, 128
        %3102 = vxpose.xlu0.b32.cont [9/16] 0.0, 128
        %3103 = vxpose.xlu0.b32.cont [10/16] 0.0, 128
        %3104 = vxpose.xlu0.b32.cont [11/16] 0.0, 128
        %3105 = vxpose.xlu0.b32.cont [12/16] 0.0, 128
        %3106 = vxpose.xlu0.b32.cont [13/16] 0.0, 128
        %3107 = vxpose.xlu0.b32.cont [14/16] 0.0, 128
        %3108 = vxpose.xlu0.b32.cont [15/16] 0.0, 128
        %3109 = vxpose.xlu0.b32.end [16/16] 0.0, 128
        %v3110 = vpop.trf.xlu0
        %v3111 = vpop.trf.xlu0
        %v3112 = vpop.trf.xlu0
        %v3113 = vpop.trf.xlu0
        %v3114 = vpop.trf.xlu0
        %v3115 = vpop.trf.xlu0
        %v3116 = vpop.trf.xlu0
        %v3117 = vpop.trf.xlu0
        %v3118 = vpop.trf.xlu0
        %v3119 = vpop.trf.xlu0
        %v3120 = vpop.trf.xlu0
        %v3121 = vpop.trf.xlu0
        %v3122 = vpop.trf.xlu0
        %v3123 = vpop.trf.xlu0
        %v3124 = vpop.trf.xlu0
        %v3125 = vpop.trf.xlu0
        %v3127 = vsel %vm1175, %v3014, 0
        %v3130 = vsel %vm1175, %v3046, 0
        %v3133 = vsel %vm1175, %v3078, 0
        %v3136 = vsel %vm1175, %v3110, 0
        %3138 = vmatprep.subr.mxu0 0.0
        %3139 = vmatpush1.msra.mxu0 %v2899
        %3140 = vmatprep.subr.mxu0 0.0
        %3141 = vmatpush1.msra.mxu0 0.0
        %3142 = vmatprep.subr.mxu0 0.0
        %3143 = vmatpush1.msra.mxu0 0.0
        %3144 = vmatprep.subr.mxu0 0.0
        %3145 = vmatpush1.msra.mxu0 0.0
        %3146 = vmatprep.subr.mxu0 0.0
        %3147 = vmatpush1.msra.mxu0 0.0
        %3148 = vmatprep.subr.mxu0 0.0
        %3149 = vmatpush1.msra.mxu0 0.0
        %3150 = vmatprep.subr.mxu0 0.0
        %3151 = vmatpush1.msra.mxu0 0.0
        %3152 = vmatprep.subr.mxu0 0.0
        %3153 = vmatpush1.msra.mxu0 0.0
        %3154 = vmatprep.subr.mxu0 0.0
        %3155 = vmatpush1.msra.mxu0 0.0
        %3156 = vmatprep.subr.mxu0 0.0
        %3157 = vmatpush1.msra.mxu0 0.0
        %3158 = vmatprep.subr.mxu0 0.0
        %3159 = vmatpush1.msra.mxu0 0.0
        %3160 = vmatprep.subr.mxu0 0.0
        %3161 = vmatpush1.msra.mxu0 0.0
        %3162 = vmatprep.subr.mxu0 0.0
        %3163 = vmatpush1.msra.mxu0 0.0
        %3164 = vmatprep.subr.mxu0 0.0
        %3165 = vmatpush1.msra.mxu0 0.0
        %3166 = vmatprep.subr.mxu0 0.0
        %3167 = vmatpush1.msra.mxu0 0.0
        %3168 = vmatprep.subr.mxu0 0.0
        %3169 = vmatpush1.msra.mxu0 0.0
        %3170 = vmatprep.subr.mxu0 0.0
        %3171 = vmatpush1.msra.mxu0 0.0
        %3172 = vmatprep.subr.mxu0 0.0
        %3173 = vmatpush1.msra.mxu0 0.0
        %3174 = vmatprep.subr.mxu0 0.0
        %3175 = vmatpush1.msra.mxu0 0.0
        %3176 = vmatprep.subr.mxu0 0.0
        %3177 = vmatpush1.msra.mxu0 0.0
        %3178 = vmatprep.subr.mxu0 0.0
        %3179 = vmatpush1.msra.mxu0 0.0
        %3180 = vmatprep.subr.mxu0 0.0
        %3181 = vmatpush1.msra.mxu0 0.0
        %3182 = vmatprep.subr.mxu0 0.0
        %3183 = vmatpush1.msra.mxu0 0.0
        %3184 = vmatprep.subr.mxu0 0.0
        %3185 = vmatpush1.msra.mxu0 0.0
        %3186 = vmatprep.subr.mxu0 0.0
        %3187 = vmatpush1.msra.mxu0 0.0
        %3188 = vmatprep.subr.mxu0 0.0
        %3189 = vmatpush1.msra.mxu0 0.0
        %3190 = vmatprep.subr.mxu0 0.0
        %3191 = vmatpush1.msra.mxu0 0.0
        %3192 = vmatprep.subr.mxu0 0.0
        %3193 = vmatpush1.msra.mxu0 0.0
        %3194 = vmatprep.subr.mxu0 0.0
        %3195 = vmatpush1.msra.mxu0 0.0
        %3196 = vmatprep.subr.mxu0 0.0
        %3197 = vmatpush1.msra.mxu0 0.0
        %3198 = vmatprep.subr.mxu0 0.0
        %3199 = vmatpush1.msra.mxu0 0.0
        %3200 = vmatprep.subr.mxu0 0.0
        %3201 = vmatpush1.msra.mxu0 0.0
        %3202 = vmatprep.mubr.f32.mxu0 0.0
        %3203 = vmatmul.mubr.f32.gmra.mrb[0].mxu0 %v3127
        %v3204 = vpop.f32.mrb[0].mxu0
        %v3205 = vadd.f32 0.0, %v3204
        %v3206 = vpop.f32.mrb[0].mxu0
        %3207 = vmatprep.mubr.f32.mxu0 0.0
        %3208 = vmatmul.mubr.f32.gmra.mrb[0].mxu0 %v3130
        %v3209 = vpop.f32.mrb[0].mxu0
        %v3210 = vadd.f32 0.0, %v3209
        %v3211 = vpop.f32.mrb[0].mxu0
        %3212 = vmatprep.mubr.f32.mxu0 0.0
        %3213 = vmatmul.mubr.f32.gmra.mrb[0].mxu0 %v3133
        %v3214 = vpop.f32.mrb[0].mxu0
        %v3215 = vadd.f32 0.0, %v3214
        %v3216 = vpop.f32.mrb[0].mxu0
        %3217 = vmatprep.mubr.f32.mxu0 0.0
        %3218 = vmatmul.mubr.f32.gmra.mrb[0].mxu0 %v3136
        %v3219 = vpop.f32.mrb[0].mxu0
        %v3220 = vadd.f32 0.0, %v3219
        %v3221 = vpop.f32.mrb[0].mxu0
        %3222 = vdwg.mxu0
        %3223 = vxpose.xlu0.b32.start [1/16] %v3205, 128
        %3224 = vxpose.xlu0.b32.cont [2/16] 0.0, 128
        %3225 = vxpose.xlu0.b32.cont [3/16] 0.0, 128
        %3226 = vxpose.xlu0.b32.cont [4/16] 0.0, 128
        %3227 = vxpose.xlu0.b32.cont [5/16] 0.0, 128
        %3228 = vxpose.xlu0.b32.cont [6/16] 0.0, 128
        %3229 = vxpose.xlu0.b32.cont [7/16] 0.0, 128
        %3230 = vxpose.xlu0.b32.cont [8/16] 0.0, 128
        %3231 = vxpose.xlu0.b32.cont [9/16] 0.0, 128
        %3232 = vxpose.xlu0.b32.cont [10/16] 0.0, 128
        %3233 = vxpose.xlu0.b32.cont [11/16] 0.0, 128
        %3234 = vxpose.xlu0.b32.cont [12/16] 0.0, 128
        %3235 = vxpose.xlu0.b32.cont [13/16] 0.0, 128
        %3236 = vxpose.xlu0.b32.cont [14/16] 0.0, 128
        %3237 = vxpose.xlu0.b32.cont [15/16] 0.0, 128
        %3238 = vxpose.xlu0.b32.end [16/16] 0.0, 128
        %v3239 = vpop.trf.xlu0
        %v3240 = vpop.trf.xlu0
        %v3241 = vpop.trf.xlu0
        %v3242 = vpop.trf.xlu0
        %v3243 = vpop.trf.xlu0
        %v3244 = vpop.trf.xlu0
        %v3245 = vpop.trf.xlu0
        %v3246 = vpop.trf.xlu0
        %v3247 = vpop.trf.xlu0
        %v3248 = vpop.trf.xlu0
        %v3249 = vpop.trf.xlu0
        %v3250 = vpop.trf.xlu0
        %v3251 = vpop.trf.xlu0
        %v3252 = vpop.trf.xlu0
        %v3253 = vpop.trf.xlu0
        %v3254 = vpop.trf.xlu0
        %3255 = vxpose.xlu0.b32.start [1/16] %v3210, 128
        %3256 = vxpose.xlu0.b32.cont [2/16] 0.0, 128
        %3257 = vxpose.xlu0.b32.cont [3/16] 0.0, 128
        %3258 = vxpose.xlu0.b32.cont [4/16] 0.0, 128
        %3259 = vxpose.xlu0.b32.cont [5/16] 0.0, 128
        %3260 = vxpose.xlu0.b32.cont [6/16] 0.0, 128
        %3261 = vxpose.xlu0.b32.cont [7/16] 0.0, 128
        %3262 = vxpose.xlu0.b32.cont [8/16] 0.0, 128
        %3263 = vxpose.xlu0.b32.cont [9/16] 0.0, 128
        %3264 = vxpose.xlu0.b32.cont [10/16] 0.0, 128
        %3265 = vxpose.xlu0.b32.cont [11/16] 0.0, 128
        %3266 = vxpose.xlu0.b32.cont [12/16] 0.0, 128
        %3267 = vxpose.xlu0.b32.cont [13/16] 0.0, 128
        %3268 = vxpose.xlu0.b32.cont [14/16] 0.0, 128
        %3269 = vxpose.xlu0.b32.cont [15/16] 0.0, 128
        %3270 = vxpose.xlu0.b32.end [16/16] 0.0, 128
        %v3271 = vpop.trf.xlu0
        %v3272 = vpop.trf.xlu0
        %v3273 = vpop.trf.xlu0
        %v3274 = vpop.trf.xlu0
        %v3275 = vpop.trf.xlu0
        %v3276 = vpop.trf.xlu0
        %v3277 = vpop.trf.xlu0
        %v3278 = vpop.trf.xlu0
        %v3279 = vpop.trf.xlu0
        %v3280 = vpop.trf.xlu0
        %v3281 = vpop.trf.xlu0
        %v3282 = vpop.trf.xlu0
        %v3283 = vpop.trf.xlu0
        %v3284 = vpop.trf.xlu0
        %v3285 = vpop.trf.xlu0
        %v3286 = vpop.trf.xlu0
        %3287 = vxpose.xlu0.b32.start [1/16] %v3215, 128
        %3288 = vxpose.xlu0.b32.cont [2/16] 0.0, 128
        %3289 = vxpose.xlu0.b32.cont [3/16] 0.0, 128
        %3290 = vxpose.xlu0.b32.cont [4/16] 0.0, 128
        %3291 = vxpose.xlu0.b32.cont [5/16] 0.0, 128
        %3292 = vxpose.xlu0.b32.cont [6/16] 0.0, 128
        %3293 = vxpose.xlu0.b32.cont [7/16] 0.0, 128
        %3294 = vxpose.xlu0.b32.cont [8/16] 0.0, 128
        %3295 = vxpose.xlu0.b32.cont [9/16] 0.0, 128
        %3296 = vxpose.xlu0.b32.cont [10/16] 0.0, 128
        %3297 = vxpose.xlu0.b32.cont [11/16] 0.0, 128
        %3298 = vxpose.xlu0.b32.cont [12/16] 0.0, 128
        %3299 = vxpose.xlu0.b32.cont [13/16] 0.0, 128
        %3300 = vxpose.xlu0.b32.cont [14/16] 0.0, 128
        %3301 = vxpose.xlu0.b32.cont [15/16] 0.0, 128
        %3302 = vxpose.xlu0.b32.end [16/16] 0.0, 128
        %v3303 = vpop.trf.xlu0
        %v3304 = vpop.trf.xlu0
        %v3305 = vpop.trf.xlu0
        %v3306 = vpop.trf.xlu0
        %v3307 = vpop.trf.xlu0
        %v3308 = vpop.trf.xlu0
        %v3309 = vpop.trf.xlu0
        %v3310 = vpop.trf.xlu0
        %v3311 = vpop.trf.xlu0
        %v3312 = vpop.trf.xlu0
        %v3313 = vpop.trf.xlu0
        %v3314 = vpop.trf.xlu0
        %v3315 = vpop.trf.xlu0
        %v3316 = vpop.trf.xlu0
        %v3317 = vpop.trf.xlu0
        %v3318 = vpop.trf.xlu0
        %3319 = vxpose.xlu0.b32.start [1/16] %v3220, 128
        %3320 = vxpose.xlu0.b32.cont [2/16] 0.0, 128
        %3321 = vxpose.xlu0.b32.cont [3/16] 0.0, 128
        %3322 = vxpose.xlu0.b32.cont [4/16] 0.0, 128
        %3323 = vxpose.xlu0.b32.cont [5/16] 0.0, 128
        %3324 = vxpose.xlu0.b32.cont [6/16] 0.0, 128
        %3325 = vxpose.xlu0.b32.cont [7/16] 0.0, 128
        %3326 = vxpose.xlu0.b32.cont [8/16] 0.0, 128
        %3327 = vxpose.xlu0.b32.cont [9/16] 0.0, 128
        %3328 = vxpose.xlu0.b32.cont [10/16] 0.0, 128
        %3329 = vxpose.xlu0.b32.cont [11/16] 0.0, 128
        %3330 = vxpose.xlu0.b32.cont [12/16] 0.0, 128
        %3331 = vxpose.xlu0.b32.cont [13/16] 0.0, 128
        %3332 = vxpose.xlu0.b32.cont [14/16] 0.0, 128
        %3333 = vxpose.xlu0.b32.cont [15/16] 0.0, 128
        %3334 = vxpose.xlu0.b32.end [16/16] 0.0, 128
        %v3335 = vpop.trf.xlu0
        %v3336 = vpop.trf.xlu0
        %v3337 = vpop.trf.xlu0
        %v3338 = vpop.trf.xlu0
        %v3339 = vpop.trf.xlu0
        %v3340 = vpop.trf.xlu0
        %v3341 = vpop.trf.xlu0
        %v3342 = vpop.trf.xlu0
        %v3343 = vpop.trf.xlu0
        %v3344 = vpop.trf.xlu0
        %v3345 = vpop.trf.xlu0
        %v3346 = vpop.trf.xlu0
        %v3347 = vpop.trf.xlu0
        %v3348 = vpop.trf.xlu0
        %v3349 = vpop.trf.xlu0
        %v3350 = vpop.trf.xlu0
        %3351 = vst.msk [vmem:[%s567] sm:$0xff] %vm1175, %v3239
        %3352 = vst.msk [vmem:[%s567 + $0x10] sm:$0xff] %vm1175, %v3271
        %3353 = vst.msk [vmem:[%s567 + $0x20] sm:$0xff] %vm1175, %v3303
        %3354 = vst.msk [vmem:[%s567 + $0x30] sm:$0xff] %vm1175, %v3335
        %v3355 = vld [vmem:[%s567] sm:$0xff]
        %v3356 = vld [vmem:[%s567 + $0x8] sm:$0xff]
        %v3357 = vld [vmem:[%s567 + $0x10] sm:$0xff]
        %v3358 = vld [vmem:[%s567 + $0x18] sm:$0xff]
        %v3359 = vld [vmem:[%s567 + $0x20] sm:$0xff]
        %v3360 = vld [vmem:[%s567 + $0x28] sm:$0xff]
        %v3361 = vld [vmem:[%s567 + $0x30] sm:$0xff]
        %v3362 = vld [vmem:[%s567 + $0x38] sm:$0xff]
        %v3363 = vld [vmem:[#allocation7] sm:$0xff]
        %v3364 = vld [vmem:[#allocation7 + $0x8] sm:$0xff]
        %v3365 = vld [vmem:[%s5] sm:$0xff]
        %v3366 = vld [vmem:[%s5 + $0x8] sm:$0xff]
        %v3368 = vsel %vm582, %v3355, 0
        %v3371 = vsel %vm582, %v3356, 0
        %v3374 = vsel %vm582, %v3357, 0
        %v3377 = vsel %vm582, %v3358, 0
        %v3380 = vsel %vm582, %v3359, 0
        %v3383 = vsel %vm582, %v3360, 0
        %v3386 = vsel %vm582, %v3361, 0
        %v3389 = vsel %vm582, %v3362, 0
        %3391 = vmatprep.subr.mxu0 0.0
        %3392 = vmatpush1.msra.mxu0 %v3365
        %3393 = vmatprep.subr.mxu0 0.0
        %3394 = vmatpush1.msra.mxu0 %v3366
        %3395 = vmatprep.subr.mxu0 0.0
        %3396 = vmatpush1.msra.mxu0 0.0
        %3397 = vmatprep.subr.mxu0 0.0
        %3398 = vmatpush1.msra.mxu0 0.0
        %3399 = vmatprep.subr.mxu0 0.0
        %3400 = vmatpush1.msra.mxu0 0.0
        %3401 = vmatprep.subr.mxu0 0.0
        %3402 = vmatpush1.msra.mxu0 0.0
        %3403 = vmatprep.subr.mxu0 0.0
        %3404 = vmatpush1.msra.mxu0 0.0
        %3405 = vmatprep.subr.mxu0 0.0
        %3406 = vmatpush1.msra.mxu0 0.0
        %3407 = vmatprep.subr.mxu0 0.0
        %3408 = vmatpush1.msra.mxu0 0.0
        %3409 = vmatprep.subr.mxu0 0.0
        %3410 = vmatpush1.msra.mxu0 0.0
        %3411 = vmatprep.subr.mxu0 0.0
        %3412 = vmatpush1.msra.mxu0 0.0
        %3413 = vmatprep.subr.mxu0 0.0
        %3414 = vmatpush1.msra.mxu0 0.0
        %3415 = vmatprep.subr.mxu0 0.0
        %3416 = vmatpush1.msra.mxu0 0.0
        %3417 = vmatprep.subr.mxu0 0.0
        %3418 = vmatpush1.msra.mxu0 0.0
        %3419 = vmatprep.subr.mxu0 0.0
        %3420 = vmatpush1.msra.mxu0 0.0
        %3421 = vmatprep.subr.mxu0 0.0
        %3422 = vmatpush1.msra.mxu0 0.0
        %3423 = vmatprep.subr.mxu0 0.0
        %3424 = vmatpush1.msra.mxu0 0.0
        %3425 = vmatprep.subr.mxu0 0.0
        %3426 = vmatpush1.msra.mxu0 0.0
        %3427 = vmatprep.subr.mxu0 0.0
        %3428 = vmatpush1.msra.mxu0 0.0
        %3429 = vmatprep.subr.mxu0 0.0
        %3430 = vmatpush1.msra.mxu0 0.0
        %3431 = vmatprep.subr.mxu0 0.0
        %3432 = vmatpush1.msra.mxu0 0.0
        %3433 = vmatprep.subr.mxu0 0.0
        %3434 = vmatpush1.msra.mxu0 0.0
        %3435 = vmatprep.subr.mxu0 0.0
        %3436 = vmatpush1.msra.mxu0 0.0
        %3437 = vmatprep.subr.mxu0 0.0
        %3438 = vmatpush1.msra.mxu0 0.0
        %3439 = vmatprep.subr.mxu0 0.0
        %3440 = vmatpush1.msra.mxu0 0.0
        %3441 = vmatprep.subr.mxu0 0.0
        %3442 = vmatpush1.msra.mxu0 0.0
        %3443 = vmatprep.subr.mxu0 0.0
        %3444 = vmatpush1.msra.mxu0 0.0
        %3445 = vmatprep.subr.mxu0 0.0
        %3446 = vmatpush1.msra.mxu0 0.0
        %3447 = vmatprep.subr.mxu0 0.0
        %3448 = vmatpush1.msra.mxu0 0.0
        %3449 = vmatprep.subr.mxu0 0.0
        %3450 = vmatpush1.msra.mxu0 0.0
        %3451 = vmatprep.subr.mxu0 0.0
        %3452 = vmatpush1.msra.mxu0 0.0
        %3453 = vmatprep.subr.mxu0 0.0
        %3454 = vmatpush1.msra.mxu0 0.0
        %3455 = vmatprep.mubr.f32.mxu0 0.0
        %3456 = vmatmul.mubr.f32.gmra.mrb[0].mxu0 %v3368
        %v3457 = vpop.f32.mrb[0].mxu0
        %v3458 = vadd.f32 0.0, %v3457
        %v3459 = vpop.f32.mrb[0].mxu0
        %3460 = vmatprep.mubr.f32.mxu0 0.0
        %3461 = vmatmul.mubr.f32.gmra.mrb[0].mxu0 %v3371
        %v3462 = vpop.f32.mrb[0].mxu0
        %v3463 = vadd.f32 0.0, %v3462
        %v3464 = vpop.f32.mrb[0].mxu0
        %3465 = vmatprep.mubr.f32.mxu0 0.0
        %3466 = vmatmul.mubr.f32.gmra.mrb[0].mxu0 %v3374
        %v3467 = vpop.f32.mrb[0].mxu0
        %v3468 = vadd.f32 0.0, %v3467
        %v3469 = vpop.f32.mrb[0].mxu0
        %3470 = vmatprep.mubr.f32.mxu0 0.0
        %3471 = vmatmul.mubr.f32.gmra.mrb[0].mxu0 %v3377
        %v3472 = vpop.f32.mrb[0].mxu0
        %v3473 = vadd.f32 0.0, %v3472
        %v3474 = vpop.f32.mrb[0].mxu0
        %3475 = vmatprep.mubr.f32.mxu0 0.0
        %3476 = vmatmul.mubr.f32.gmra.mrb[0].mxu0 %v3380
        %v3477 = vpop.f32.mrb[0].mxu0
        %v3478 = vadd.f32 0.0, %v3477
        %v3479 = vpop.f32.mrb[0].mxu0
        %3480 = vmatprep.mubr.f32.mxu0 0.0
        %3481 = vmatmul.mubr.f32.gmra.mrb[0].mxu0 %v3383
        %v3482 = vpop.f32.mrb[0].mxu0
        %v3483 = vadd.f32 0.0, %v3482
        %v3484 = vpop.f32.mrb[0].mxu0
        %3485 = vmatprep.mubr.f32.mxu0 0.0
        %3486 = vmatmul.mubr.f32.gmra.mrb[0].mxu0 %v3386
        %v3487 = vpop.f32.mrb[0].mxu0
        %v3488 = vadd.f32 0.0, %v3487
        %v3489 = vpop.f32.mrb[0].mxu0
        %3490 = vmatprep.mubr.f32.mxu0 0.0
        %3491 = vmatmul.mubr.f32.gmra.mrb[0].mxu0 %v3389
        %v3492 = vpop.f32.mrb[0].mxu0
        %v3493 = vadd.f32 0.0, %v3492
        %v3494 = vpop.f32.mrb[0].mxu0
        %3495 = vdwg.mxu0
        %3496 = vxpose.xlu0.b32.start [1/16] %v3458, 128
        %3497 = vxpose.xlu0.b32.cont [2/16] %v3463, 128
        %3498 = vxpose.xlu0.b32.cont [3/16] 0.0, 128
        %3499 = vxpose.xlu0.b32.cont [4/16] 0.0, 128
        %3500 = vxpose.xlu0.b32.cont [5/16] 0.0, 128
        %3501 = vxpose.xlu0.b32.cont [6/16] 0.0, 128
        %3502 = vxpose.xlu0.b32.cont [7/16] 0.0, 128
        %3503 = vxpose.xlu0.b32.cont [8/16] 0.0, 128
        %3504 = vxpose.xlu0.b32.cont [9/16] 0.0, 128
        %3505 = vxpose.xlu0.b32.cont [10/16] 0.0, 128
        %3506 = vxpose.xlu0.b32.cont [11/16] 0.0, 128
        %3507 = vxpose.xlu0.b32.cont [12/16] 0.0, 128
        %3508 = vxpose.xlu0.b32.cont [13/16] 0.0, 128
        %3509 = vxpose.xlu0.b32.cont [14/16] 0.0, 128
        %3510 = vxpose.xlu0.b32.cont [15/16] 0.0, 128
        %3511 = vxpose.xlu0.b32.end [16/16] 0.0, 128
        %v3512 = vpop.trf.xlu0
        %v3513 = vpop.trf.xlu0
        %v3514 = vpop.trf.xlu0
        %v3515 = vpop.trf.xlu0
        %v3516 = vpop.trf.xlu0
        %v3517 = vpop.trf.xlu0
        %v3518 = vpop.trf.xlu0
        %v3519 = vpop.trf.xlu0
        %v3520 = vpop.trf.xlu0
        %v3521 = vpop.trf.xlu0
        %v3522 = vpop.trf.xlu0
        %v3523 = vpop.trf.xlu0
        %v3524 = vpop.trf.xlu0
        %v3525 = vpop.trf.xlu0
        %v3526 = vpop.trf.xlu0
        %v3527 = vpop.trf.xlu0
        %3528 = vxpose.xlu0.b32.start [1/16] %v3468, 128
        %3529 = vxpose.xlu0.b32.cont [2/16] %v3473, 128
        %3530 = vxpose.xlu0.b32.cont [3/16] 0.0, 128
        %3531 = vxpose.xlu0.b32.cont [4/16] 0.0, 128
        %3532 = vxpose.xlu0.b32.cont [5/16] 0.0, 128
        %3533 = vxpose.xlu0.b32.cont [6/16] 0.0, 128
        %3534 = vxpose.xlu0.b32.cont [7/16] 0.0, 128
        %3535 = vxpose.xlu0.b32.cont [8/16] 0.0, 128
        %3536 = vxpose.xlu0.b32.cont [9/16] 0.0, 128
        %3537 = vxpose.xlu0.b32.cont [10/16] 0.0, 128
        %3538 = vxpose.xlu0.b32.cont [11/16] 0.0, 128
        %3539 = vxpose.xlu0.b32.cont [12/16] 0.0, 128
        %3540 = vxpose.xlu0.b32.cont [13/16] 0.0, 128
        %3541 = vxpose.xlu0.b32.cont [14/16] 0.0, 128
        %3542 = vxpose.xlu0.b32.cont [15/16] 0.0, 128
        %3543 = vxpose.xlu0.b32.end [16/16] 0.0, 128
        %v3544 = vpop.trf.xlu0
        %v3545 = vpop.trf.xlu0
        %v3546 = vpop.trf.xlu0
        %v3547 = vpop.trf.xlu0
        %v3548 = vpop.trf.xlu0
        %v3549 = vpop.trf.xlu0
        %v3550 = vpop.trf.xlu0
        %v3551 = vpop.trf.xlu0
        %v3552 = vpop.trf.xlu0
        %v3553 = vpop.trf.xlu0
        %v3554 = vpop.trf.xlu0
        %v3555 = vpop.trf.xlu0
        %v3556 = vpop.trf.xlu0
        %v3557 = vpop.trf.xlu0
        %v3558 = vpop.trf.xlu0
        %v3559 = vpop.trf.xlu0
        %3560 = vxpose.xlu0.b32.start [1/16] %v3478, 128
        %3561 = vxpose.xlu0.b32.cont [2/16] %v3483, 128
        %3562 = vxpose.xlu0.b32.cont [3/16] 0.0, 128
        %3563 = vxpose.xlu0.b32.cont [4/16] 0.0, 128
        %3564 = vxpose.xlu0.b32.cont [5/16] 0.0, 128
        %3565 = vxpose.xlu0.b32.cont [6/16] 0.0, 128
        %3566 = vxpose.xlu0.b32.cont [7/16] 0.0, 128
        %3567 = vxpose.xlu0.b32.cont [8/16] 0.0, 128
        %3568 = vxpose.xlu0.b32.cont [9/16] 0.0, 128
        %3569 = vxpose.xlu0.b32.cont [10/16] 0.0, 128
        %3570 = vxpose.xlu0.b32.cont [11/16] 0.0, 128
        %3571 = vxpose.xlu0.b32.cont [12/16] 0.0, 128
        %3572 = vxpose.xlu0.b32.cont [13/16] 0.0, 128
        %3573 = vxpose.xlu0.b32.cont [14/16] 0.0, 128
        %3574 = vxpose.xlu0.b32.cont [15/16] 0.0, 128
        %3575 = vxpose.xlu0.b32.end [16/16] 0.0, 128
        %v3576 = vpop.trf.xlu0
        %v3577 = vpop.trf.xlu0
        %v3578 = vpop.trf.xlu0
        %v3579 = vpop.trf.xlu0
        %v3580 = vpop.trf.xlu0
        %v3581 = vpop.trf.xlu0
        %v3582 = vpop.trf.xlu0
        %v3583 = vpop.trf.xlu0
        %v3584 = vpop.trf.xlu0
        %v3585 = vpop.trf.xlu0
        %v3586 = vpop.trf.xlu0
        %v3587 = vpop.trf.xlu0
        %v3588 = vpop.trf.xlu0
        %v3589 = vpop.trf.xlu0
        %v3590 = vpop.trf.xlu0
        %v3591 = vpop.trf.xlu0
        %3592 = vxpose.xlu0.b32.start [1/16] %v3488, 128
        %3593 = vxpose.xlu0.b32.cont [2/16] %v3493, 128
        %3594 = vxpose.xlu0.b32.cont [3/16] 0.0, 128
        %3595 = vxpose.xlu0.b32.cont [4/16] 0.0, 128
        %3596 = vxpose.xlu0.b32.cont [5/16] 0.0, 128
        %3597 = vxpose.xlu0.b32.cont [6/16] 0.0, 128
        %3598 = vxpose.xlu0.b32.cont [7/16] 0.0, 128
        %3599 = vxpose.xlu0.b32.cont [8/16] 0.0, 128
        %3600 = vxpose.xlu0.b32.cont [9/16] 0.0, 128
        %3601 = vxpose.xlu0.b32.cont [10/16] 0.0, 128
        %3602 = vxpose.xlu0.b32.cont [11/16] 0.0, 128
        %3603 = vxpose.xlu0.b32.cont [12/16] 0.0, 128
        %3604 = vxpose.xlu0.b32.cont [13/16] 0.0, 128
        %3605 = vxpose.xlu0.b32.cont [14/16] 0.0, 128
        %3606 = vxpose.xlu0.b32.cont [15/16] 0.0, 128
        %3607 = vxpose.xlu0.b32.end [16/16] 0.0, 128
        %v3608 = vpop.trf.xlu0
        %v3609 = vpop.trf.xlu0
        %v3610 = vpop.trf.xlu0
        %v3611 = vpop.trf.xlu0
        %v3612 = vpop.trf.xlu0
        %v3613 = vpop.trf.xlu0
        %v3614 = vpop.trf.xlu0
        %v3615 = vpop.trf.xlu0
        %v3616 = vpop.trf.xlu0
        %v3617 = vpop.trf.xlu0
        %v3618 = vpop.trf.xlu0
        %v3619 = vpop.trf.xlu0
        %v3620 = vpop.trf.xlu0
        %v3621 = vpop.trf.xlu0
        %v3622 = vpop.trf.xlu0
        %v3623 = vpop.trf.xlu0
        %v3625 = vsel %vm582, %v3512, 0
        %v3628 = vsel %vm582, %v3513, 0
        %v3631 = vsel %vm582, %v3544, 0
        %v3634 = vsel %vm582, %v3545, 0
        %v3637 = vsel %vm582, %v3576, 0
        %v3640 = vsel %vm582, %v3577, 0
        %v3643 = vsel %vm582, %v3608, 0
        %v3646 = vsel %vm582, %v3609, 0
        %3648 = vmatprep.subr.mxu0 0.0
        %3649 = vmatpush1.msra.mxu0 %v3363
        %3650 = vmatprep.subr.mxu0 0.0
        %3651 = vmatpush1.msra.mxu0 %v3364
        %3652 = vmatprep.subr.mxu0 0.0
        %3653 = vmatpush1.msra.mxu0 0.0
        %3654 = vmatprep.subr.mxu0 0.0
        %3655 = vmatpush1.msra.mxu0 0.0
        %3656 = vmatprep.subr.mxu0 0.0
        %3657 = vmatpush1.msra.mxu0 0.0
        %3658 = vmatprep.subr.mxu0 0.0
        %3659 = vmatpush1.msra.mxu0 0.0
        %3660 = vmatprep.subr.mxu0 0.0
        %3661 = vmatpush1.msra.mxu0 0.0
        %3662 = vmatprep.subr.mxu0 0.0
        %3663 = vmatpush1.msra.mxu0 0.0
        %3664 = vmatprep.subr.mxu0 0.0
        %3665 = vmatpush1.msra.mxu0 0.0
        %3666 = vmatprep.subr.mxu0 0.0
        %3667 = vmatpush1.msra.mxu0 0.0
        %3668 = vmatprep.subr.mxu0 0.0
        %3669 = vmatpush1.msra.mxu0 0.0
        %3670 = vmatprep.subr.mxu0 0.0
        %3671 = vmatpush1.msra.mxu0 0.0
        %3672 = vmatprep.subr.mxu0 0.0
        %3673 = vmatpush1.msra.mxu0 0.0
        %3674 = vmatprep.subr.mxu0 0.0
        %3675 = vmatpush1.msra.mxu0 0.0
        %3676 = vmatprep.subr.mxu0 0.0
        %3677 = vmatpush1.msra.mxu0 0.0
        %3678 = vmatprep.subr.mxu0 0.0
        %3679 = vmatpush1.msra.mxu0 0.0
        %3680 = vmatprep.subr.mxu0 0.0
        %3681 = vmatpush1.msra.mxu0 0.0
        %3682 = vmatprep.subr.mxu0 0.0
        %3683 = vmatpush1.msra.mxu0 0.0
        %3684 = vmatprep.subr.mxu0 0.0
        %3685 = vmatpush1.msra.mxu0 0.0
        %3686 = vmatprep.subr.mxu0 0.0
        %3687 = vmatpush1.msra.mxu0 0.0
        %3688 = vmatprep.subr.mxu0 0.0
        %3689 = vmatpush1.msra.mxu0 0.0
        %3690 = vmatprep.subr.mxu0 0.0
        %3691 = vmatpush1.msra.mxu0 0.0
        %3692 = vmatprep.subr.mxu0 0.0
        %3693 = vmatpush1.msra.mxu0 0.0
        %3694 = vmatprep.subr.mxu0 0.0
        %3695 = vmatpush1.msra.mxu0 0.0
        %3696 = vmatprep.subr.mxu0 0.0
        %3697 = vmatpush1.msra.mxu0 0.0
        %3698 = vmatprep.subr.mxu0 0.0
        %3699 = vmatpush1.msra.mxu0 0.0
        %3700 = vmatprep.subr.mxu0 0.0
        %3701 = vmatpush1.msra.mxu0 0.0
        %3702 = vmatprep.subr.mxu0 0.0
        %3703 = vmatpush1.msra.mxu0 0.0
        %3704 = vmatprep.subr.mxu0 0.0
        %3705 = vmatpush1.msra.mxu0 0.0
        %3706 = vmatprep.subr.mxu0 0.0
        %3707 = vmatpush1.msra.mxu0 0.0
        %3708 = vmatprep.subr.mxu0 0.0
        %3709 = vmatpush1.msra.mxu0 0.0
        %3710 = vmatprep.subr.mxu0 0.0
        %3711 = vmatpush1.msra.mxu0 0.0
        %3712 = vmatprep.mubr.f32.mxu0 0.0
        %3713 = vmatmul.mubr.f32.gmra.mrb[0].mxu0 %v3625
        %v3714 = vpop.f32.mrb[0].mxu0
        %v3715 = vadd.f32 0.0, %v3714
        %v3716 = vpop.f32.mrb[0].mxu0
        %3717 = vmatprep.mubr.f32.mxu0 0.0
        %3718 = vmatmul.mubr.f32.gmra.mrb[0].mxu0 %v3628
        %v3719 = vpop.f32.mrb[0].mxu0
        %v3720 = vadd.f32 0.0, %v3719
        %v3721 = vpop.f32.mrb[0].mxu0
        %3722 = vmatprep.mubr.f32.mxu0 0.0
        %3723 = vmatmul.mubr.f32.gmra.mrb[0].mxu0 %v3631
        %v3724 = vpop.f32.mrb[0].mxu0
        %v3725 = vadd.f32 0.0, %v3724
        %v3726 = vpop.f32.mrb[0].mxu0
        %3727 = vmatprep.mubr.f32.mxu0 0.0
        %3728 = vmatmul.mubr.f32.gmra.mrb[0].mxu0 %v3634
        %v3729 = vpop.f32.mrb[0].mxu0
        %v3730 = vadd.f32 0.0, %v3729
        %v3731 = vpop.f32.mrb[0].mxu0
        %3732 = vmatprep.mubr.f32.mxu0 0.0
        %3733 = vmatmul.mubr.f32.gmra.mrb[0].mxu0 %v3637
        %v3734 = vpop.f32.mrb[0].mxu0
        %v3735 = vadd.f32 0.0, %v3734
        %v3736 = vpop.f32.mrb[0].mxu0
        %3737 = vmatprep.mubr.f32.mxu0 0.0
        %3738 = vmatmul.mubr.f32.gmra.mrb[0].mxu0 %v3640
        %v3739 = vpop.f32.mrb[0].mxu0
        %v3740 = vadd.f32 0.0, %v3739
        %v3741 = vpop.f32.mrb[0].mxu0
        %3742 = vmatprep.mubr.f32.mxu0 0.0
        %3743 = vmatmul.mubr.f32.gmra.mrb[0].mxu0 %v3643
        %v3744 = vpop.f32.mrb[0].mxu0
        %v3745 = vadd.f32 0.0, %v3744
        %v3746 = vpop.f32.mrb[0].mxu0
        %3747 = vmatprep.mubr.f32.mxu0 0.0
        %3748 = vmatmul.mubr.f32.gmra.mrb[0].mxu0 %v3646
        %v3749 = vpop.f32.mrb[0].mxu0
        %v3750 = vadd.f32 0.0, %v3749
        %v3751 = vpop.f32.mrb[0].mxu0
        %3752 = vdwg.mxu0
        %3753 = vxpose.xlu0.b32.start [1/16] %v3715, 128
        %3754 = vxpose.xlu0.b32.cont [2/16] %v3720, 128
        %3755 = vxpose.xlu0.b32.cont [3/16] 0.0, 128
        %3756 = vxpose.xlu0.b32.cont [4/16] 0.0, 128
        %3757 = vxpose.xlu0.b32.cont [5/16] 0.0, 128
        %3758 = vxpose.xlu0.b32.cont [6/16] 0.0, 128
        %3759 = vxpose.xlu0.b32.cont [7/16] 0.0, 128
        %3760 = vxpose.xlu0.b32.cont [8/16] 0.0, 128
        %3761 = vxpose.xlu0.b32.cont [9/16] 0.0, 128
        %3762 = vxpose.xlu0.b32.cont [10/16] 0.0, 128
        %3763 = vxpose.xlu0.b32.cont [11/16] 0.0, 128
        %3764 = vxpose.xlu0.b32.cont [12/16] 0.0, 128
        %3765 = vxpose.xlu0.b32.cont [13/16] 0.0, 128
        %3766 = vxpose.xlu0.b32.cont [14/16] 0.0, 128
        %3767 = vxpose.xlu0.b32.cont [15/16] 0.0, 128
        %3768 = vxpose.xlu0.b32.end [16/16] 0.0, 128
        %v3769 = vpop.trf.xlu0
        %v3770 = vpop.trf.xlu0
        %v3771 = vpop.trf.xlu0
        %v3772 = vpop.trf.xlu0
        %v3773 = vpop.trf.xlu0
        %v3774 = vpop.trf.xlu0
        %v3775 = vpop.trf.xlu0
        %v3776 = vpop.trf.xlu0
        %v3777 = vpop.trf.xlu0
        %v3778 = vpop.trf.xlu0
        %v3779 = vpop.trf.xlu0
        %v3780 = vpop.trf.xlu0
        %v3781 = vpop.trf.xlu0
        %v3782 = vpop.trf.xlu0
        %v3783 = vpop.trf.xlu0
        %v3784 = vpop.trf.xlu0
        %3785 = vxpose.xlu0.b32.start [1/16] %v3725, 128
        %3786 = vxpose.xlu0.b32.cont [2/16] %v3730, 128
        %3787 = vxpose.xlu0.b32.cont [3/16] 0.0, 128
        %3788 = vxpose.xlu0.b32.cont [4/16] 0.0, 128
        %3789 = vxpose.xlu0.b32.cont [5/16] 0.0, 128
        %3790 = vxpose.xlu0.b32.cont [6/16] 0.0, 128
        %3791 = vxpose.xlu0.b32.cont [7/16] 0.0, 128
        %3792 = vxpose.xlu0.b32.cont [8/16] 0.0, 128
        %3793 = vxpose.xlu0.b32.cont [9/16] 0.0, 128
        %3794 = vxpose.xlu0.b32.cont [10/16] 0.0, 128
        %3795 = vxpose.xlu0.b32.cont [11/16] 0.0, 128
        %3796 = vxpose.xlu0.b32.cont [12/16] 0.0, 128
        %3797 = vxpose.xlu0.b32.cont [13/16] 0.0, 128
        %3798 = vxpose.xlu0.b32.cont [14/16] 0.0, 128
        %3799 = vxpose.xlu0.b32.cont [15/16] 0.0, 128
        %3800 = vxpose.xlu0.b32.end [16/16] 0.0, 128
        %v3801 = vpop.trf.xlu0
        %v3802 = vpop.trf.xlu0
        %v3803 = vpop.trf.xlu0
        %v3804 = vpop.trf.xlu0
        %v3805 = vpop.trf.xlu0
        %v3806 = vpop.trf.xlu0
        %v3807 = vpop.trf.xlu0
        %v3808 = vpop.trf.xlu0
        %v3809 = vpop.trf.xlu0
        %v3810 = vpop.trf.xlu0
        %v3811 = vpop.trf.xlu0
        %v3812 = vpop.trf.xlu0
        %v3813 = vpop.trf.xlu0
        %v3814 = vpop.trf.xlu0
        %v3815 = vpop.trf.xlu0
        %v3816 = vpop.trf.xlu0
        %3817 = vxpose.xlu0.b32.start [1/16] %v3735, 128
        %3818 = vxpose.xlu0.b32.cont [2/16] %v3740, 128
        %3819 = vxpose.xlu0.b32.cont [3/16] 0.0, 128
        %3820 = vxpose.xlu0.b32.cont [4/16] 0.0, 128
        %3821 = vxpose.xlu0.b32.cont [5/16] 0.0, 128
        %3822 = vxpose.xlu0.b32.cont [6/16] 0.0, 128
        %3823 = vxpose.xlu0.b32.cont [7/16] 0.0, 128
        %3824 = vxpose.xlu0.b32.cont [8/16] 0.0, 128
        %3825 = vxpose.xlu0.b32.cont [9/16] 0.0, 128
        %3826 = vxpose.xlu0.b32.cont [10/16] 0.0, 128
        %3827 = vxpose.xlu0.b32.cont [11/16] 0.0, 128
        %3828 = vxpose.xlu0.b32.cont [12/16] 0.0, 128
        %3829 = vxpose.xlu0.b32.cont [13/16] 0.0, 128
        %3830 = vxpose.xlu0.b32.cont [14/16] 0.0, 128
        %3831 = vxpose.xlu0.b32.cont [15/16] 0.0, 128
        %3832 = vxpose.xlu0.b32.end [16/16] 0.0, 128
        %v3833 = vpop.trf.xlu0
        %v3834 = vpop.trf.xlu0
        %v3835 = vpop.trf.xlu0
        %v3836 = vpop.trf.xlu0
        %v3837 = vpop.trf.xlu0
        %v3838 = vpop.trf.xlu0
        %v3839 = vpop.trf.xlu0
        %v3840 = vpop.trf.xlu0
        %v3841 = vpop.trf.xlu0
        %v3842 = vpop.trf.xlu0
        %v3843 = vpop.trf.xlu0
        %v3844 = vpop.trf.xlu0
        %v3845 = vpop.trf.xlu0
        %v3846 = vpop.trf.xlu0
        %v3847 = vpop.trf.xlu0
        %v3848 = vpop.trf.xlu0
        %3849 = vxpose.xlu0.b32.start [1/16] %v3745, 128
        %3850 = vxpose.xlu0.b32.cont [2/16] %v3750, 128
        %3851 = vxpose.xlu0.b32.cont [3/16] 0.0, 128
        %3852 = vxpose.xlu0.b32.cont [4/16] 0.0, 128
        %3853 = vxpose.xlu0.b32.cont [5/16] 0.0, 128
        %3854 = vxpose.xlu0.b32.cont [6/16] 0.0, 128
        %3855 = vxpose.xlu0.b32.cont [7/16] 0.0, 128
        %3856 = vxpose.xlu0.b32.cont [8/16] 0.0, 128
        %3857 = vxpose.xlu0.b32.cont [9/16] 0.0, 128
        %3858 = vxpose.xlu0.b32.cont [10/16] 0.0, 128
        %3859 = vxpose.xlu0.b32.cont [11/16] 0.0, 128
        %3860 = vxpose.xlu0.b32.cont [12/16] 0.0, 128
        %3861 = vxpose.xlu0.b32.cont [13/16] 0.0, 128
        %3862 = vxpose.xlu0.b32.cont [14/16] 0.0, 128
        %3863 = vxpose.xlu0.b32.cont [15/16] 0.0, 128
        %3864 = vxpose.xlu0.b32.end [16/16] 0.0, 128
        %v3865 = vpop.trf.xlu0
        %v3866 = vpop.trf.xlu0
        %v3867 = vpop.trf.xlu0
        %v3868 = vpop.trf.xlu0
        %v3869 = vpop.trf.xlu0
        %v3870 = vpop.trf.xlu0
        %v3871 = vpop.trf.xlu0
        %v3872 = vpop.trf.xlu0
        %v3873 = vpop.trf.xlu0
        %v3874 = vpop.trf.xlu0
        %v3875 = vpop.trf.xlu0
        %v3876 = vpop.trf.xlu0
        %v3877 = vpop.trf.xlu0
        %v3878 = vpop.trf.xlu0
        %v3879 = vpop.trf.xlu0
        %v3880 = vpop.trf.xlu0
        %3881 = vst.msk [vmem:[%s567] sm:$0xff] %vm582, %v3769
        %3882 = vst.msk [vmem:[%s567 + $0x8] sm:$0xff] %vm582, %v3770
        %3883 = vst.msk [vmem:[%s567 + $0x10] sm:$0xff] %vm582, %v3801
        %3884 = vst.msk [vmem:[%s567 + $0x18] sm:$0xff] %vm582, %v3802
        %3885 = vst.msk [vmem:[%s567 + $0x20] sm:$0xff] %vm582, %v3833
        %3886 = vst.msk [vmem:[%s567 + $0x28] sm:$0xff] %vm582, %v3834
        %3887 = vst.msk [vmem:[%s567 + $0x30] sm:$0xff] %vm582, %v3865
        %3888 = vst.msk [vmem:[%s567 + $0x38] sm:$0xff] %vm582, %v3866
        %s3889 = sand.u32 %s342, 1
        %s3890 = scalar_lea.sflag [#allocation4], %s3889
        %s3891 = sand.u32 %s342, 1
        %s3892 = smul.addr %s3891, 64
        %s3893 = scalar_lea.vmem [#allocation15], %s3892
        // Predicated region
        $region105: #{tpu_custom_call.1} parent=75 // pred_check
          %p3894 = pneg %p352
        $region106: #{tpu_custom_call.1} parent=75 // pred_check_branch
          %3896 = sbr.rel (%p3894) target = $region108
        $region107: #{tpu_custom_call.1} parent=75 // pred_region
          %s3897 = smul.u32 4, %s35
          %s3899 = ssub.s32 1024, 1024
          %3900 = vsyncadd %s3890, %s3899
          %s3901 = smul.addr %s3897, 2
          %s3902 = smul.addr %s3901, 128
          %s3903 = scalar_lea.hbm %s14, %s3902
          %s3904 = sshll.u32 %s3893, 4
          %s3905 = int_to_ptr.vmem [resolvable:$true] %s3904
          %3910 = dma.vmem_to_hbm [thread:$0]  %s3905, 1024, %s3903, %s3890, 128, 128, 8
        $region108: #{tpu_custom_call.1} parent=75 // pred_fallthru
          _
      $region76: #{tpu_custom_call.1} parent=5 // pred_fallthru
        _
      %p3911 = scmp.le.s32.totalorder 2, %s30
      // Predicated region
      $region109: #{tpu_custom_call.1} parent=5 // pred_check
        %p3912 = pneg %p3911
      $region110: #{tpu_custom_call.1} parent=5 // pred_check_branch
        %3914 = sbr.rel (%p3912) target = $region112
      $region111: #{tpu_custom_call.1} parent=5 // pred_region
        %s3915 = ssub.s32 %s30, 2
        // Predicated region
        $region113: #{tpu_custom_call.1} parent=111 // pred_check
          %p3916 = pneg %p358
        $region114: #{tpu_custom_call.1} parent=111 // pred_check_branch
          %3918 = sbr.rel (%p3916) target = $region116
        $region115: #{tpu_custom_call.1} parent=111 // pred_region
          %s3919 = sand.u32 %s343, 1
          %s3920 = scalar_lea.sflag [#allocation4], %s3919
          %s3921 = sand.u32 %s343, 1
          %s3922 = smul.addr %s3921, 64
          %s3923 = scalar_lea.vmem [#allocation15], %s3922
          %3924 = dma.done %s3920, 1024
        $region116: #{tpu_custom_call.1} parent=111 // pred_fallthru
          _
      $region112: #{tpu_custom_call.1} parent=5 // pred_fallthru
        _
    $region6: #{tpu_custom_call.1} parent=1 // loop_footer
      %s34 = sadd.s32 1, %s30
    $region7: #{tpu_custom_call.1} parent=1 // loop_footer_branch
      %29 = sbr.rel target = $region3
    $region8: #{tpu_custom_call.1} parent=1 // loop_exit
      _
    %3925 = vsyncpa [#allocation3], 1
    %s3926 = scalar_lea.sflag [#allocation3], 1
    %3927 = vsyncpa %s3926, 1
    %3928 = vsyncpa [#allocation8], 1
    %3929 = vsyncpa [#allocation11], 1
    %3930 = vsyncpa [#allocation14], 1
    %3931 = vsyncpa [#allocation4], 1
    %s3932 = scalar_lea.sflag [#allocation4], 1
    %3933 = vsyncpa %s3932, 1
    %3934 = vsyncpa [#allocation5], 1
    %s3935 = scalar_lea.sflag [#allocation5], 1
    %3936 = vsyncpa %s3935, 1

</llo_original>
